<compile_context>
chip_gen: v7x
topology: tpu7x:2x2x1
jax: 0.10.0
libtpu: 0.0.40
codegen_flags: <defaults>
</compile_context>

<pallas_src>
import functools

import jax
import jax.numpy as jnp
from jax import lax
from jax.experimental import pallas as pl
from jax.experimental.pallas import tpu as pltpu


# --------------------------------------------------------------------------
# Pass 1: per-(batch, group) GroupNorm statistics (single-pass E[x^2]-mean^2)
# --------------------------------------------------------------------------
def _group_stats_kernel(x_ref, gmat_ref, mean_ref, rstd_ref, csum, csq,
                        *, T, eps):
    """Accumulate per-channel sum / sum(x^2) over spatial tiles; at the last
    tile aggregate within groups (via the hoisted block-diag matrix gmat,
    whose entries are 1/(cpg * T * HW)) and emit per-channel mean / rstd."""
    j = pl.program_id(1)

    @pl.when(j == 0)
    def _():
        csum[...] = jnp.zeros_like(csum)
        csq[...] = jnp.zeros_like(csq)

    s_acc = jnp.zeros_like(csum)
    q_acc = jnp.zeros_like(csq)
    for t in range(T):
        x_t = x_ref[0, :, t, :].astype(jnp.float32)            # (C, HWt)
        s_acc = s_acc + jnp.sum(x_t, axis=1, keepdims=True)
        q_acc = q_acc + jnp.sum(x_t * x_t, axis=1, keepdims=True)
    csum[...] += s_acc
    csq[...] += q_acc

    @pl.when(j == pl.num_programs(1) - 1)
    def _():
        gm = jnp.dot(gmat_ref[...], csum[...],
                     preferred_element_type=jnp.float32)        # (C,1) mean
        gq = jnp.dot(gmat_ref[...], csq[...],
                     preferred_element_type=jnp.float32)        # (C,1) E[x^2]
        var = jnp.maximum(gq - gm * gm, 0.0)
        mean_ref[0] = gm
        rstd_ref[0] = lax.rsqrt(var + eps)


# --------------------------------------------------------------------------
# Pass 2: fused norm + qkv + temporal attention + proj_out + residual
# --------------------------------------------------------------------------
def _temporal_attn_kernel(x_ref, mean_ref, rstd_ref, wqkv_ref, bqkv_ref,
                          wp_ref, bp_ref, o_ref, *, T, approx_recip):
    """One (batch, spatial-tile) block per grid step.

    x_ref:    (1, C, T, HWt)  original input
    mean_ref: (1, C, 1)       per-channel GroupNorm mean (group stats broadcast)
    rstd_ref: (1, C, 1)       per-channel GroupNorm 1/sqrt(var+eps)
    wqkv_ref: (3C, C)         stacked q/k/v conv weights, gamma + C^-0.5 folded
    bqkv_ref: (3C, 1)         stacked biases, beta + scale folded (f32)
    wp_ref:   (C, C)          proj_out weight
    bp_ref:   (C, 1)          proj_out bias (f32)
    o_ref:    (1, C, T, HWt)  output = x + proj_out(attn)
    """
    C = wp_ref.shape[0]
    mxu_dtype = wqkv_ref.dtype
    mean = mean_ref[0]                                          # (C, 1) f32
    rstd = rstd_ref[0]                                          # (C, 1) f32

    # ---- GroupNorm (affine folded into wqkv) + fused q/k/v projection -----
    xs, qs, ks, vs = [], [], [], []
    for t in range(T):
        x_t = x_ref[0, :, t, :].astype(jnp.float32)             # (C, HWt)
        xs.append(x_t)
        xn_t = (x_t - mean) * rstd
        qkv_t = jnp.dot(wqkv_ref[...], xn_t.astype(mxu_dtype),
                        preferred_element_type=jnp.float32) + bqkv_ref[...]
        qs.append(qkv_t[0:C, :])                                # scale folded
        ks.append(qkv_t[C:2 * C, :])
        vs.append(qkv_t[2 * C:3 * C, :])

    # ---- temporal attention, batched over the HW lane axis; proj_out +
    # ---- residual streamed per output time slab (no attn scratch) ---------
    for ti in range(T):
        qi = qs[ti]
        s = jnp.concatenate(
            [jnp.sum(qi * ks[tj], axis=0, keepdims=True) for tj in range(T)],
            axis=0)                                             # (T, HWt)
        m = jnp.max(s, axis=0, keepdims=True)                   # (1, HWt)
        p = jnp.exp(s - m)                                      # (T, HWt)
        den = jnp.sum(p, axis=0, keepdims=True)                 # (1, HWt)
        if approx_recip:
            inv = pl.reciprocal(den, approx=True)
        else:
            inv = 1.0 / den
        a = p * inv                                             # (T, HWt)

        o_ti = vs[0] * a[0:1, :]
        for tj in range(1, T):
            o_ti = o_ti + vs[tj] * a[tj:tj + 1, :]              # (C, HWt)

        y_ti = jnp.dot(wp_ref[...], o_ti.astype(mxu_dtype),
                       preferred_element_type=jnp.float32) + bp_ref[...]
        o_ref[0, :, ti, :] = (xs[ti] + y_ti).astype(o_ref.dtype)


# --------------------------------------------------------------------------
# Wrapper
# --------------------------------------------------------------------------
def _pick_hw_tile(hw, c, t):
    """Largest multiple-of-128 divisor of HW that keeps the per-step live set
    small (and leaves >=2 tiles for pipeline / megacore overlap)."""
    if hw % 128 != 0:
        return hw
    divisors = [m for m in range(128, hw + 1, 128) if hw % m == 0]
    budget = 24 << 20                       # target per-step live bytes
    fits = [m for m in divisors if 6 * c * t * m * 4 <= budget] or [divisors[0]]
    multi = [m for m in fits if hw // m >= 2]
    return max(multi) if multi else max(fits)


def temporal_attn_block_forward(x, gamma, beta, wq, bq, wk, bk, wv, bv,
                                w_proj, b_proj, *, num_groups=32, eps=1e-6,
                                mxu_dtype=jnp.bfloat16, hw_tile=None):
    """Forward of TemporalAttnBlock.

    x: (B, C, T, H, W); conv weights in torch Conv3d layout (C, C, 1, 1, 1).
    mxu_dtype: dtype of the MXU matmul operands (bf16 fast path by default,
               jnp.float32 for a strict path).  Accumulation is always f32.
    """
    assert x.ndim == 5, "TemporalAttnBlock expects a 5-D (b, c, t, h, w) input"
    b, c, t, h, w = x.shape
    assert c % num_groups == 0, "GroupNorm requires channels % num_groups == 0"
    hw = h * w
    cpg = c // num_groups
    L = t * hw

    if hw_tile is None:
        hw_tile = _pick_hw_tile(hw, c, t)
    assert hw % hw_tile == 0
    n_hw = hw // hw_tile

    x4 = x.reshape(b, c, t, hw)             # free: (b, c, t, h, w) contiguous

    # ---- fold GroupNorm affine + q-scale into the qkv weights/biases -------
    g32 = gamma.reshape(c).astype(jnp.float32)
    b32 = beta.reshape(c).astype(jnp.float32)
    scale = float(c) ** -0.5

    def _fold(wt, bb, s):
        w2 = wt.reshape(c, c).astype(jnp.float32)
        wf = (w2 * g32[None, :]) * s
        bf = (bb.reshape(c).astype(jnp.float32) + w2 @ b32) * s
        return wf, bf

    wq_f, bq_f = _fold(wq, bq, scale)
    wk_f, bk_f = _fold(wk, bk, 1.0)
    wv_f, bv_f = _fold(wv, bv, 1.0)
    wqkv = jnp.concatenate([wq_f, wk_f, wv_f], axis=0).astype(mxu_dtype)
    bqkv = jnp.concatenate([bq_f, bk_f, bv_f], axis=0).reshape(3 * c, 1)
    wp2 = w_proj.reshape(c, c).astype(jnp.float32).astype(mxu_dtype)
    bp2 = b_proj.reshape(c, 1).astype(jnp.float32)

    # block-diagonal group-averaging matrix (hoisted out of the kernel)
    row = jnp.arange(c, dtype=jnp.int32)[:, None] // cpg
    col = jnp.arange(c, dtype=jnp.int32)[None, :] // cpg
    gmat = jnp.where(row == col, 1.0 / (cpg * L), 0.0).astype(jnp.float32)

    # ---------------- pass 1: per-(batch, group) mean / rstd ----------------
    stats_kernel = functools.partial(_group_stats_kernel, T=t, eps=eps)
    mean, rstd = pl.pallas_call(
        stats_kernel,
        out_shape=(jax.ShapeDtypeStruct((b, c, 1), jnp.float32),
                   jax.ShapeDtypeStruct((b, c, 1), jnp.float32)),
        grid_spec=pltpu.PrefetchScalarGridSpec(
            num_scalar_prefetch=0,
            grid=(b, n_hw),
            in_specs=[
                pl.BlockSpec((1, c, t, hw_tile), lambda n, j: (n, 0, 0, j)),
                pl.BlockSpec((c, c), lambda n, j: (0, 0)),
            ],
            out_specs=[
                pl.BlockSpec((1, c, 1), lambda n, j: (n, 0, 0)),
                pl.BlockSpec((1, c, 1), lambda n, j: (n, 0, 0)),
            ],
            scratch_shapes=[pltpu.VMEM((c, 1), jnp.float32),
                            pltpu.VMEM((c, 1), jnp.float32)],
        ),
        compiler_params=pltpu.CompilerParams(
            dimension_semantics=("parallel", "arbitrary")),
    )(x4, gmat)

    # ---------------- pass 2: fused attention block --------------------------
    approx = bool(jnp.dtype(mxu_dtype) != jnp.dtype(jnp.float32))
    main_kernel = functools.partial(_temporal_attn_kernel, T=t,
                                    approx_recip=approx)

    blk = c * t * hw_tile
    itemsize = jnp.dtype(x.dtype).itemsize
    w_bytes = 2 * (3 * c * c + c * c) * jnp.dtype(mxu_dtype).itemsize
    vmem_est = 4 * blk * itemsize + w_bytes + 7 * blk * 4 + (4 << 20)
    vmem_limit = int(min(64 << 20, max(32 << 20, vmem_est)))

    out4 = pl.pallas_call(
        main_kernel,
        out_shape=jax.ShapeDtypeStruct((b, c, t, hw), x.dtype),
        grid_spec=pltpu.PrefetchScalarGridSpec(
            num_scalar_prefetch=0,
            grid=(b, n_hw),
            in_specs=[
                pl.BlockSpec((1, c, t, hw_tile), lambda n, j: (n, 0, 0, j)),
                pl.BlockSpec((1, c, 1), lambda n, j: (n, 0, 0)),
                pl.BlockSpec((1, c, 1), lambda n, j: (n, 0, 0)),
                pl.BlockSpec((3 * c, c), lambda n, j: (0, 0)),
                pl.BlockSpec((3 * c, 1), lambda n, j: (0, 0)),
                pl.BlockSpec((c, c), lambda n, j: (0, 0)),
                pl.BlockSpec((c, 1), lambda n, j: (0, 0)),
            ],
            out_specs=pl.BlockSpec((1, c, t, hw_tile),
                                   lambda n, j: (n, 0, 0, j)),
        ),
        compiler_params=pltpu.CompilerParams(
            dimension_semantics=("parallel", "parallel"),
            vmem_limit_bytes=vmem_limit),
    )(x4, mean, rstd, wqkv, bqkv, wp2, bp2)

    return out4.reshape(b, c, t, h, w)


# --------------------------------------------------------------------------
# Pure-JAX reference (mirror of the torch module)
# --------------------------------------------------------------------------
def _reference(x, gamma, beta, wq, bq, wk, bk, wv, bv, w_proj, b_proj,
               num_groups=32, eps=1e-6):
    b, c, t, h, w = x.shape
    cpg = c // num_groups
    xg = x.reshape(b, num_groups, cpg, t, h, w).astype(jnp.float32)
    mean = jnp.mean(xg, axis=(2, 3, 4, 5), keepdims=True)
    var = jnp.mean((xg - mean) ** 2, axis=(2, 3, 4, 5), keepdims=True)
    xn = ((xg - mean) / jnp.sqrt(var + eps)).reshape(b, c, t, h, w)
    xn = xn * gamma.reshape(1, c, 1, 1, 1) + beta.reshape(1, c, 1, 1, 1)

    def conv1(z, wt, bb):
        return (jnp.einsum('oc,bcthw->bothw', wt.reshape(c, c), z,
                           precision=lax.Precision.HIGHEST)
                + bb.reshape(1, c, 1, 1, 1))

    q = conv1(xn, wq, bq)
    k = conv1(xn, wk, bk)
    v = conv1(xn, wv, bv)

    qr = jnp.transpose(q, (0, 3, 4, 2, 1)).reshape(b * h * w, t, c)
    kr = jnp.transpose(k, (0, 3, 4, 1, 2)).reshape(b * h * w, c, t)
    vr = jnp.transpose(v, (0, 3, 4, 1, 2)).reshape(b * h * w, c, t)

    w_ = jnp.einsum('ntc,ncs->nts', qr, kr,
                    precision=lax.Precision.HIGHEST) * (float(c) ** -0.5)
    w_ = jax.nn.softmax(w_, axis=2)
    w_ = jnp.transpose(w_, (0, 2, 1))
    h_ = jnp.einsum('ncs,nst->nct', vr, w_, precision=lax.Precision.HIGHEST)
    h_ = jnp.transpose(h_.reshape(b, h, w, c, t), (0, 3, 4, 1, 2))
    out = conv1(h_, w_proj, b_proj)
    return x + out


if __name__ == "__main__":
    key = jax.random.PRNGKey(0)
    keys = jax.random.split(key, 11)

    # small shapes consistent with the module (C % 32 == 0 for GroupNorm(32))
    b, c, t, h, w = 2, 64, 8, 16, 16
    num_groups = 32

    x = jax.random.normal(keys[0], (b, c, t, h, w), dtype=jnp.float32)

    gamma = 1.0 + 0.1 * jax.random.normal(keys[1], (c,), jnp.float32)
    beta = 0.1 * jax.random.normal(keys[2], (c,), jnp.float32)

    bound = float(c) ** -0.5

    def conv_init(kw_, kb_):
        w_ = jax.random.uniform(kw_, (c, c, 1, 1, 1), jnp.float32, -bound, bound)
        b_ = jax.random.uniform(kb_, (c,), jnp.float32, -bound, bound)
        return w_, b_

    wq, bq = conv_init(keys[3], keys[4])
    wk, bk = conv_init(keys[5], keys[6])
    wv, bv = conv_init(keys[7], keys[8])
    wp, bp = conv_init(keys[9], keys[10])

    ref = _reference(x, gamma, beta, wq, bq, wk, bk, wv, bv, wp, bp,
                     num_groups=num_groups, eps=1e-6)

    # strict path: f32 MXU operands, exact reciprocal
    y32 = temporal_attn_block_forward(x, gamma, beta, wq, bq, wk, bk, wv, bv,
                                      wp, bp, num_groups=num_groups, eps=1e-6,
                                      mxu_dtype=jnp.float32)
    jax.block_until_ready(y32)
    assert y32.shape == (b, c, t, h, w), y32.shape
    err32 = float(jnp.max(jnp.abs(y32 - ref)))
    assert err32 < 2e-3, f"f32 path max abs err {err32}"

    # fast path (default): bf16 MXU operands + approx reciprocal
    ybf = temporal_attn_block_forward(x, gamma, beta, wq, bq, wk, bk, wv, bv,
                                      wp, bp, num_groups=num_groups, eps=1e-6)
    jax.block_until_ready(ybf)
    assert ybf.shape == (b, c, t, h, w), ybf.shape
    errbf = float(jnp.max(jnp.abs(ybf - ref)))
    assert errbf < 1e-1, f"bf16 path max abs err {errbf}"

    print("KERNEL_OK")
</pallas_src>

<mosaic_0001>
module attributes {stable_mosaic.version = 11 : i64} {
  func.func @_group_stats_kernel(%arg0: i32, %arg1: i32, %arg2: memref<1x64x8x128xf32, #tpu.memory_space<vmem>>, %arg3: memref<64x64xf32, #tpu.memory_space<vmem>>, %arg4: memref<1x64x1xf32, #tpu.memory_space<vmem>>, %arg5: memref<1x64x1xf32, #tpu.memory_space<vmem>>, %arg6: memref<64x1xf32, #tpu.memory_space<vmem>>, %arg7: memref<64x1xf32, #tpu.memory_space<vmem>>) attributes {dimension_semantics = [#tpu.dimension_semantics<parallel>, #tpu.dimension_semantics<arbitrary>], iteration_bounds = array<i64: 2, 2>, scalar_prefetch = 0 : i64, scratch_operands = 2 : i64, tpu.core_type = #tpu.core_type<tc>, window_params = [{transform_indices = @transform_0, window_bounds = array<i64: 1, 64, 8, 128>}, {pipeline_mode = #tpu.pipeline_mode<synchronous>, transform_indices = @transform_1, window_bounds = array<i64: 64, 64>}, {transform_indices = @transform_2, window_bounds = array<i64: 1, 64, 1>}, {transform_indices = @transform_3, window_bounds = array<i64: 1, 64, 1>}]} {
    %c0_i32 = arith.constant 0 : i32
    %0 = arith.cmpi eq, %arg1, %c0_i32 : i32
    %1 = arith.extui %0 : i1 to i32
    %c0_i32_0 = arith.constant 0 : i32
    %2 = arith.cmpi ne, %1, %c0_i32_0 : i32
    scf.if %2 {
      %cst_51 = arith.constant 0.000000e+00 : f32
      %86 = vector.broadcast %cst_51 : f32 to vector<64x1xf32>
      %c0_52 = arith.constant 0 : index
      %c0_53 = arith.constant 0 : index
      %87 = vector.load %arg6[%c0_52, %c0_53] : memref<64x1xf32, #tpu.memory_space<vmem>>, vector<64x1xf32>
      tpu.vector_store %arg6[%c0_52, %c0_53], %86 {strides = array<i32>} : memref<64x1xf32, #tpu.memory_space<vmem>>, vector<64x1xf32>,
      %cst_54 = arith.constant 0.000000e+00 : f32
      %88 = vector.broadcast %cst_54 : f32 to vector<64x1xf32>
      %c0_55 = arith.constant 0 : index
      %c0_56 = arith.constant 0 : index
      %89 = vector.load %arg7[%c0_55, %c0_56] : memref<64x1xf32, #tpu.memory_space<vmem>>, vector<64x1xf32>
      tpu.vector_store %arg7[%c0_55, %c0_56], %88 {strides = array<i32>} : memref<64x1xf32, #tpu.memory_space<vmem>>, vector<64x1xf32>,
    } else {
    }
    %cst = arith.constant 0.000000e+00 : f32
    %3 = vector.broadcast %cst : f32 to vector<64x1xf32>
    %cst_1 = arith.constant 0.000000e+00 : f32
    %4 = vector.broadcast %cst_1 : f32 to vector<64x1xf32>
    %c0 = arith.constant 0 : index
    %c0_2 = arith.constant 0 : index
    %c0_3 = arith.constant 0 : index
    %c0_4 = arith.constant 0 : index
    %5 = vector.load %arg2[%c0, %c0_2, %c0_3, %c0_4] : memref<1x64x8x128xf32, #tpu.memory_space<vmem>>, vector<1x64x1x128xf32>
    %6 = vector.shape_cast %5 : vector<1x64x1x128xf32> to vector<64x128xf32>
    %cst_5 = arith.constant dense<0.000000e+00> : vector<64xf32>
    %7 = vector.multi_reduction <add>, %6, %cst_5 [1] : vector<64x128xf32> to vector<64xf32>
    %8 = vector.shape_cast %7 : vector<64xf32> to vector<64x1xf32>
    %9 = arith.addf %3, %8 : vector<64x1xf32>
    %10 = arith.mulf %6, %6 : vector<64x128xf32>
    %cst_6 = arith.constant dense<0.000000e+00> : vector<64xf32>
    %11 = vector.multi_reduction <add>, %10, %cst_6 [1] : vector<64x128xf32> to vector<64xf32>
    %12 = vector.shape_cast %11 : vector<64xf32> to vector<64x1xf32>
    %13 = arith.addf %4, %12 : vector<64x1xf32>
    %c0_7 = arith.constant 0 : index
    %c0_8 = arith.constant 0 : index
    %c1 = arith.constant 1 : index
    %c0_9 = arith.constant 0 : index
    %14 = vector.load %arg2[%c0_7, %c0_8, %c1, %c0_9] : memref<1x64x8x128xf32, #tpu.memory_space<vmem>>, vector<1x64x1x128xf32>
    %15 = vector.shape_cast %14 : vector<1x64x1x128xf32> to vector<64x128xf32>
    %cst_10 = arith.constant dense<0.000000e+00> : vector<64xf32>
    %16 = vector.multi_reduction <add>, %15, %cst_10 [1] : vector<64x128xf32> to vector<64xf32>
    %17 = vector.shape_cast %16 : vector<64xf32> to vector<64x1xf32>
    %18 = arith.addf %9, %17 : vector<64x1xf32>
    %19 = arith.mulf %15, %15 : vector<64x128xf32>
    %cst_11 = arith.constant dense<0.000000e+00> : vector<64xf32>
    %20 = vector.multi_reduction <add>, %19, %cst_11 [1] : vector<64x128xf32> to vector<64xf32>
    %21 = vector.shape_cast %20 : vector<64xf32> to vector<64x1xf32>
    %22 = arith.addf %13, %21 : vector<64x1xf32>
    %c0_12 = arith.constant 0 : index
    %c0_13 = arith.constant 0 : index
    %c2 = arith.constant 2 : index
    %c0_14 = arith.constant 0 : index
    %23 = vector.load %arg2[%c0_12, %c0_13, %c2, %c0_14] : memref<1x64x8x128xf32, #tpu.memory_space<vmem>>, vector<1x64x1x128xf32>
    %24 = vector.shape_cast %23 : vector<1x64x1x128xf32> to vector<64x128xf32>
    %cst_15 = arith.constant dense<0.000000e+00> : vector<64xf32>
    %25 = vector.multi_reduction <add>, %24, %cst_15 [1] : vector<64x128xf32> to vector<64xf32>
    %26 = vector.shape_cast %25 : vector<64xf32> to vector<64x1xf32>
    %27 = arith.addf %18, %26 : vector<64x1xf32>
    %28 = arith.mulf %24, %24 : vector<64x128xf32>
    %cst_16 = arith.constant dense<0.000000e+00> : vector<64xf32>
    %29 = vector.multi_reduction <add>, %28, %cst_16 [1] : vector<64x128xf32> to vector<64xf32>
    %30 = vector.shape_cast %29 : vector<64xf32> to vector<64x1xf32>
    %31 = arith.addf %22, %30 : vector<64x1xf32>
    %c0_17 = arith.constant 0 : index
    %c0_18 = arith.constant 0 : index
    %c3 = arith.constant 3 : index
    %c0_19 = arith.constant 0 : index
    %32 = vector.load %arg2[%c0_17, %c0_18, %c3, %c0_19] : memref<1x64x8x128xf32, #tpu.memory_space<vmem>>, vector<1x64x1x128xf32>
    %33 = vector.shape_cast %32 : vector<1x64x1x128xf32> to vector<64x128xf32>
    %cst_20 = arith.constant dense<0.000000e+00> : vector<64xf32>
    %34 = vector.multi_reduction <add>, %33, %cst_20 [1] : vector<64x128xf32> to vector<64xf32>
    %35 = vector.shape_cast %34 : vector<64xf32> to vector<64x1xf32>
    %36 = arith.addf %27, %35 : vector<64x1xf32>
    %37 = arith.mulf %33, %33 : vector<64x128xf32>
    %cst_21 = arith.constant dense<0.000000e+00> : vector<64xf32>
    %38 = vector.multi_reduction <add>, %37, %cst_21 [1] : vector<64x128xf32> to vector<64xf32>
    %39 = vector.shape_cast %38 : vector<64xf32> to vector<64x1xf32>
    %40 = arith.addf %31, %39 : vector<64x1xf32>
    %c0_22 = arith.constant 0 : index
    %c0_23 = arith.constant 0 : index
    %c4 = arith.constant 4 : index
    %c0_24 = arith.constant 0 : index
    %41 = vector.load %arg2[%c0_22, %c0_23, %c4, %c0_24] : memref<1x64x8x128xf32, #tpu.memory_space<vmem>>, vector<1x64x1x128xf32>
    %42 = vector.shape_cast %41 : vector<1x64x1x128xf32> to vector<64x128xf32>
    %cst_25 = arith.constant dense<0.000000e+00> : vector<64xf32>
    %43 = vector.multi_reduction <add>, %42, %cst_25 [1] : vector<64x128xf32> to vector<64xf32>
    %44 = vector.shape_cast %43 : vector<64xf32> to vector<64x1xf32>
    %45 = arith.addf %36, %44 : vector<64x1xf32>
    %46 = arith.mulf %42, %42 : vector<64x128xf32>
    %cst_26 = arith.constant dense<0.000000e+00> : vector<64xf32>
    %47 = vector.multi_reduction <add>, %46, %cst_26 [1] : vector<64x128xf32> to vector<64xf32>
    %48 = vector.shape_cast %47 : vector<64xf32> to vector<64x1xf32>
    %49 = arith.addf %40, %48 : vector<64x1xf32>
    %c0_27 = arith.constant 0 : index
    %c0_28 = arith.constant 0 : index
    %c5 = arith.constant 5 : index
    %c0_29 = arith.constant 0 : index
    %50 = vector.load %arg2[%c0_27, %c0_28, %c5, %c0_29] : memref<1x64x8x128xf32, #tpu.memory_space<vmem>>, vector<1x64x1x128xf32>
    %51 = vector.shape_cast %50 : vector<1x64x1x128xf32> to vector<64x128xf32>
    %cst_30 = arith.constant dense<0.000000e+00> : vector<64xf32>
    %52 = vector.multi_reduction <add>, %51, %cst_30 [1] : vector<64x128xf32> to vector<64xf32>
    %53 = vector.shape_cast %52 : vector<64xf32> to vector<64x1xf32>
    %54 = arith.addf %45, %53 : vector<64x1xf32>
    %55 = arith.mulf %51, %51 : vector<64x128xf32>
    %cst_31 = arith.constant dense<0.000000e+00> : vector<64xf32>
    %56 = vector.multi_reduction <add>, %55, %cst_31 [1] : vector<64x128xf32> to vector<64xf32>
    %57 = vector.shape_cast %56 : vector<64xf32> to vector<64x1xf32>
    %58 = arith.addf %49, %57 : vector<64x1xf32>
    %c0_32 = arith.constant 0 : index
    %c0_33 = arith.constant 0 : index
    %c6 = arith.constant 6 : index
    %c0_34 = arith.constant 0 : index
    %59 = vector.load %arg2[%c0_32, %c0_33, %c6, %c0_34] : memref<1x64x8x128xf32, #tpu.memory_space<vmem>>, vector<1x64x1x128xf32>
    %60 = vector.shape_cast %59 : vector<1x64x1x128xf32> to vector<64x128xf32>
    %cst_35 = arith.constant dense<0.000000e+00> : vector<64xf32>
    %61 = vector.multi_reduction <add>, %60, %cst_35 [1] : vector<64x128xf32> to vector<64xf32>
    %62 = vector.shape_cast %61 : vector<64xf32> to vector<64x1xf32>
    %63 = arith.addf %54, %62 : vector<64x1xf32>
    %64 = arith.mulf %60, %60 : vector<64x128xf32>
    %cst_36 = arith.constant dense<0.000000e+00> : vector<64xf32>
    %65 = vector.multi_reduction <add>, %64, %cst_36 [1] : vector<64x128xf32> to vector<64xf32>
    %66 = vector.shape_cast %65 : vector<64xf32> to vector<64x1xf32>
    %67 = arith.addf %58, %66 : vector<64x1xf32>
    %c0_37 = arith.constant 0 : index
    %c0_38 = arith.constant 0 : index
    %c7 = arith.constant 7 : index
    %c0_39 = arith.constant 0 : index
    %68 = vector.load %arg2[%c0_37, %c0_38, %c7, %c0_39] : memref<1x64x8x128xf32, #tpu.memory_space<vmem>>, vector<1x64x1x128xf32>
    %69 = vector.shape_cast %68 : vector<1x64x1x128xf32> to vector<64x128xf32>
    %cst_40 = arith.constant dense<0.000000e+00> : vector<64xf32>
    %70 = vector.multi_reduction <add>, %69, %cst_40 [1] : vector<64x128xf32> to vector<64xf32>
    %71 = vector.shape_cast %70 : vector<64xf32> to vector<64x1xf32>
    %72 = arith.addf %63, %71 : vector<64x1xf32>
    %73 = arith.mulf %69, %69 : vector<64x128xf32>
    %cst_41 = arith.constant dense<0.000000e+00> : vector<64xf32>
    %74 = vector.multi_reduction <add>, %73, %cst_41 [1] : vector<64x128xf32> to vector<64xf32>
    %75 = vector.shape_cast %74 : vector<64xf32> to vector<64x1xf32>
    %76 = arith.addf %67, %75 : vector<64x1xf32>
    %c0_42 = arith.constant 0 : index
    %c0_43 = arith.constant 0 : index
    %77 = vector.load %arg6[%c0_42, %c0_43] : memref<64x1xf32, #tpu.memory_space<vmem>>, vector<64x1xf32>
    %78 = arith.addf %77, %72 : vector<64x1xf32>
    %c0_44 = arith.constant 0 : index
    %c0_45 = arith.constant 0 : index
    %79 = vector.load %arg6[%c0_44, %c0_45] : memref<64x1xf32, #tpu.memory_space<vmem>>, vector<64x1xf32>
    tpu.vector_store %arg6[%c0_44, %c0_45], %78 {strides = array<i32>} : memref<64x1xf32, #tpu.memory_space<vmem>>, vector<64x1xf32>,
    %c0_46 = arith.constant 0 : index
    %c0_47 = arith.constant 0 : index
    %80 = vector.load %arg7[%c0_46, %c0_47] : memref<64x1xf32, #tpu.memory_space<vmem>>, vector<64x1xf32>
    %81 = arith.addf %80, %76 : vector<64x1xf32>
    %c0_48 = arith.constant 0 : index
    %c0_49 = arith.constant 0 : index
    %82 = vector.load %arg7[%c0_48, %c0_49] : memref<64x1xf32, #tpu.memory_space<vmem>>, vector<64x1xf32>
    tpu.vector_store %arg7[%c0_48, %c0_49], %81 {strides = array<i32>} : memref<64x1xf32, #tpu.memory_space<vmem>>, vector<64x1xf32>,
    %c1_i32 = arith.constant 1 : i32
    %83 = arith.cmpi eq, %arg1, %c1_i32 : i32
    %84 = arith.extui %83 : i1 to i32
    %c0_i32_50 = arith.constant 0 : i32
    %85 = arith.cmpi ne, %84, %c0_i32_50 : i32
    scf.if %85 {
      %c0_51 = arith.constant 0 : index
      %c0_52 = arith.constant 0 : index
      %86 = vector.load %arg3[%c0_51, %c0_52] : memref<64x64xf32, #tpu.memory_space<vmem>>, vector<64x64xf32>
      %c0_53 = arith.constant 0 : index
      %c0_54 = arith.constant 0 : index
      %87 = vector.load %arg6[%c0_53, %c0_54] : memref<64x1xf32, #tpu.memory_space<vmem>>, vector<64x1xf32>
      %cst_55 = arith.constant dense<0.000000e+00> : vector<64x1xf32>
      %88 = tpu.matmul %86, %87, %cst_55 {dimension_numbers = #tpu.dot_dimension_numbers<[1], [0], [0], [1], [0, 0, 1, 1], [], []>} : vector<64x64xf32>, vector<64x1xf32>, vector<64x1xf32> -> vector<64x1xf32>
      %c0_56 = arith.constant 0 : index
      %c0_57 = arith.constant 0 : index
      %89 = vector.load %arg3[%c0_56, %c0_57] : memref<64x64xf32, #tpu.memory_space<vmem>>, vector<64x64xf32>
      %c0_58 = arith.constant 0 : index
      %c0_59 = arith.constant 0 : index
      %90 = vector.load %arg7[%c0_58, %c0_59] : memref<64x1xf32, #tpu.memory_space<vmem>>, vector<64x1xf32>
      %cst_60 = arith.constant dense<0.000000e+00> : vector<64x1xf32>
      %91 = tpu.matmul %89, %90, %cst_60 {dimension_numbers = #tpu.dot_dimension_numbers<[1], [0], [0], [1], [0, 0, 1, 1], [], []>} : vector<64x64xf32>, vector<64x1xf32>, vector<64x1xf32> -> vector<64x1xf32>
      %92 = arith.mulf %88, %88 : vector<64x1xf32>
      %93 = arith.subf %91, %92 : vector<64x1xf32>
      %cst_61 = arith.constant 0.000000e+00 : f32
      %94 = vector.broadcast %cst_61 : f32 to vector<64x1xf32>
      %95 = arith.maximumf %93, %94 : vector<64x1xf32>
      %c0_62 = arith.constant 0 : index
      %c0_63 = arith.constant 0 : index
      %c0_64 = arith.constant 0 : index
      %96 = vector.load %arg4[%c0_62, %c0_63, %c0_64] : memref<1x64x1xf32, #tpu.memory_space<vmem>>, vector<1x64x1xf32>
      %97 = vector.shape_cast %96 : vector<1x64x1xf32> to vector<64x1xf32>
      %98 = vector.shape_cast %88 : vector<64x1xf32> to vector<1x64x1xf32>
      tpu.vector_store %arg4[%c0_62, %c0_63, %c0_64], %98 {strides = array<i32>} : memref<1x64x1xf32, #tpu.memory_space<vmem>>, vector<1x64x1xf32>,
      %cst_65 = arith.constant 9.99999997E-7 : f32
      %99 = vector.broadcast %cst_65 : f32 to vector<64x1xf32>
      %100 = arith.addf %95, %99 : vector<64x1xf32>
      %101 = math.rsqrt %100 : vector<64x1xf32>
      %c0_66 = arith.constant 0 : index
      %c0_67 = arith.constant 0 : index
      %c0_68 = arith.constant 0 : index
      %102 = vector.load %arg5[%c0_66, %c0_67, %c0_68] : memref<1x64x1xf32, #tpu.memory_space<vmem>>, vector<1x64x1xf32>
      %103 = vector.shape_cast %102 : vector<1x64x1xf32> to vector<64x1xf32>
      %104 = vector.shape_cast %101 : vector<64x1xf32> to vector<1x64x1xf32>
      tpu.vector_store %arg5[%c0_66, %c0_67, %c0_68], %104 {strides = array<i32>} : memref<1x64x1xf32, #tpu.memory_space<vmem>>, vector<1x64x1xf32>,
    } else {
    }
    return
  }
  func.func @transform_0(%arg0: i32, %arg1: i32) -> (i32, i32, i32, i32) {
    %c0_i32 = arith.constant 0 : i32
    %c0_i32_0 = arith.constant 0 : i32
    %c0_i32_1 = arith.constant 0 : i32
    return %arg0, %c0_i32, %c0_i32_0, %arg1 : i32, i32, i32, i32
  }
  func.func @transform_1(%arg0: i32, %arg1: i32) -> (i32, i32) {
    %c0_i32 = arith.constant 0 : i32
    %c0_i32_0 = arith.constant 0 : i32
    %c0_i32_1 = arith.constant 0 : i32
    return %c0_i32, %c0_i32_0 : i32, i32
  }
  func.func @transform_2(%arg0: i32, %arg1: i32) -> (i32, i32, i32) {
    %c0_i32 = arith.constant 0 : i32
    %c0_i32_0 = arith.constant 0 : i32
    %c0_i32_1 = arith.constant 0 : i32
    return %arg0, %c0_i32, %c0_i32_0 : i32, i32, i32
  }
  func.func @transform_3(%arg0: i32, %arg1: i32) -> (i32, i32, i32) {
    %c0_i32 = arith.constant 0 : i32
    %c0_i32_0 = arith.constant 0 : i32
    %c0_i32_1 = arith.constant 0 : i32
    return %arg0, %c0_i32, %c0_i32_0 : i32, i32, i32
  }
}

</mosaic_0001>

<llo_original>
// kernel: tpu_custom_call.1
$region0: #{tpu_custom_call.1}
  #allocation0 [shape = 'u32[]', space=smem, size = 0x4, offset = 0x4, fixed_abs, tag = 'smem constant byte address 0x4 - core index']
  #allocation1 [shape = 'u32[144,128]{1,0:T(1,128)}', space=vmem, size = 0x12000, scoped, tag = 'internal scratch']
  #allocation2 [shape = 'f32[64,1]{1,0:T(8,128)}', space=vmem, size = 0x8000, scoped, tag = 'scratch operand']
  #allocation3 [shape = 'f32[64,1]{1,0:T(8,128)}', space=vmem, size = 0x8000, scoped, tag = 'scratch operand']
  %s0 = inlined_call_operand.hbm [shape: f32[2,64,8,256], index: 0, kind: input, shape index: {}]
  %s1 = inlined_call_operand.hbm [shape: f32[64,64], index: 1, kind: input, shape index: {}]
  %s2 = inlined_call_operand.vmem [shape: f32[2,64,1], index: 2, kind: output, shape index: {0}]
  %s3 = inlined_call_operand.vmem [shape: f32[2,64,1], index: 3, kind: output, shape index: {1}]
  %4 = xla_tuple %s2, %s3
  %s5 = sld [smem:[#allocation0]]
  $region65: #{tpu_custom_call.1} parent=0
    _
  %s7 = ssub.s32 1, %s5
  %s8 = scalar_select 0, %s7, %s5
  $region1: #{tpu_custom_call.1} parent=0
    #allocation4 [shape = 'u8[524288]{0}', space=vmem, size = 0x80000, scoped, tag = 'input window, operand 0']
    #allocation5 [shape = 's32[2]{0}', space=sflag, size = 0x8, scoped, tag = 'scoped memory for tpu_custom_call.1']
    #allocation6 [shape = 'u8[32768]{0}', space=vmem, size = 0x8000, scoped, tag = 'input window, operand 1, single buffered']
    #allocation7 [shape = 's32[1]{0}', space=sflag, size = 0x4, scoped, tag = 'scoped memory for tpu_custom_call.1']
    %9 = vsyncpa [#allocation5], 0
    %s10 = scalar_lea.sflag [#allocation5], 1
    %11 = vsyncpa %s10, 0
    %12 = vsyncpa [#allocation7], 0
    loop: start=0, step=1, limit=6
    $region2: #{tpu_custom_call.1} parent=1 // loop_pre_header
      _
    $region3: #{tpu_custom_call.1} parent=1 // loop_header
      %s14 = sphi 0, %s18
      %p15 = scmp.ge.s32.totalorder %s14, 6
      %s21 = sphi 0, %s33
      %s22 = sphi 0, %s29
      %s23 = sphi 0, %s21
      %s24 = sphi 0, %s22
      %s25 = sphi 0, %s23
      %s26 = sphi 0, %s24
      %s38 = sphi 0, %s40
      %s41 = sphi 0, %s38
      %s42 = sphi 0, %s41
      %s58 = sphi 0, %s42
      %s62 = sphi 0, %s62
      %s64 = sphi 0, %s62
      %s65 = sphi 0, %s64
      %s79 = sphi 0, %s65
      %s85 = sphi 0, %s87
      %s88 = sphi 0, %s85
      %s89 = sphi 0, %s88
      %s105 = sphi 0, %s89
      %s111 = sphi 0, %s113
      %s114 = sphi 0, %s111
      %s115 = sphi 0, %s114
      %s131 = sphi 0, %s115
    $region4: #{tpu_custom_call.1} parent=1 // loop_header_branch
      %17 = sbr.rel (%p15) target = $region8
    $region5: #{tpu_custom_call.1} parent=1 // loop_body
      %s19 = ssub.s32 %s14, 1
      %s20 = ssub.s32 %s14, 2
      %s27 = sadd.s32 1, %s22
      %p28 = scmp.ge.s32.totalorder %s27, 2
      %s29 = scalar_select %p28, 0, %s27
      %s30 = sadd.s32 1, %s21
      %s31 = scalar_select %p28, %s30, %s21
      %p32 = scmp.ge.s32.totalorder %s31, 2
      %s33 = scalar_select %p32, 0, %s31
      %s34 = ssub.s32 %s21, %s33
      %s35 = ssub.s32 %s22, %s29
      %s36 = sor.u32 %s34, %s35
      %p37 = scmp.eq.s32.totalorder %s36, 0
      %s39 = sadd.s32 %s38, 1
      %s40 = scalar_select %p37, %s38, %s39
      %p43 = pneg %p37
      %p44 = scmp.eq.s32.totalorder %s14, 3
      %p45 = por %p43, %p44
      %p46 = scmp.ne.s32.totalorder %s38, %s41
      %p47 = scmp.eq.s32.totalorder %s14, 0
      %p48 = por %p46, %p47
      %p49 = scmp.ne.s32.totalorder %s38, %s41
      %p50 = scmp.eq.s32.totalorder %s19, 3
      %p51 = por %p49, %p50
      %p52 = scmp.ne.s32.totalorder %s41, %s42
      %p53 = scmp.eq.s32.totalorder %s19, 0
      %p54 = por %p52, %p53
      %p55 = scmp.ne.s32.totalorder %s41, %s42
      %p56 = scmp.eq.s32.totalorder %s20, 3
      %p57 = por %p55, %p56
      %p59 = scmp.ne.s32.totalorder %s42, %s58
      %p60 = scmp.eq.s32.totalorder %s20, 0
      %p61 = por %p59, %p60
      %s63 = sadd.s32 %s62, 1
      %p66 = scmp.eq.s32.totalorder %s14, 3
      %p67 = scmp.ne.s32.totalorder %s62, %s64
      %p68 = scmp.eq.s32.totalorder %s14, 0
      %p69 = por %p67, %p68
      %p70 = scmp.ne.s32.totalorder %s62, %s64
      %p71 = scmp.eq.s32.totalorder %s19, 3
      %p72 = por %p70, %p71
      %p73 = scmp.ne.s32.totalorder %s64, %s65
      %p74 = scmp.eq.s32.totalorder %s19, 0
      %p75 = por %p73, %p74
      %p76 = scmp.ne.s32.totalorder %s64, %s65
      %p77 = scmp.eq.s32.totalorder %s20, 3
      %p78 = por %p76, %p77
      %p80 = scmp.ne.s32.totalorder %s65, %s79
      %p81 = scmp.eq.s32.totalorder %s20, 0
      %p82 = por %p80, %p81
      %s83 = ssub.s32 %s21, %s33
      %p84 = scmp.eq.s32.totalorder %s83, 0
      %s86 = sadd.s32 %s85, 1
      %s87 = scalar_select %p84, %s85, %s86
      %p90 = pneg %p84
      %p91 = scmp.eq.s32.totalorder %s14, 3
      %p92 = por %p90, %p91
      %p93 = scmp.ne.s32.totalorder %s85, %s88
      %p94 = scmp.eq.s32.totalorder %s14, 0
      %p95 = por %p93, %p94
      %p96 = scmp.ne.s32.totalorder %s85, %s88
      %p97 = scmp.eq.s32.totalorder %s19, 3
      %p98 = por %p96, %p97
      %p99 = scmp.ne.s32.totalorder %s88, %s89
      %p100 = scmp.eq.s32.totalorder %s19, 0
      %p101 = por %p99, %p100
      %p102 = scmp.ne.s32.totalorder %s88, %s89
      %p103 = scmp.eq.s32.totalorder %s20, 3
      %p104 = por %p102, %p103
      %p106 = scmp.ne.s32.totalorder %s89, %s105
      %p107 = scmp.eq.s32.totalorder %s20, 0
      %p108 = por %p106, %p107
      %s109 = ssub.s32 %s21, %s33
      %p110 = scmp.eq.s32.totalorder %s109, 0
      %s112 = sadd.s32 %s111, 1
      %s113 = scalar_select %p110, %s111, %s112
      %p116 = pneg %p110
      %p117 = scmp.eq.s32.totalorder %s14, 3
      %p118 = por %p116, %p117
      %p119 = scmp.ne.s32.totalorder %s111, %s114
      %p120 = scmp.eq.s32.totalorder %s14, 0
      %p121 = por %p119, %p120
      %p122 = scmp.ne.s32.totalorder %s111, %s114
      %p123 = scmp.eq.s32.totalorder %s19, 3
      %p124 = por %p122, %p123
      %p125 = scmp.ne.s32.totalorder %s114, %s115
      %p126 = scmp.eq.s32.totalorder %s19, 0
      %p127 = por %p125, %p126
      %p128 = scmp.ne.s32.totalorder %s114, %s115
      %p129 = scmp.eq.s32.totalorder %s20, 3
      %p130 = por %p128, %p129
      %p132 = scmp.ne.s32.totalorder %s115, %s131
      %p133 = scmp.eq.s32.totalorder %s20, 0
      %p134 = por %p132, %p133
      %p135 = scmp.le.s32.totalorder 1, %s14
      %p136 = scmp.lt.s32.totalorder %s14, 5
      %p137 = pnand %p135, %p136
      %p138 = pneg %p137
      // Predicated region
      $region9: #{tpu_custom_call.1} parent=5 // pred_check
        _
      $region10: #{tpu_custom_call.1} parent=5 // pred_check_branch
        %140 = sbr.rel (%p137) target = $region12
      $region11: #{tpu_custom_call.1} parent=5 // pred_region
        %s141 = ssub.s32 %s14, 1
        // Predicated region
        $region13: #{tpu_custom_call.1} parent=11 // pred_check
          %p142 = pneg %p75
        $region14: #{tpu_custom_call.1} parent=11 // pred_check_branch
          %144 = sbr.rel (%p142) target = $region16
        $region15: #{tpu_custom_call.1} parent=11 // pred_region
          %s146 = ssub.s32 1024, 1024
          %147 = vsyncadd [#allocation7], %s146
          %s148 = sshll.u32 [#allocation6], 4
          %s149 = int_to_ptr.vmem [resolvable:$true] %s148
          %154 = dma.hbm_to_vmem [thread:$0]  %s1, 1024, %s149, [#allocation7], 128, 128, 8
        $region16: #{tpu_custom_call.1} parent=11 // pred_fallthru
          _
      $region12: #{tpu_custom_call.1} parent=5 // pred_fallthru
        _
      %p155 = scmp.lt.s32.totalorder %s14, 4
      // Predicated region
      $region17: #{tpu_custom_call.1} parent=5 // pred_check
        %p156 = pneg %p155
      $region18: #{tpu_custom_call.1} parent=5 // pred_check_branch
        %158 = sbr.rel (%p156) target = $region20
      $region19: #{tpu_custom_call.1} parent=5 // pred_region
        // Predicated region
        $region21: #{tpu_custom_call.1} parent=19 // pred_check
          %p159 = pneg %p48
        $region22: #{tpu_custom_call.1} parent=19 // pred_check_branch
          %161 = sbr.rel (%p159) target = $region24
        $region23: #{tpu_custom_call.1} parent=19 // pred_region
          %s162 = sand.u32 %s38, 1
          %s163 = scalar_lea.sflag [#allocation5], %s162
          %s164 = sand.u32 %s38, 1
          %s165 = smul.addr %s164, 512
          %s166 = scalar_lea.vmem [#allocation4], %s165
          %s168 = ssub.s32 8192, 8192
          %169 = vsyncadd %s163, %s168
          %s170 = smul.addr %s21, 128
          %s171 = sadd.s32 %s22, %s170
          %s172 = smul.addr %s171, 128
          %s173 = scalar_lea.hbm %s0, %s172
          %s174 = sshll.u32 %s166, 4
          %s175 = int_to_ptr.vmem [resolvable:$true] %s174
          %180 = dma.hbm_to_vmem [thread:$0]  %s173, 8192, %s175, %s163, 256, 128, 8
        $region24: #{tpu_custom_call.1} parent=19 // pred_fallthru
          _
      $region20: #{tpu_custom_call.1} parent=5 // pred_fallthru
        _
      %p181 = scmp.le.s32.totalorder 1, %s14
      %p182 = scmp.lt.s32.totalorder %s14, 5
      %p183 = pnand %p181, %p182
      %p184 = pneg %p183
      // Predicated region
      $region25: #{tpu_custom_call.1} parent=5 // pred_check
        _
      $region26: #{tpu_custom_call.1} parent=5 // pred_check_branch
        %186 = sbr.rel (%p183) target = $region28
      $region27: #{tpu_custom_call.1} parent=5 // pred_region
        %s187 = ssub.s32 %s14, 1
        %s188 = sand.u32 %s41, 1
        %s189 = scalar_lea.sflag [#allocation5], %s188
        %s190 = sand.u32 %s41, 1
        %s191 = smul.addr %s190, 512
        %s192 = scalar_lea.vmem [#allocation4], %s191
        // Predicated region
        $region29: #{tpu_custom_call.1} parent=27 // pred_check
          %p193 = pneg %p54
        $region30: #{tpu_custom_call.1} parent=27 // pred_check_branch
          %195 = sbr.rel (%p193) target = $region32
        $region31: #{tpu_custom_call.1} parent=27 // pred_region
          %196 = dma.done %s189, 8192
        $region32: #{tpu_custom_call.1} parent=27 // pred_fallthru
          _
        // Predicated region
        $region33: #{tpu_custom_call.1} parent=27 // pred_check
          %p197 = pneg %p75
        $region34: #{tpu_custom_call.1} parent=27 // pred_check_branch
          %199 = sbr.rel (%p197) target = $region36
        $region35: #{tpu_custom_call.1} parent=27 // pred_region
          %200 = dma.done [#allocation7], 1024
        $region36: #{tpu_custom_call.1} parent=27 // pred_fallthru
          _
        %s201 = sand.u32 %s41, 1
        %s202 = scalar_lea.sflag [#allocation5], %s201
        %s203 = sand.u32 %s41, 1
        %s204 = smul.addr %s203, 512
        %s205 = scalar_lea.vmem [#allocation4], %s204
        %p206 = pneg %p54
        %p207 = pneg %p51
        %p208 = pneg %p75
        %p209 = pneg %p72
        %p210 = pneg %p101
        %p211 = pneg %p98
        %p212 = scmp.lt.s32.totalorder %s23, 1
        %s213 = scalar_select %p212, %s23, 1
        %s214 = smul.addr %s213, 8
        %s215 = smul.addr %s214, 8
        %s216 = scalar_lea.vmem %s2, %s215
        %p217 = pneg %p127
        %p218 = pneg %p124
        %p219 = scmp.lt.s32.totalorder %s23, 1
        %s220 = scalar_select %p219, %s23, 1
        %s221 = smul.addr %s220, 8
        %s222 = smul.addr %s221, 8
        %s223 = scalar_lea.vmem %s3, %s222
        %p224 = scmp.lt.s32.totalorder %s23, 1
        %s225 = scalar_select %p224, %s23, 1
        %s226 = smul.addr %s225, 8
        %s227 = smul.addr %s226, 8
        %s228 = scalar_lea.vmem %s2, %s227
        %p229 = scmp.lt.s32.totalorder %s23, 1
        %s230 = scalar_select %p229, %s23, 1
        %s231 = smul.addr %s230, 8
        %s232 = smul.addr %s231, 8
        %s233 = scalar_lea.vmem %s3, %s232
        %p234 = scmp.eq.s32.totalorder %s24, 0
        // Predicated region
        $region37: #{tpu_custom_call.1} parent=27 // pred_check
          %p235 = pneg %p234
        $region38: #{tpu_custom_call.1} parent=27 // pred_check_branch
          %237 = sbr.rel (%p235) target = $region40
        $region39: #{tpu_custom_call.1} parent=27 // pred_region
          %vm238 = vcmask 7168
          %239 = vst.msk [vmem:[#allocation2] sm:$0xff] %vm238, 0.0
          %240 = vst.msk [vmem:[#allocation2 + $0x8] sm:$0xff] %vm238, 0.0
          %241 = vst.msk [vmem:[#allocation2 + $0x10] sm:$0xff] %vm238, 0.0
          %242 = vst.msk [vmem:[#allocation2 + $0x18] sm:$0xff] %vm238, 0.0
          %243 = vst.msk [vmem:[#allocation2 + $0x20] sm:$0xff] %vm238, 0.0
          %244 = vst.msk [vmem:[#allocation2 + $0x28] sm:$0xff] %vm238, 0.0
          %245 = vst.msk [vmem:[#allocation2 + $0x30] sm:$0xff] %vm238, 0.0
          %246 = vst.msk [vmem:[#allocation2 + $0x38] sm:$0xff] %vm238, 0.0
          %247 = vst.msk [vmem:[#allocation3] sm:$0xff] %vm238, 0.0
          %248 = vst.msk [vmem:[#allocation3 + $0x8] sm:$0xff] %vm238, 0.0
          %249 = vst.msk [vmem:[#allocation3 + $0x10] sm:$0xff] %vm238, 0.0
          %250 = vst.msk [vmem:[#allocation3 + $0x18] sm:$0xff] %vm238, 0.0
          %251 = vst.msk [vmem:[#allocation3 + $0x20] sm:$0xff] %vm238, 0.0
          %252 = vst.msk [vmem:[#allocation3 + $0x28] sm:$0xff] %vm238, 0.0
          %253 = vst.msk [vmem:[#allocation3 + $0x30] sm:$0xff] %vm238, 0.0
          %254 = vst.msk [vmem:[#allocation3 + $0x38] sm:$0xff] %vm238, 0.0
        $region40: #{tpu_custom_call.1} parent=27 // pred_fallthru
          _
        %v255 = vld [vmem:[%s192] sm:$0x1]
        %v256 = vld [vmem:[%s192 + $0x8] sm:$0x1]
        %v257 = vld [vmem:[%s192 + $0x10] sm:$0x1]
        %v258 = vld [vmem:[%s192 + $0x18] sm:$0x1]
        %v259 = vld [vmem:[%s192 + $0x20] sm:$0x1]
        %v260 = vld [vmem:[%s192 + $0x28] sm:$0x1]
        %v261 = vld [vmem:[%s192 + $0x30] sm:$0x1]
        %v262 = vld [vmem:[%s192 + $0x38] sm:$0x1]
        %v263 = vld [vmem:[%s192 + $0x40] sm:$0x1]
        %v264 = vld [vmem:[%s192 + $0x48] sm:$0x1]
        %v265 = vld [vmem:[%s192 + $0x50] sm:$0x1]
        %v266 = vld [vmem:[%s192 + $0x58] sm:$0x1]
        %v267 = vld [vmem:[%s192 + $0x60] sm:$0x1]
        %v268 = vld [vmem:[%s192 + $0x68] sm:$0x1]
        %v269 = vld [vmem:[%s192 + $0x70] sm:$0x1]
        %v270 = vld [vmem:[%s192 + $0x78] sm:$0x1]
        %v271 = vld [vmem:[%s192 + $0x80] sm:$0x1]
        %v272 = vld [vmem:[%s192 + $0x88] sm:$0x1]
        %v273 = vld [vmem:[%s192 + $0x90] sm:$0x1]
        %v274 = vld [vmem:[%s192 + $0x98] sm:$0x1]
        %v275 = vld [vmem:[%s192 + $0xa0] sm:$0x1]
        %v276 = vld [vmem:[%s192 + $0xa8] sm:$0x1]
        %v277 = vld [vmem:[%s192 + $0xb0] sm:$0x1]
        %v278 = vld [vmem:[%s192 + $0xb8] sm:$0x1]
        %v279 = vld [vmem:[%s192 + $0xc0] sm:$0x1]
        %v280 = vld [vmem:[%s192 + $0xc8] sm:$0x1]
        %v281 = vld [vmem:[%s192 + $0xd0] sm:$0x1]
        %v282 = vld [vmem:[%s192 + $0xd8] sm:$0x1]
        %v283 = vld [vmem:[%s192 + $0xe0] sm:$0x1]
        %v284 = vld [vmem:[%s192 + $0xe8] sm:$0x1]
        %v285 = vld [vmem:[%s192 + $0xf0] sm:$0x1]
        %v286 = vld [vmem:[%s192 + $0xf8] sm:$0x1]
        %v287 = vld [vmem:[%s192 + $0x100] sm:$0x1]
        %v288 = vld [vmem:[%s192 + $0x108] sm:$0x1]
        %v289 = vld [vmem:[%s192 + $0x110] sm:$0x1]
        %v290 = vld [vmem:[%s192 + $0x118] sm:$0x1]
        %v291 = vld [vmem:[%s192 + $0x120] sm:$0x1]
        %v292 = vld [vmem:[%s192 + $0x128] sm:$0x1]
        %v293 = vld [vmem:[%s192 + $0x130] sm:$0x1]
        %v294 = vld [vmem:[%s192 + $0x138] sm:$0x1]
        %v295 = vld [vmem:[%s192 + $0x140] sm:$0x1]
        %v296 = vld [vmem:[%s192 + $0x148] sm:$0x1]
        %v297 = vld [vmem:[%s192 + $0x150] sm:$0x1]
        %v298 = vld [vmem:[%s192 + $0x158] sm:$0x1]
        %v299 = vld [vmem:[%s192 + $0x160] sm:$0x1]
        %v300 = vld [vmem:[%s192 + $0x168] sm:$0x1]
        %v301 = vld [vmem:[%s192 + $0x170] sm:$0x1]
        %v302 = vld [vmem:[%s192 + $0x178] sm:$0x1]
        %v303 = vld [vmem:[%s192 + $0x180] sm:$0x1]
        %v304 = vld [vmem:[%s192 + $0x188] sm:$0x1]
        %v305 = vld [vmem:[%s192 + $0x190] sm:$0x1]
        %v306 = vld [vmem:[%s192 + $0x198] sm:$0x1]
        %v307 = vld [vmem:[%s192 + $0x1a0] sm:$0x1]
        %v308 = vld [vmem:[%s192 + $0x1a8] sm:$0x1]
        %v309 = vld [vmem:[%s192 + $0x1b0] sm:$0x1]
        %v310 = vld [vmem:[%s192 + $0x1b8] sm:$0x1]
        %v311 = vld [vmem:[%s192 + $0x1c0] sm:$0x1]
        %v312 = vld [vmem:[%s192 + $0x1c8] sm:$0x1]
        %v313 = vld [vmem:[%s192 + $0x1d0] sm:$0x1]
        %v314 = vld [vmem:[%s192 + $0x1d8] sm:$0x1]
        %v315 = vld [vmem:[%s192 + $0x1e0] sm:$0x1]
        %v316 = vld [vmem:[%s192 + $0x1e8] sm:$0x1]
        %v317 = vld [vmem:[%s192 + $0x1f0] sm:$0x1]
        %v318 = vld [vmem:[%s192 + $0x1f8] sm:$0x1]
        %v383 = vrot.slane %v256, 7
        %vm384 = vcmask 1041409
        %v385 = vsel %vm384, %v383, %v255
        %v386 = vrot.slane %v257, 6
        %vm387 = vcmask 1042434
        %v388 = vsel %vm387, %v386, %v385
        %v389 = vrot.slane %v258, 5
        %vm390 = vcmask 1043459
        %v391 = vsel %vm390, %v389, %v388
        %v392 = vrot.slane %v259, 4
        %vm393 = vcmask 1044484
        %v394 = vsel %vm393, %v392, %v391
        %v395 = vrot.slane %v260, 3
        %vm396 = vcmask 1045509
        %v397 = vsel %vm396, %v395, %v394
        %v398 = vrot.slane %v261, 2
        %vm399 = vcmask 1046534
        %v400 = vsel %vm399, %v398, %v397
        %v401 = vrot.slane %v262, 1
        %vm402 = vcmask 1047559
        %v403 = vsel %vm402, %v401, %v400
        %v404 = vrot.slane %v264, 7
        %v405 = vsel %vm384, %v404, %v263
        %v406 = vrot.slane %v265, 6
        %v407 = vsel %vm387, %v406, %v405
        %v408 = vrot.slane %v266, 5
        %v409 = vsel %vm390, %v408, %v407
        %v410 = vrot.slane %v267, 4
        %v411 = vsel %vm393, %v410, %v409
        %v412 = vrot.slane %v268, 3
        %v413 = vsel %vm396, %v412, %v411
        %v414 = vrot.slane %v269, 2
        %v415 = vsel %vm399, %v414, %v413
        %v416 = vrot.slane %v270, 1
        %v417 = vsel %vm402, %v416, %v415
        %v418 = vrot.slane %v272, 7
        %v419 = vsel %vm384, %v418, %v271
        %v420 = vrot.slane %v273, 6
        %v421 = vsel %vm387, %v420, %v419
        %v422 = vrot.slane %v274, 5
        %v423 = vsel %vm390, %v422, %v421
        %v424 = vrot.slane %v275, 4
        %v425 = vsel %vm393, %v424, %v423
        %v426 = vrot.slane %v276, 3
        %v427 = vsel %vm396, %v426, %v425
        %v428 = vrot.slane %v277, 2
        %v429 = vsel %vm399, %v428, %v427
        %v430 = vrot.slane %v278, 1
        %v431 = vsel %vm402, %v430, %v429
        %v432 = vrot.slane %v280, 7
        %v433 = vsel %vm384, %v432, %v279
        %v434 = vrot.slane %v281, 6
        %v435 = vsel %vm387, %v434, %v433
        %v436 = vrot.slane %v282, 5
        %v437 = vsel %vm390, %v436, %v435
        %v438 = vrot.slane %v283, 4
        %v439 = vsel %vm393, %v438, %v437
        %v440 = vrot.slane %v284, 3
        %v441 = vsel %vm396, %v440, %v439
        %v442 = vrot.slane %v285, 2
        %v443 = vsel %vm399, %v442, %v441
        %v444 = vrot.slane %v286, 1
        %v445 = vsel %vm402, %v444, %v443
        %v446 = vrot.slane %v288, 7
        %v447 = vsel %vm384, %v446, %v287
        %v448 = vrot.slane %v289, 6
        %v449 = vsel %vm387, %v448, %v447
        %v450 = vrot.slane %v290, 5
        %v451 = vsel %vm390, %v450, %v449
        %v452 = vrot.slane %v291, 4
        %v453 = vsel %vm393, %v452, %v451
        %v454 = vrot.slane %v292, 3
        %v455 = vsel %vm396, %v454, %v453
        %v456 = vrot.slane %v293, 2
        %v457 = vsel %vm399, %v456, %v455
        %v458 = vrot.slane %v294, 1
        %v459 = vsel %vm402, %v458, %v457
        %v460 = vrot.slane %v296, 7
        %v461 = vsel %vm384, %v460, %v295
        %v462 = vrot.slane %v297, 6
        %v463 = vsel %vm387, %v462, %v461
        %v464 = vrot.slane %v298, 5
        %v465 = vsel %vm390, %v464, %v463
        %v466 = vrot.slane %v299, 4
        %v467 = vsel %vm393, %v466, %v465
        %v468 = vrot.slane %v300, 3
        %v469 = vsel %vm396, %v468, %v467
        %v470 = vrot.slane %v301, 2
        %v471 = vsel %vm399, %v470, %v469
        %v472 = vrot.slane %v302, 1
        %v473 = vsel %vm402, %v472, %v471
        %v474 = vrot.slane %v304, 7
        %v475 = vsel %vm384, %v474, %v303
        %v476 = vrot.slane %v305, 6
        %v477 = vsel %vm387, %v476, %v475
        %v478 = vrot.slane %v306, 5
        %v479 = vsel %vm390, %v478, %v477
        %v480 = vrot.slane %v307, 4
        %v481 = vsel %vm393, %v480, %v479
        %v482 = vrot.slane %v308, 3
        %v483 = vsel %vm396, %v482, %v481
        %v484 = vrot.slane %v309, 2
        %v485 = vsel %vm399, %v484, %v483
        %v486 = vrot.slane %v310, 1
        %v487 = vsel %vm402, %v486, %v485
        %v488 = vrot.slane %v312, 7
        %v489 = vsel %vm384, %v488, %v311
        %v490 = vrot.slane %v313, 6
        %v491 = vsel %vm387, %v490, %v489
        %v492 = vrot.slane %v314, 5
        %v493 = vsel %vm390, %v492, %v491
        %v494 = vrot.slane %v315, 4
        %v495 = vsel %vm393, %v494, %v493
        %v496 = vrot.slane %v316, 3
        %v497 = vsel %vm396, %v496, %v495
        %v498 = vrot.slane %v317, 2
        %v499 = vsel %vm399, %v498, %v497
        %v500 = vrot.slane %v318, 1
        %v501 = vsel %vm402, %v500, %v499
        %510 = vadd.xlane.f32.xlu0 %v403
        %v511 = vpop.xlane.xlu0 %510
        %512 = vadd.xlane.f32.xlu0 %v417
        %v513 = vpop.xlane.xlu0 %512
        %514 = vadd.xlane.f32.xlu0 %v431
        %v515 = vpop.xlane.xlu0 %514
        %516 = vadd.xlane.f32.xlu0 %v445
        %v517 = vpop.xlane.xlu0 %516
        %518 = vadd.xlane.f32.xlu0 %v459
        %v519 = vpop.xlane.xlu0 %518
        %520 = vadd.xlane.f32.xlu0 %v473
        %v521 = vpop.xlane.xlu0 %520
        %522 = vadd.xlane.f32.xlu0 %v487
        %v523 = vpop.xlane.xlu0 %522
        %524 = vadd.xlane.f32.xlu0 %v501
        %v525 = vpop.xlane.xlu0 %524
        %v526 = vadd.f32 %v511, 0.0
        %v527 = vadd.f32 %v513, 0.0
        %v528 = vadd.f32 %v515, 0.0
        %v529 = vadd.f32 %v517, 0.0
        %v530 = vadd.f32 %v519, 0.0
        %v531 = vadd.f32 %v521, 0.0
        %v532 = vadd.f32 %v523, 0.0
        %v533 = vadd.f32 %v525, 0.0
        %v534 = vmul.f32 %v255, %v255
        %v535 = vmul.f32 %v256, %v256
        %v536 = vmul.f32 %v257, %v257
        %v537 = vmul.f32 %v258, %v258
        %v538 = vmul.f32 %v259, %v259
        %v539 = vmul.f32 %v260, %v260
        %v540 = vmul.f32 %v261, %v261
        %v541 = vmul.f32 %v262, %v262
        %v542 = vmul.f32 %v263, %v263
        %v543 = vmul.f32 %v264, %v264
        %v544 = vmul.f32 %v265, %v265
        %v545 = vmul.f32 %v266, %v266
        %v546 = vmul.f32 %v267, %v267
        %v547 = vmul.f32 %v268, %v268
        %v548 = vmul.f32 %v269, %v269
        %v549 = vmul.f32 %v270, %v270
        %v550 = vmul.f32 %v271, %v271
        %v551 = vmul.f32 %v272, %v272
        %v552 = vmul.f32 %v273, %v273
        %v553 = vmul.f32 %v274, %v274
        %v554 = vmul.f32 %v275, %v275
        %v555 = vmul.f32 %v276, %v276
        %v556 = vmul.f32 %v277, %v277
        %v557 = vmul.f32 %v278, %v278
        %v558 = vmul.f32 %v279, %v279
        %v559 = vmul.f32 %v280, %v280
        %v560 = vmul.f32 %v281, %v281
        %v561 = vmul.f32 %v282, %v282
        %v562 = vmul.f32 %v283, %v283
        %v563 = vmul.f32 %v284, %v284
        %v564 = vmul.f32 %v285, %v285
        %v565 = vmul.f32 %v286, %v286
        %v566 = vmul.f32 %v287, %v287
        %v567 = vmul.f32 %v288, %v288
        %v568 = vmul.f32 %v289, %v289
        %v569 = vmul.f32 %v290, %v290
        %v570 = vmul.f32 %v291, %v291
        %v571 = vmul.f32 %v292, %v292
        %v572 = vmul.f32 %v293, %v293
        %v573 = vmul.f32 %v294, %v294
        %v574 = vmul.f32 %v295, %v295
        %v575 = vmul.f32 %v296, %v296
        %v576 = vmul.f32 %v297, %v297
        %v577 = vmul.f32 %v298, %v298
        %v578 = vmul.f32 %v299, %v299
        %v579 = vmul.f32 %v300, %v300
        %v580 = vmul.f32 %v301, %v301
        %v581 = vmul.f32 %v302, %v302
        %v582 = vmul.f32 %v303, %v303
        %v583 = vmul.f32 %v304, %v304
        %v584 = vmul.f32 %v305, %v305
        %v585 = vmul.f32 %v306, %v306
        %v586 = vmul.f32 %v307, %v307
        %v587 = vmul.f32 %v308, %v308
        %v588 = vmul.f32 %v309, %v309
        %v589 = vmul.f32 %v310, %v310
        %v590 = vmul.f32 %v311, %v311
        %v591 = vmul.f32 %v312, %v312
        %v592 = vmul.f32 %v313, %v313
        %v593 = vmul.f32 %v314, %v314
        %v594 = vmul.f32 %v315, %v315
        %v595 = vmul.f32 %v316, %v316
        %v596 = vmul.f32 %v317, %v317
        %v597 = vmul.f32 %v318, %v318
        %v662 = vrot.slane %v535, 7
        %v663 = vsel %vm384, %v662, %v534
        %v664 = vrot.slane %v536, 6
        %v665 = vsel %vm387, %v664, %v663
        %v666 = vrot.slane %v537, 5
        %v667 = vsel %vm390, %v666, %v665
        %v668 = vrot.slane %v538, 4
        %v669 = vsel %vm393, %v668, %v667
        %v670 = vrot.slane %v539, 3
        %v671 = vsel %vm396, %v670, %v669
        %v672 = vrot.slane %v540, 2
        %v673 = vsel %vm399, %v672, %v671
        %v674 = vrot.slane %v541, 1
        %v675 = vsel %vm402, %v674, %v673
        %v676 = vrot.slane %v543, 7
        %v677 = vsel %vm384, %v676, %v542
        %v678 = vrot.slane %v544, 6
        %v679 = vsel %vm387, %v678, %v677
        %v680 = vrot.slane %v545, 5
        %v681 = vsel %vm390, %v680, %v679
        %v682 = vrot.slane %v546, 4
        %v683 = vsel %vm393, %v682, %v681
        %v684 = vrot.slane %v547, 3
        %v685 = vsel %vm396, %v684, %v683
        %v686 = vrot.slane %v548, 2
        %v687 = vsel %vm399, %v686, %v685
        %v688 = vrot.slane %v549, 1
        %v689 = vsel %vm402, %v688, %v687
        %v690 = vrot.slane %v551, 7
        %v691 = vsel %vm384, %v690, %v550
        %v692 = vrot.slane %v552, 6
        %v693 = vsel %vm387, %v692, %v691
        %v694 = vrot.slane %v553, 5
        %v695 = vsel %vm390, %v694, %v693
        %v696 = vrot.slane %v554, 4
        %v697 = vsel %vm393, %v696, %v695
        %v698 = vrot.slane %v555, 3
        %v699 = vsel %vm396, %v698, %v697
        %v700 = vrot.slane %v556, 2
        %v701 = vsel %vm399, %v700, %v699
        %v702 = vrot.slane %v557, 1
        %v703 = vsel %vm402, %v702, %v701
        %v704 = vrot.slane %v559, 7
        %v705 = vsel %vm384, %v704, %v558
        %v706 = vrot.slane %v560, 6
        %v707 = vsel %vm387, %v706, %v705
        %v708 = vrot.slane %v561, 5
        %v709 = vsel %vm390, %v708, %v707
        %v710 = vrot.slane %v562, 4
        %v711 = vsel %vm393, %v710, %v709
        %v712 = vrot.slane %v563, 3
        %v713 = vsel %vm396, %v712, %v711
        %v714 = vrot.slane %v564, 2
        %v715 = vsel %vm399, %v714, %v713
        %v716 = vrot.slane %v565, 1
        %v717 = vsel %vm402, %v716, %v715
        %v718 = vrot.slane %v567, 7
        %v719 = vsel %vm384, %v718, %v566
        %v720 = vrot.slane %v568, 6
        %v721 = vsel %vm387, %v720, %v719
        %v722 = vrot.slane %v569, 5
        %v723 = vsel %vm390, %v722, %v721
        %v724 = vrot.slane %v570, 4
        %v725 = vsel %vm393, %v724, %v723
        %v726 = vrot.slane %v571, 3
        %v727 = vsel %vm396, %v726, %v725
        %v728 = vrot.slane %v572, 2
        %v729 = vsel %vm399, %v728, %v727
        %v730 = vrot.slane %v573, 1
        %v731 = vsel %vm402, %v730, %v729
        %v732 = vrot.slane %v575, 7
        %v733 = vsel %vm384, %v732, %v574
        %v734 = vrot.slane %v576, 6
        %v735 = vsel %vm387, %v734, %v733
        %v736 = vrot.slane %v577, 5
        %v737 = vsel %vm390, %v736, %v735
        %v738 = vrot.slane %v578, 4
        %v739 = vsel %vm393, %v738, %v737
        %v740 = vrot.slane %v579, 3
        %v741 = vsel %vm396, %v740, %v739
        %v742 = vrot.slane %v580, 2
        %v743 = vsel %vm399, %v742, %v741
        %v744 = vrot.slane %v581, 1
        %v745 = vsel %vm402, %v744, %v743
        %v746 = vrot.slane %v583, 7
        %v747 = vsel %vm384, %v746, %v582
        %v748 = vrot.slane %v584, 6
        %v749 = vsel %vm387, %v748, %v747
        %v750 = vrot.slane %v585, 5
        %v751 = vsel %vm390, %v750, %v749
        %v752 = vrot.slane %v586, 4
        %v753 = vsel %vm393, %v752, %v751
        %v754 = vrot.slane %v587, 3
        %v755 = vsel %vm396, %v754, %v753
        %v756 = vrot.slane %v588, 2
        %v757 = vsel %vm399, %v756, %v755
        %v758 = vrot.slane %v589, 1
        %v759 = vsel %vm402, %v758, %v757
        %v760 = vrot.slane %v591, 7
        %v761 = vsel %vm384, %v760, %v590
        %v762 = vrot.slane %v592, 6
        %v763 = vsel %vm387, %v762, %v761
        %v764 = vrot.slane %v593, 5
        %v765 = vsel %vm390, %v764, %v763
        %v766 = vrot.slane %v594, 4
        %v767 = vsel %vm393, %v766, %v765
        %v768 = vrot.slane %v595, 3
        %v769 = vsel %vm396, %v768, %v767
        %v770 = vrot.slane %v596, 2
        %v771 = vsel %vm399, %v770, %v769
        %v772 = vrot.slane %v597, 1
        %v773 = vsel %vm402, %v772, %v771
        %782 = vadd.xlane.f32.xlu0 %v675
        %v783 = vpop.xlane.xlu0 %782
        %784 = vadd.xlane.f32.xlu0 %v689
        %v785 = vpop.xlane.xlu0 %784
        %786 = vadd.xlane.f32.xlu0 %v703
        %v787 = vpop.xlane.xlu0 %786
        %788 = vadd.xlane.f32.xlu0 %v717
        %v789 = vpop.xlane.xlu0 %788
        %790 = vadd.xlane.f32.xlu0 %v731
        %v791 = vpop.xlane.xlu0 %790
        %792 = vadd.xlane.f32.xlu0 %v745
        %v793 = vpop.xlane.xlu0 %792
        %794 = vadd.xlane.f32.xlu0 %v759
        %v795 = vpop.xlane.xlu0 %794
        %796 = vadd.xlane.f32.xlu0 %v773
        %v797 = vpop.xlane.xlu0 %796
        %v798 = vadd.f32 %v783, 0.0
        %v799 = vadd.f32 %v785, 0.0
        %v800 = vadd.f32 %v787, 0.0
        %v801 = vadd.f32 %v789, 0.0
        %v802 = vadd.f32 %v791, 0.0
        %v803 = vadd.f32 %v793, 0.0
        %v804 = vadd.f32 %v795, 0.0
        %v805 = vadd.f32 %v797, 0.0
        %v806 = vld [vmem:[%s192 + $0x1] sm:$0x1]
        %v807 = vld [vmem:[%s192 + $0x9] sm:$0x1]
        %v808 = vld [vmem:[%s192 + $0x11] sm:$0x1]
        %v809 = vld [vmem:[%s192 + $0x19] sm:$0x1]
        %v810 = vld [vmem:[%s192 + $0x21] sm:$0x1]
        %v811 = vld [vmem:[%s192 + $0x29] sm:$0x1]
        %v812 = vld [vmem:[%s192 + $0x31] sm:$0x1]
        %v813 = vld [vmem:[%s192 + $0x39] sm:$0x1]
        %v814 = vld [vmem:[%s192 + $0x41] sm:$0x1]
        %v815 = vld [vmem:[%s192 + $0x49] sm:$0x1]
        %v816 = vld [vmem:[%s192 + $0x51] sm:$0x1]
        %v817 = vld [vmem:[%s192 + $0x59] sm:$0x1]
        %v818 = vld [vmem:[%s192 + $0x61] sm:$0x1]
        %v819 = vld [vmem:[%s192 + $0x69] sm:$0x1]
        %v820 = vld [vmem:[%s192 + $0x71] sm:$0x1]
        %v821 = vld [vmem:[%s192 + $0x79] sm:$0x1]
        %v822 = vld [vmem:[%s192 + $0x81] sm:$0x1]
        %v823 = vld [vmem:[%s192 + $0x89] sm:$0x1]
        %v824 = vld [vmem:[%s192 + $0x91] sm:$0x1]
        %v825 = vld [vmem:[%s192 + $0x99] sm:$0x1]
        %v826 = vld [vmem:[%s192 + $0xa1] sm:$0x1]
        %v827 = vld [vmem:[%s192 + $0xa9] sm:$0x1]
        %v828 = vld [vmem:[%s192 + $0xb1] sm:$0x1]
        %v829 = vld [vmem:[%s192 + $0xb9] sm:$0x1]
        %v830 = vld [vmem:[%s192 + $0xc1] sm:$0x1]
        %v831 = vld [vmem:[%s192 + $0xc9] sm:$0x1]
        %v832 = vld [vmem:[%s192 + $0xd1] sm:$0x1]
        %v833 = vld [vmem:[%s192 + $0xd9] sm:$0x1]
        %v834 = vld [vmem:[%s192 + $0xe1] sm:$0x1]
        %v835 = vld [vmem:[%s192 + $0xe9] sm:$0x1]
        %v836 = vld [vmem:[%s192 + $0xf1] sm:$0x1]
        %v837 = vld [vmem:[%s192 + $0xf9] sm:$0x1]
        %v838 = vld [vmem:[%s192 + $0x101] sm:$0x1]
        %v839 = vld [vmem:[%s192 + $0x109] sm:$0x1]
        %v840 = vld [vmem:[%s192 + $0x111] sm:$0x1]
        %v841 = vld [vmem:[%s192 + $0x119] sm:$0x1]
        %v842 = vld [vmem:[%s192 + $0x121] sm:$0x1]
        %v843 = vld [vmem:[%s192 + $0x129] sm:$0x1]
        %v844 = vld [vmem:[%s192 + $0x131] sm:$0x1]
        %v845 = vld [vmem:[%s192 + $0x139] sm:$0x1]
        %v846 = vld [vmem:[%s192 + $0x141] sm:$0x1]
        %v847 = vld [vmem:[%s192 + $0x149] sm:$0x1]
        %v848 = vld [vmem:[%s192 + $0x151] sm:$0x1]
        %v849 = vld [vmem:[%s192 + $0x159] sm:$0x1]
        %v850 = vld [vmem:[%s192 + $0x161] sm:$0x1]
        %v851 = vld [vmem:[%s192 + $0x169] sm:$0x1]
        %v852 = vld [vmem:[%s192 + $0x171] sm:$0x1]
        %v853 = vld [vmem:[%s192 + $0x179] sm:$0x1]
        %v854 = vld [vmem:[%s192 + $0x181] sm:$0x1]
        %v855 = vld [vmem:[%s192 + $0x189] sm:$0x1]
        %v856 = vld [vmem:[%s192 + $0x191] sm:$0x1]
        %v857 = vld [vmem:[%s192 + $0x199] sm:$0x1]
        %v858 = vld [vmem:[%s192 + $0x1a1] sm:$0x1]
        %v859 = vld [vmem:[%s192 + $0x1a9] sm:$0x1]
        %v860 = vld [vmem:[%s192 + $0x1b1] sm:$0x1]
        %v861 = vld [vmem:[%s192 + $0x1b9] sm:$0x1]
        %v862 = vld [vmem:[%s192 + $0x1c1] sm:$0x1]
        %v863 = vld [vmem:[%s192 + $0x1c9] sm:$0x1]
        %v864 = vld [vmem:[%s192 + $0x1d1] sm:$0x1]
        %v865 = vld [vmem:[%s192 + $0x1d9] sm:$0x1]
        %v866 = vld [vmem:[%s192 + $0x1e1] sm:$0x1]
        %v867 = vld [vmem:[%s192 + $0x1e9] sm:$0x1]
        %v868 = vld [vmem:[%s192 + $0x1f1] sm:$0x1]
        %v869 = vld [vmem:[%s192 + $0x1f9] sm:$0x1]
        %v934 = vrot.slane %v807, 7
        %v935 = vsel %vm384, %v934, %v806
        %v936 = vrot.slane %v808, 6
        %v937 = vsel %vm387, %v936, %v935
        %v938 = vrot.slane %v809, 5
        %v939 = vsel %vm390, %v938, %v937
        %v940 = vrot.slane %v810, 4
        %v941 = vsel %vm393, %v940, %v939
        %v942 = vrot.slane %v811, 3
        %v943 = vsel %vm396, %v942, %v941
        %v944 = vrot.slane %v812, 2
        %v945 = vsel %vm399, %v944, %v943
        %v946 = vrot.slane %v813, 1
        %v947 = vsel %vm402, %v946, %v945
        %v948 = vrot.slane %v815, 7
        %v949 = vsel %vm384, %v948, %v814
        %v950 = vrot.slane %v816, 6
        %v951 = vsel %vm387, %v950, %v949
        %v952 = vrot.slane %v817, 5
        %v953 = vsel %vm390, %v952, %v951
        %v954 = vrot.slane %v818, 4
        %v955 = vsel %vm393, %v954, %v953
        %v956 = vrot.slane %v819, 3
        %v957 = vsel %vm396, %v956, %v955
        %v958 = vrot.slane %v820, 2
        %v959 = vsel %vm399, %v958, %v957
        %v960 = vrot.slane %v821, 1
        %v961 = vsel %vm402, %v960, %v959
        %v962 = vrot.slane %v823, 7
        %v963 = vsel %vm384, %v962, %v822
        %v964 = vrot.slane %v824, 6
        %v965 = vsel %vm387, %v964, %v963
        %v966 = vrot.slane %v825, 5
        %v967 = vsel %vm390, %v966, %v965
        %v968 = vrot.slane %v826, 4
        %v969 = vsel %vm393, %v968, %v967
        %v970 = vrot.slane %v827, 3
        %v971 = vsel %vm396, %v970, %v969
        %v972 = vrot.slane %v828, 2
        %v973 = vsel %vm399, %v972, %v971
        %v974 = vrot.slane %v829, 1
        %v975 = vsel %vm402, %v974, %v973
        %v976 = vrot.slane %v831, 7
        %v977 = vsel %vm384, %v976, %v830
        %v978 = vrot.slane %v832, 6
        %v979 = vsel %vm387, %v978, %v977
        %v980 = vrot.slane %v833, 5
        %v981 = vsel %vm390, %v980, %v979
        %v982 = vrot.slane %v834, 4
        %v983 = vsel %vm393, %v982, %v981
        %v984 = vrot.slane %v835, 3
        %v985 = vsel %vm396, %v984, %v983
        %v986 = vrot.slane %v836, 2
        %v987 = vsel %vm399, %v986, %v985
        %v988 = vrot.slane %v837, 1
        %v989 = vsel %vm402, %v988, %v987
        %v990 = vrot.slane %v839, 7
        %v991 = vsel %vm384, %v990, %v838
        %v992 = vrot.slane %v840, 6
        %v993 = vsel %vm387, %v992, %v991
        %v994 = vrot.slane %v841, 5
        %v995 = vsel %vm390, %v994, %v993
        %v996 = vrot.slane %v842, 4
        %v997 = vsel %vm393, %v996, %v995
        %v998 = vrot.slane %v843, 3
        %v999 = vsel %vm396, %v998, %v997
        %v1000 = vrot.slane %v844, 2
        %v1001 = vsel %vm399, %v1000, %v999
        %v1002 = vrot.slane %v845, 1
        %v1003 = vsel %vm402, %v1002, %v1001
        %v1004 = vrot.slane %v847, 7
        %v1005 = vsel %vm384, %v1004, %v846
        %v1006 = vrot.slane %v848, 6
        %v1007 = vsel %vm387, %v1006, %v1005
        %v1008 = vrot.slane %v849, 5
        %v1009 = vsel %vm390, %v1008, %v1007
        %v1010 = vrot.slane %v850, 4
        %v1011 = vsel %vm393, %v1010, %v1009
        %v1012 = vrot.slane %v851, 3
        %v1013 = vsel %vm396, %v1012, %v1011
        %v1014 = vrot.slane %v852, 2
        %v1015 = vsel %vm399, %v1014, %v1013
        %v1016 = vrot.slane %v853, 1
        %v1017 = vsel %vm402, %v1016, %v1015
        %v1018 = vrot.slane %v855, 7
        %v1019 = vsel %vm384, %v1018, %v854
        %v1020 = vrot.slane %v856, 6
        %v1021 = vsel %vm387, %v1020, %v1019
        %v1022 = vrot.slane %v857, 5
        %v1023 = vsel %vm390, %v1022, %v1021
        %v1024 = vrot.slane %v858, 4
        %v1025 = vsel %vm393, %v1024, %v1023
        %v1026 = vrot.slane %v859, 3
        %v1027 = vsel %vm396, %v1026, %v1025
        %v1028 = vrot.slane %v860, 2
        %v1029 = vsel %vm399, %v1028, %v1027
        %v1030 = vrot.slane %v861, 1
        %v1031 = vsel %vm402, %v1030, %v1029
        %v1032 = vrot.slane %v863, 7
        %v1033 = vsel %vm384, %v1032, %v862
        %v1034 = vrot.slane %v864, 6
        %v1035 = vsel %vm387, %v1034, %v1033
        %v1036 = vrot.slane %v865, 5
        %v1037 = vsel %vm390, %v1036, %v1035
        %v1038 = vrot.slane %v866, 4
        %v1039 = vsel %vm393, %v1038, %v1037
        %v1040 = vrot.slane %v867, 3
        %v1041 = vsel %vm396, %v1040, %v1039
        %v1042 = vrot.slane %v868, 2
        %v1043 = vsel %vm399, %v1042, %v1041
        %v1044 = vrot.slane %v869, 1
        %v1045 = vsel %vm402, %v1044, %v1043
        %1054 = vadd.xlane.f32.xlu0 %v947
        %v1055 = vpop.xlane.xlu0 %1054
        %1056 = vadd.xlane.f32.xlu0 %v961
        %v1057 = vpop.xlane.xlu0 %1056
        %1058 = vadd.xlane.f32.xlu0 %v975
        %v1059 = vpop.xlane.xlu0 %1058
        %1060 = vadd.xlane.f32.xlu0 %v989
        %v1061 = vpop.xlane.xlu0 %1060
        %1062 = vadd.xlane.f32.xlu0 %v1003
        %v1063 = vpop.xlane.xlu0 %1062
        %1064 = vadd.xlane.f32.xlu0 %v1017
        %v1065 = vpop.xlane.xlu0 %1064
        %1066 = vadd.xlane.f32.xlu0 %v1031
        %v1067 = vpop.xlane.xlu0 %1066
        %1068 = vadd.xlane.f32.xlu0 %v1045
        %v1069 = vpop.xlane.xlu0 %1068
        %v1070 = vadd.f32 %v526, %v1055
        %v1071 = vadd.f32 %v527, %v1057
        %v1072 = vadd.f32 %v528, %v1059
        %v1073 = vadd.f32 %v529, %v1061
        %v1074 = vadd.f32 %v530, %v1063
        %v1075 = vadd.f32 %v531, %v1065
        %v1076 = vadd.f32 %v532, %v1067
        %v1077 = vadd.f32 %v533, %v1069
        %v1078 = vmul.f32 %v806, %v806
        %v1079 = vmul.f32 %v807, %v807
        %v1080 = vmul.f32 %v808, %v808
        %v1081 = vmul.f32 %v809, %v809
        %v1082 = vmul.f32 %v810, %v810
        %v1083 = vmul.f32 %v811, %v811
        %v1084 = vmul.f32 %v812, %v812
        %v1085 = vmul.f32 %v813, %v813
        %v1086 = vmul.f32 %v814, %v814
        %v1087 = vmul.f32 %v815, %v815
        %v1088 = vmul.f32 %v816, %v816
        %v1089 = vmul.f32 %v817, %v817
        %v1090 = vmul.f32 %v818, %v818
        %v1091 = vmul.f32 %v819, %v819
        %v1092 = vmul.f32 %v820, %v820
        %v1093 = vmul.f32 %v821, %v821
        %v1094 = vmul.f32 %v822, %v822
        %v1095 = vmul.f32 %v823, %v823
        %v1096 = vmul.f32 %v824, %v824
        %v1097 = vmul.f32 %v825, %v825
        %v1098 = vmul.f32 %v826, %v826
        %v1099 = vmul.f32 %v827, %v827
        %v1100 = vmul.f32 %v828, %v828
        %v1101 = vmul.f32 %v829, %v829
        %v1102 = vmul.f32 %v830, %v830
        %v1103 = vmul.f32 %v831, %v831
        %v1104 = vmul.f32 %v832, %v832
        %v1105 = vmul.f32 %v833, %v833
        %v1106 = vmul.f32 %v834, %v834
        %v1107 = vmul.f32 %v835, %v835
        %v1108 = vmul.f32 %v836, %v836
        %v1109 = vmul.f32 %v837, %v837
        %v1110 = vmul.f32 %v838, %v838
        %v1111 = vmul.f32 %v839, %v839
        %v1112 = vmul.f32 %v840, %v840
        %v1113 = vmul.f32 %v841, %v841
        %v1114 = vmul.f32 %v842, %v842
        %v1115 = vmul.f32 %v843, %v843
        %v1116 = vmul.f32 %v844, %v844
        %v1117 = vmul.f32 %v845, %v845
        %v1118 = vmul.f32 %v846, %v846
        %v1119 = vmul.f32 %v847, %v847
        %v1120 = vmul.f32 %v848, %v848
        %v1121 = vmul.f32 %v849, %v849
        %v1122 = vmul.f32 %v850, %v850
        %v1123 = vmul.f32 %v851, %v851
        %v1124 = vmul.f32 %v852, %v852
        %v1125 = vmul.f32 %v853, %v853
        %v1126 = vmul.f32 %v854, %v854
        %v1127 = vmul.f32 %v855, %v855
        %v1128 = vmul.f32 %v856, %v856
        %v1129 = vmul.f32 %v857, %v857
        %v1130 = vmul.f32 %v858, %v858
        %v1131 = vmul.f32 %v859, %v859
        %v1132 = vmul.f32 %v860, %v860
        %v1133 = vmul.f32 %v861, %v861
        %v1134 = vmul.f32 %v862, %v862
        %v1135 = vmul.f32 %v863, %v863
        %v1136 = vmul.f32 %v864, %v864
        %v1137 = vmul.f32 %v865, %v865
        %v1138 = vmul.f32 %v866, %v866
        %v1139 = vmul.f32 %v867, %v867
        %v1140 = vmul.f32 %v868, %v868
        %v1141 = vmul.f32 %v869, %v869
        %v1206 = vrot.slane %v1079, 7
        %v1207 = vsel %vm384, %v1206, %v1078
        %v1208 = vrot.slane %v1080, 6
        %v1209 = vsel %vm387, %v1208, %v1207
        %v1210 = vrot.slane %v1081, 5
        %v1211 = vsel %vm390, %v1210, %v1209
        %v1212 = vrot.slane %v1082, 4
        %v1213 = vsel %vm393, %v1212, %v1211
        %v1214 = vrot.slane %v1083, 3
        %v1215 = vsel %vm396, %v1214, %v1213
        %v1216 = vrot.slane %v1084, 2
        %v1217 = vsel %vm399, %v1216, %v1215
        %v1218 = vrot.slane %v1085, 1
        %v1219 = vsel %vm402, %v1218, %v1217
        %v1220 = vrot.slane %v1087, 7
        %v1221 = vsel %vm384, %v1220, %v1086
        %v1222 = vrot.slane %v1088, 6
        %v1223 = vsel %vm387, %v1222, %v1221
        %v1224 = vrot.slane %v1089, 5
        %v1225 = vsel %vm390, %v1224, %v1223
        %v1226 = vrot.slane %v1090, 4
        %v1227 = vsel %vm393, %v1226, %v1225
        %v1228 = vrot.slane %v1091, 3
        %v1229 = vsel %vm396, %v1228, %v1227
        %v1230 = vrot.slane %v1092, 2
        %v1231 = vsel %vm399, %v1230, %v1229
        %v1232 = vrot.slane %v1093, 1
        %v1233 = vsel %vm402, %v1232, %v1231
        %v1234 = vrot.slane %v1095, 7
        %v1235 = vsel %vm384, %v1234, %v1094
        %v1236 = vrot.slane %v1096, 6
        %v1237 = vsel %vm387, %v1236, %v1235
        %v1238 = vrot.slane %v1097, 5
        %v1239 = vsel %vm390, %v1238, %v1237
        %v1240 = vrot.slane %v1098, 4
        %v1241 = vsel %vm393, %v1240, %v1239
        %v1242 = vrot.slane %v1099, 3
        %v1243 = vsel %vm396, %v1242, %v1241
        %v1244 = vrot.slane %v1100, 2
        %v1245 = vsel %vm399, %v1244, %v1243
        %v1246 = vrot.slane %v1101, 1
        %v1247 = vsel %vm402, %v1246, %v1245
        %v1248 = vrot.slane %v1103, 7
        %v1249 = vsel %vm384, %v1248, %v1102
        %v1250 = vrot.slane %v1104, 6
        %v1251 = vsel %vm387, %v1250, %v1249
        %v1252 = vrot.slane %v1105, 5
        %v1253 = vsel %vm390, %v1252, %v1251
        %v1254 = vrot.slane %v1106, 4
        %v1255 = vsel %vm393, %v1254, %v1253
        %v1256 = vrot.slane %v1107, 3
        %v1257 = vsel %vm396, %v1256, %v1255
        %v1258 = vrot.slane %v1108, 2
        %v1259 = vsel %vm399, %v1258, %v1257
        %v1260 = vrot.slane %v1109, 1
        %v1261 = vsel %vm402, %v1260, %v1259
        %v1262 = vrot.slane %v1111, 7
        %v1263 = vsel %vm384, %v1262, %v1110
        %v1264 = vrot.slane %v1112, 6
        %v1265 = vsel %vm387, %v1264, %v1263
        %v1266 = vrot.slane %v1113, 5
        %v1267 = vsel %vm390, %v1266, %v1265
        %v1268 = vrot.slane %v1114, 4
        %v1269 = vsel %vm393, %v1268, %v1267
        %v1270 = vrot.slane %v1115, 3
        %v1271 = vsel %vm396, %v1270, %v1269
        %v1272 = vrot.slane %v1116, 2
        %v1273 = vsel %vm399, %v1272, %v1271
        %v1274 = vrot.slane %v1117, 1
        %v1275 = vsel %vm402, %v1274, %v1273
        %v1276 = vrot.slane %v1119, 7
        %v1277 = vsel %vm384, %v1276, %v1118
        %v1278 = vrot.slane %v1120, 6
        %v1279 = vsel %vm387, %v1278, %v1277
        %v1280 = vrot.slane %v1121, 5
        %v1281 = vsel %vm390, %v1280, %v1279
        %v1282 = vrot.slane %v1122, 4
        %v1283 = vsel %vm393, %v1282, %v1281
        %v1284 = vrot.slane %v1123, 3
        %v1285 = vsel %vm396, %v1284, %v1283
        %v1286 = vrot.slane %v1124, 2
        %v1287 = vsel %vm399, %v1286, %v1285
        %v1288 = vrot.slane %v1125, 1
        %v1289 = vsel %vm402, %v1288, %v1287
        %v1290 = vrot.slane %v1127, 7
        %v1291 = vsel %vm384, %v1290, %v1126
        %v1292 = vrot.slane %v1128, 6
        %v1293 = vsel %vm387, %v1292, %v1291
        %v1294 = vrot.slane %v1129, 5
        %v1295 = vsel %vm390, %v1294, %v1293
        %v1296 = vrot.slane %v1130, 4
        %v1297 = vsel %vm393, %v1296, %v1295
        %v1298 = vrot.slane %v1131, 3
        %v1299 = vsel %vm396, %v1298, %v1297
        %v1300 = vrot.slane %v1132, 2
        %v1301 = vsel %vm399, %v1300, %v1299
        %v1302 = vrot.slane %v1133, 1
        %v1303 = vsel %vm402, %v1302, %v1301
        %v1304 = vrot.slane %v1135, 7
        %v1305 = vsel %vm384, %v1304, %v1134
        %v1306 = vrot.slane %v1136, 6
        %v1307 = vsel %vm387, %v1306, %v1305
        %v1308 = vrot.slane %v1137, 5
        %v1309 = vsel %vm390, %v1308, %v1307
        %v1310 = vrot.slane %v1138, 4
        %v1311 = vsel %vm393, %v1310, %v1309
        %v1312 = vrot.slane %v1139, 3
        %v1313 = vsel %vm396, %v1312, %v1311
        %v1314 = vrot.slane %v1140, 2
        %v1315 = vsel %vm399, %v1314, %v1313
        %v1316 = vrot.slane %v1141, 1
        %v1317 = vsel %vm402, %v1316, %v1315
        %1326 = vadd.xlane.f32.xlu0 %v1219
        %v1327 = vpop.xlane.xlu0 %1326
        %1328 = vadd.xlane.f32.xlu0 %v1233
        %v1329 = vpop.xlane.xlu0 %1328
        %1330 = vadd.xlane.f32.xlu0 %v1247
        %v1331 = vpop.xlane.xlu0 %1330
        %1332 = vadd.xlane.f32.xlu0 %v1261
        %v1333 = vpop.xlane.xlu0 %1332
        %1334 = vadd.xlane.f32.xlu0 %v1275
        %v1335 = vpop.xlane.xlu0 %1334
        %1336 = vadd.xlane.f32.xlu0 %v1289
        %v1337 = vpop.xlane.xlu0 %1336
        %1338 = vadd.xlane.f32.xlu0 %v1303
        %v1339 = vpop.xlane.xlu0 %1338
        %1340 = vadd.xlane.f32.xlu0 %v1317
        %v1341 = vpop.xlane.xlu0 %1340
        %v1342 = vadd.f32 %v798, %v1327
        %v1343 = vadd.f32 %v799, %v1329
        %v1344 = vadd.f32 %v800, %v1331
        %v1345 = vadd.f32 %v801, %v1333
        %v1346 = vadd.f32 %v802, %v1335
        %v1347 = vadd.f32 %v803, %v1337
        %v1348 = vadd.f32 %v804, %v1339
        %v1349 = vadd.f32 %v805, %v1341
        %v1350 = vld [vmem:[%s192 + $0x2] sm:$0x1]
        %v1351 = vld [vmem:[%s192 + $0xa] sm:$0x1]
        %v1352 = vld [vmem:[%s192 + $0x12] sm:$0x1]
        %v1353 = vld [vmem:[%s192 + $0x1a] sm:$0x1]
        %v1354 = vld [vmem:[%s192 + $0x22] sm:$0x1]
        %v1355 = vld [vmem:[%s192 + $0x2a] sm:$0x1]
        %v1356 = vld [vmem:[%s192 + $0x32] sm:$0x1]
        %v1357 = vld [vmem:[%s192 + $0x3a] sm:$0x1]
        %v1358 = vld [vmem:[%s192 + $0x42] sm:$0x1]
        %v1359 = vld [vmem:[%s192 + $0x4a] sm:$0x1]
        %v1360 = vld [vmem:[%s192 + $0x52] sm:$0x1]
        %v1361 = vld [vmem:[%s192 + $0x5a] sm:$0x1]
        %v1362 = vld [vmem:[%s192 + $0x62] sm:$0x1]
        %v1363 = vld [vmem:[%s192 + $0x6a] sm:$0x1]
        %v1364 = vld [vmem:[%s192 + $0x72] sm:$0x1]
        %v1365 = vld [vmem:[%s192 + $0x7a] sm:$0x1]
        %v1366 = vld [vmem:[%s192 + $0x82] sm:$0x1]
        %v1367 = vld [vmem:[%s192 + $0x8a] sm:$0x1]
        %v1368 = vld [vmem:[%s192 + $0x92] sm:$0x1]
        %v1369 = vld [vmem:[%s192 + $0x9a] sm:$0x1]
        %v1370 = vld [vmem:[%s192 + $0xa2] sm:$0x1]
        %v1371 = vld [vmem:[%s192 + $0xaa] sm:$0x1]
        %v1372 = vld [vmem:[%s192 + $0xb2] sm:$0x1]
        %v1373 = vld [vmem:[%s192 + $0xba] sm:$0x1]
        %v1374 = vld [vmem:[%s192 + $0xc2] sm:$0x1]
        %v1375 = vld [vmem:[%s192 + $0xca] sm:$0x1]
        %v1376 = vld [vmem:[%s192 + $0xd2] sm:$0x1]
        %v1377 = vld [vmem:[%s192 + $0xda] sm:$0x1]
        %v1378 = vld [vmem:[%s192 + $0xe2] sm:$0x1]
        %v1379 = vld [vmem:[%s192 + $0xea] sm:$0x1]
        %v1380 = vld [vmem:[%s192 + $0xf2] sm:$0x1]
        %v1381 = vld [vmem:[%s192 + $0xfa] sm:$0x1]
        %v1382 = vld [vmem:[%s192 + $0x102] sm:$0x1]
        %v1383 = vld [vmem:[%s192 + $0x10a] sm:$0x1]
        %v1384 = vld [vmem:[%s192 + $0x112] sm:$0x1]
        %v1385 = vld [vmem:[%s192 + $0x11a] sm:$0x1]
        %v1386 = vld [vmem:[%s192 + $0x122] sm:$0x1]
        %v1387 = vld [vmem:[%s192 + $0x12a] sm:$0x1]
        %v1388 = vld [vmem:[%s192 + $0x132] sm:$0x1]
        %v1389 = vld [vmem:[%s192 + $0x13a] sm:$0x1]
        %v1390 = vld [vmem:[%s192 + $0x142] sm:$0x1]
        %v1391 = vld [vmem:[%s192 + $0x14a] sm:$0x1]
        %v1392 = vld [vmem:[%s192 + $0x152] sm:$0x1]
        %v1393 = vld [vmem:[%s192 + $0x15a] sm:$0x1]
        %v1394 = vld [vmem:[%s192 + $0x162] sm:$0x1]
        %v1395 = vld [vmem:[%s192 + $0x16a] sm:$0x1]
        %v1396 = vld [vmem:[%s192 + $0x172] sm:$0x1]
        %v1397 = vld [vmem:[%s192 + $0x17a] sm:$0x1]
        %v1398 = vld [vmem:[%s192 + $0x182] sm:$0x1]
        %v1399 = vld [vmem:[%s192 + $0x18a] sm:$0x1]
        %v1400 = vld [vmem:[%s192 + $0x192] sm:$0x1]
        %v1401 = vld [vmem:[%s192 + $0x19a] sm:$0x1]
        %v1402 = vld [vmem:[%s192 + $0x1a2] sm:$0x1]
        %v1403 = vld [vmem:[%s192 + $0x1aa] sm:$0x1]
        %v1404 = vld [vmem:[%s192 + $0x1b2] sm:$0x1]
        %v1405 = vld [vmem:[%s192 + $0x1ba] sm:$0x1]
        %v1406 = vld [vmem:[%s192 + $0x1c2] sm:$0x1]
        %v1407 = vld [vmem:[%s192 + $0x1ca] sm:$0x1]
        %v1408 = vld [vmem:[%s192 + $0x1d2] sm:$0x1]
        %v1409 = vld [vmem:[%s192 + $0x1da] sm:$0x1]
        %v1410 = vld [vmem:[%s192 + $0x1e2] sm:$0x1]
        %v1411 = vld [vmem:[%s192 + $0x1ea] sm:$0x1]
        %v1412 = vld [vmem:[%s192 + $0x1f2] sm:$0x1]
        %v1413 = vld [vmem:[%s192 + $0x1fa] sm:$0x1]
        %v1478 = vrot.slane %v1351, 7
        %v1479 = vsel %vm384, %v1478, %v1350
        %v1480 = vrot.slane %v1352, 6
        %v1481 = vsel %vm387, %v1480, %v1479
        %v1482 = vrot.slane %v1353, 5
        %v1483 = vsel %vm390, %v1482, %v1481
        %v1484 = vrot.slane %v1354, 4
        %v1485 = vsel %vm393, %v1484, %v1483
        %v1486 = vrot.slane %v1355, 3
        %v1487 = vsel %vm396, %v1486, %v1485
        %v1488 = vrot.slane %v1356, 2
        %v1489 = vsel %vm399, %v1488, %v1487
        %v1490 = vrot.slane %v1357, 1
        %v1491 = vsel %vm402, %v1490, %v1489
        %v1492 = vrot.slane %v1359, 7
        %v1493 = vsel %vm384, %v1492, %v1358
        %v1494 = vrot.slane %v1360, 6
        %v1495 = vsel %vm387, %v1494, %v1493
        %v1496 = vrot.slane %v1361, 5
        %v1497 = vsel %vm390, %v1496, %v1495
        %v1498 = vrot.slane %v1362, 4
        %v1499 = vsel %vm393, %v1498, %v1497
        %v1500 = vrot.slane %v1363, 3
        %v1501 = vsel %vm396, %v1500, %v1499
        %v1502 = vrot.slane %v1364, 2
        %v1503 = vsel %vm399, %v1502, %v1501
        %v1504 = vrot.slane %v1365, 1
        %v1505 = vsel %vm402, %v1504, %v1503
        %v1506 = vrot.slane %v1367, 7
        %v1507 = vsel %vm384, %v1506, %v1366
        %v1508 = vrot.slane %v1368, 6
        %v1509 = vsel %vm387, %v1508, %v1507
        %v1510 = vrot.slane %v1369, 5
        %v1511 = vsel %vm390, %v1510, %v1509
        %v1512 = vrot.slane %v1370, 4
        %v1513 = vsel %vm393, %v1512, %v1511
        %v1514 = vrot.slane %v1371, 3
        %v1515 = vsel %vm396, %v1514, %v1513
        %v1516 = vrot.slane %v1372, 2
        %v1517 = vsel %vm399, %v1516, %v1515
        %v1518 = vrot.slane %v1373, 1
        %v1519 = vsel %vm402, %v1518, %v1517
        %v1520 = vrot.slane %v1375, 7
        %v1521 = vsel %vm384, %v1520, %v1374
        %v1522 = vrot.slane %v1376, 6
        %v1523 = vsel %vm387, %v1522, %v1521
        %v1524 = vrot.slane %v1377, 5
        %v1525 = vsel %vm390, %v1524, %v1523
        %v1526 = vrot.slane %v1378, 4
        %v1527 = vsel %vm393, %v1526, %v1525
        %v1528 = vrot.slane %v1379, 3
        %v1529 = vsel %vm396, %v1528, %v1527
        %v1530 = vrot.slane %v1380, 2
        %v1531 = vsel %vm399, %v1530, %v1529
        %v1532 = vrot.slane %v1381, 1
        %v1533 = vsel %vm402, %v1532, %v1531
        %v1534 = vrot.slane %v1383, 7
        %v1535 = vsel %vm384, %v1534, %v1382
        %v1536 = vrot.slane %v1384, 6
        %v1537 = vsel %vm387, %v1536, %v1535
        %v1538 = vrot.slane %v1385, 5
        %v1539 = vsel %vm390, %v1538, %v1537
        %v1540 = vrot.slane %v1386, 4
        %v1541 = vsel %vm393, %v1540, %v1539
        %v1542 = vrot.slane %v1387, 3
        %v1543 = vsel %vm396, %v1542, %v1541
        %v1544 = vrot.slane %v1388, 2
        %v1545 = vsel %vm399, %v1544, %v1543
        %v1546 = vrot.slane %v1389, 1
        %v1547 = vsel %vm402, %v1546, %v1545
        %v1548 = vrot.slane %v1391, 7
        %v1549 = vsel %vm384, %v1548, %v1390
        %v1550 = vrot.slane %v1392, 6
        %v1551 = vsel %vm387, %v1550, %v1549
        %v1552 = vrot.slane %v1393, 5
        %v1553 = vsel %vm390, %v1552, %v1551
        %v1554 = vrot.slane %v1394, 4
        %v1555 = vsel %vm393, %v1554, %v1553
        %v1556 = vrot.slane %v1395, 3
        %v1557 = vsel %vm396, %v1556, %v1555
        %v1558 = vrot.slane %v1396, 2
        %v1559 = vsel %vm399, %v1558, %v1557
        %v1560 = vrot.slane %v1397, 1
        %v1561 = vsel %vm402, %v1560, %v1559
        %v1562 = vrot.slane %v1399, 7
        %v1563 = vsel %vm384, %v1562, %v1398
        %v1564 = vrot.slane %v1400, 6
        %v1565 = vsel %vm387, %v1564, %v1563
        %v1566 = vrot.slane %v1401, 5
        %v1567 = vsel %vm390, %v1566, %v1565
        %v1568 = vrot.slane %v1402, 4
        %v1569 = vsel %vm393, %v1568, %v1567
        %v1570 = vrot.slane %v1403, 3
        %v1571 = vsel %vm396, %v1570, %v1569
        %v1572 = vrot.slane %v1404, 2
        %v1573 = vsel %vm399, %v1572, %v1571
        %v1574 = vrot.slane %v1405, 1
        %v1575 = vsel %vm402, %v1574, %v1573
        %v1576 = vrot.slane %v1407, 7
        %v1577 = vsel %vm384, %v1576, %v1406
        %v1578 = vrot.slane %v1408, 6
        %v1579 = vsel %vm387, %v1578, %v1577
        %v1580 = vrot.slane %v1409, 5
        %v1581 = vsel %vm390, %v1580, %v1579
        %v1582 = vrot.slane %v1410, 4
        %v1583 = vsel %vm393, %v1582, %v1581
        %v1584 = vrot.slane %v1411, 3
        %v1585 = vsel %vm396, %v1584, %v1583
        %v1586 = vrot.slane %v1412, 2
        %v1587 = vsel %vm399, %v1586, %v1585
        %v1588 = vrot.slane %v1413, 1
        %v1589 = vsel %vm402, %v1588, %v1587
        %1598 = vadd.xlane.f32.xlu0 %v1491
        %v1599 = vpop.xlane.xlu0 %1598
        %1600 = vadd.xlane.f32.xlu0 %v1505
        %v1601 = vpop.xlane.xlu0 %1600
        %1602 = vadd.xlane.f32.xlu0 %v1519
        %v1603 = vpop.xlane.xlu0 %1602
        %1604 = vadd.xlane.f32.xlu0 %v1533
        %v1605 = vpop.xlane.xlu0 %1604
        %1606 = vadd.xlane.f32.xlu0 %v1547
        %v1607 = vpop.xlane.xlu0 %1606
        %1608 = vadd.xlane.f32.xlu0 %v1561
        %v1609 = vpop.xlane.xlu0 %1608
        %1610 = vadd.xlane.f32.xlu0 %v1575
        %v1611 = vpop.xlane.xlu0 %1610
        %1612 = vadd.xlane.f32.xlu0 %v1589
        %v1613 = vpop.xlane.xlu0 %1612
        %v1614 = vadd.f32 %v1070, %v1599
        %v1615 = vadd.f32 %v1071, %v1601
        %v1616 = vadd.f32 %v1072, %v1603
        %v1617 = vadd.f32 %v1073, %v1605
        %v1618 = vadd.f32 %v1074, %v1607
        %v1619 = vadd.f32 %v1075, %v1609
        %v1620 = vadd.f32 %v1076, %v1611
        %v1621 = vadd.f32 %v1077, %v1613
        %v1622 = vmul.f32 %v1350, %v1350
        %v1623 = vmul.f32 %v1351, %v1351
        %v1624 = vmul.f32 %v1352, %v1352
        %v1625 = vmul.f32 %v1353, %v1353
        %v1626 = vmul.f32 %v1354, %v1354
        %v1627 = vmul.f32 %v1355, %v1355
        %v1628 = vmul.f32 %v1356, %v1356
        %v1629 = vmul.f32 %v1357, %v1357
        %v1630 = vmul.f32 %v1358, %v1358
        %v1631 = vmul.f32 %v1359, %v1359
        %v1632 = vmul.f32 %v1360, %v1360
        %v1633 = vmul.f32 %v1361, %v1361
        %v1634 = vmul.f32 %v1362, %v1362
        %v1635 = vmul.f32 %v1363, %v1363
        %v1636 = vmul.f32 %v1364, %v1364
        %v1637 = vmul.f32 %v1365, %v1365
        %v1638 = vmul.f32 %v1366, %v1366
        %v1639 = vmul.f32 %v1367, %v1367
        %v1640 = vmul.f32 %v1368, %v1368
        %v1641 = vmul.f32 %v1369, %v1369
        %v1642 = vmul.f32 %v1370, %v1370
        %v1643 = vmul.f32 %v1371, %v1371
        %v1644 = vmul.f32 %v1372, %v1372
        %v1645 = vmul.f32 %v1373, %v1373
        %v1646 = vmul.f32 %v1374, %v1374
        %v1647 = vmul.f32 %v1375, %v1375
        %v1648 = vmul.f32 %v1376, %v1376
        %v1649 = vmul.f32 %v1377, %v1377
        %v1650 = vmul.f32 %v1378, %v1378
        %v1651 = vmul.f32 %v1379, %v1379
        %v1652 = vmul.f32 %v1380, %v1380
        %v1653 = vmul.f32 %v1381, %v1381
        %v1654 = vmul.f32 %v1382, %v1382
        %v1655 = vmul.f32 %v1383, %v1383
        %v1656 = vmul.f32 %v1384, %v1384
        %v1657 = vmul.f32 %v1385, %v1385
        %v1658 = vmul.f32 %v1386, %v1386
        %v1659 = vmul.f32 %v1387, %v1387
        %v1660 = vmul.f32 %v1388, %v1388
        %v1661 = vmul.f32 %v1389, %v1389
        %v1662 = vmul.f32 %v1390, %v1390
        %v1663 = vmul.f32 %v1391, %v1391
        %v1664 = vmul.f32 %v1392, %v1392
        %v1665 = vmul.f32 %v1393, %v1393
        %v1666 = vmul.f32 %v1394, %v1394
        %v1667 = vmul.f32 %v1395, %v1395
        %v1668 = vmul.f32 %v1396, %v1396
        %v1669 = vmul.f32 %v1397, %v1397
        %v1670 = vmul.f32 %v1398, %v1398
        %v1671 = vmul.f32 %v1399, %v1399
        %v1672 = vmul.f32 %v1400, %v1400
        %v1673 = vmul.f32 %v1401, %v1401
        %v1674 = vmul.f32 %v1402, %v1402
        %v1675 = vmul.f32 %v1403, %v1403
        %v1676 = vmul.f32 %v1404, %v1404
        %v1677 = vmul.f32 %v1405, %v1405
        %v1678 = vmul.f32 %v1406, %v1406
        %v1679 = vmul.f32 %v1407, %v1407
        %v1680 = vmul.f32 %v1408, %v1408
        %v1681 = vmul.f32 %v1409, %v1409
        %v1682 = vmul.f32 %v1410, %v1410
        %v1683 = vmul.f32 %v1411, %v1411
        %v1684 = vmul.f32 %v1412, %v1412
        %v1685 = vmul.f32 %v1413, %v1413
        %v1750 = vrot.slane %v1623, 7
        %v1751 = vsel %vm384, %v1750, %v1622
        %v1752 = vrot.slane %v1624, 6
        %v1753 = vsel %vm387, %v1752, %v1751
        %v1754 = vrot.slane %v1625, 5
        %v1755 = vsel %vm390, %v1754, %v1753
        %v1756 = vrot.slane %v1626, 4
        %v1757 = vsel %vm393, %v1756, %v1755
        %v1758 = vrot.slane %v1627, 3
        %v1759 = vsel %vm396, %v1758, %v1757
        %v1760 = vrot.slane %v1628, 2
        %v1761 = vsel %vm399, %v1760, %v1759
        %v1762 = vrot.slane %v1629, 1
        %v1763 = vsel %vm402, %v1762, %v1761
        %v1764 = vrot.slane %v1631, 7
        %v1765 = vsel %vm384, %v1764, %v1630
        %v1766 = vrot.slane %v1632, 6
        %v1767 = vsel %vm387, %v1766, %v1765
        %v1768 = vrot.slane %v1633, 5
        %v1769 = vsel %vm390, %v1768, %v1767
        %v1770 = vrot.slane %v1634, 4
        %v1771 = vsel %vm393, %v1770, %v1769
        %v1772 = vrot.slane %v1635, 3
        %v1773 = vsel %vm396, %v1772, %v1771
        %v1774 = vrot.slane %v1636, 2
        %v1775 = vsel %vm399, %v1774, %v1773
        %v1776 = vrot.slane %v1637, 1
        %v1777 = vsel %vm402, %v1776, %v1775
        %v1778 = vrot.slane %v1639, 7
        %v1779 = vsel %vm384, %v1778, %v1638
        %v1780 = vrot.slane %v1640, 6
        %v1781 = vsel %vm387, %v1780, %v1779
        %v1782 = vrot.slane %v1641, 5
        %v1783 = vsel %vm390, %v1782, %v1781
        %v1784 = vrot.slane %v1642, 4
        %v1785 = vsel %vm393, %v1784, %v1783
        %v1786 = vrot.slane %v1643, 3
        %v1787 = vsel %vm396, %v1786, %v1785
        %v1788 = vrot.slane %v1644, 2
        %v1789 = vsel %vm399, %v1788, %v1787
        %v1790 = vrot.slane %v1645, 1
        %v1791 = vsel %vm402, %v1790, %v1789
        %v1792 = vrot.slane %v1647, 7
        %v1793 = vsel %vm384, %v1792, %v1646
        %v1794 = vrot.slane %v1648, 6
        %v1795 = vsel %vm387, %v1794, %v1793
        %v1796 = vrot.slane %v1649, 5
        %v1797 = vsel %vm390, %v1796, %v1795
        %v1798 = vrot.slane %v1650, 4
        %v1799 = vsel %vm393, %v1798, %v1797
        %v1800 = vrot.slane %v1651, 3
        %v1801 = vsel %vm396, %v1800, %v1799
        %v1802 = vrot.slane %v1652, 2
        %v1803 = vsel %vm399, %v1802, %v1801
        %v1804 = vrot.slane %v1653, 1
        %v1805 = vsel %vm402, %v1804, %v1803
        %v1806 = vrot.slane %v1655, 7
        %v1807 = vsel %vm384, %v1806, %v1654
        %v1808 = vrot.slane %v1656, 6
        %v1809 = vsel %vm387, %v1808, %v1807
        %v1810 = vrot.slane %v1657, 5
        %v1811 = vsel %vm390, %v1810, %v1809
        %v1812 = vrot.slane %v1658, 4
        %v1813 = vsel %vm393, %v1812, %v1811
        %v1814 = vrot.slane %v1659, 3
        %v1815 = vsel %vm396, %v1814, %v1813
        %v1816 = vrot.slane %v1660, 2
        %v1817 = vsel %vm399, %v1816, %v1815
        %v1818 = vrot.slane %v1661, 1
        %v1819 = vsel %vm402, %v1818, %v1817
        %v1820 = vrot.slane %v1663, 7
        %v1821 = vsel %vm384, %v1820, %v1662
        %v1822 = vrot.slane %v1664, 6
        %v1823 = vsel %vm387, %v1822, %v1821
        %v1824 = vrot.slane %v1665, 5
        %v1825 = vsel %vm390, %v1824, %v1823
        %v1826 = vrot.slane %v1666, 4
        %v1827 = vsel %vm393, %v1826, %v1825
        %v1828 = vrot.slane %v1667, 3
        %v1829 = vsel %vm396, %v1828, %v1827
        %v1830 = vrot.slane %v1668, 2
        %v1831 = vsel %vm399, %v1830, %v1829
        %v1832 = vrot.slane %v1669, 1
        %v1833 = vsel %vm402, %v1832, %v1831
        %v1834 = vrot.slane %v1671, 7
        %v1835 = vsel %vm384, %v1834, %v1670
        %v1836 = vrot.slane %v1672, 6
        %v1837 = vsel %vm387, %v1836, %v1835
        %v1838 = vrot.slane %v1673, 5
        %v1839 = vsel %vm390, %v1838, %v1837
        %v1840 = vrot.slane %v1674, 4
        %v1841 = vsel %vm393, %v1840, %v1839
        %v1842 = vrot.slane %v1675, 3
        %v1843 = vsel %vm396, %v1842, %v1841
        %v1844 = vrot.slane %v1676, 2
        %v1845 = vsel %vm399, %v1844, %v1843
        %v1846 = vrot.slane %v1677, 1
        %v1847 = vsel %vm402, %v1846, %v1845
        %v1848 = vrot.slane %v1679, 7
        %v1849 = vsel %vm384, %v1848, %v1678
        %v1850 = vrot.slane %v1680, 6
        %v1851 = vsel %vm387, %v1850, %v1849
        %v1852 = vrot.slane %v1681, 5
        %v1853 = vsel %vm390, %v1852, %v1851
        %v1854 = vrot.slane %v1682, 4
        %v1855 = vsel %vm393, %v1854, %v1853
        %v1856 = vrot.slane %v1683, 3
        %v1857 = vsel %vm396, %v1856, %v1855
        %v1858 = vrot.slane %v1684, 2
        %v1859 = vsel %vm399, %v1858, %v1857
        %v1860 = vrot.slane %v1685, 1
        %v1861 = vsel %vm402, %v1860, %v1859
        %1870 = vadd.xlane.f32.xlu0 %v1763
        %v1871 = vpop.xlane.xlu0 %1870
        %1872 = vadd.xlane.f32.xlu0 %v1777
        %v1873 = vpop.xlane.xlu0 %1872
        %1874 = vadd.xlane.f32.xlu0 %v1791
        %v1875 = vpop.xlane.xlu0 %1874
        %1876 = vadd.xlane.f32.xlu0 %v1805
        %v1877 = vpop.xlane.xlu0 %1876
        %1878 = vadd.xlane.f32.xlu0 %v1819
        %v1879 = vpop.xlane.xlu0 %1878
        %1880 = vadd.xlane.f32.xlu0 %v1833
        %v1881 = vpop.xlane.xlu0 %1880
        %1882 = vadd.xlane.f32.xlu0 %v1847
        %v1883 = vpop.xlane.xlu0 %1882
        %1884 = vadd.xlane.f32.xlu0 %v1861
        %v1885 = vpop.xlane.xlu0 %1884
        %v1886 = vadd.f32 %v1342, %v1871
        %v1887 = vadd.f32 %v1343, %v1873
        %v1888 = vadd.f32 %v1344, %v1875
        %v1889 = vadd.f32 %v1345, %v1877
        %v1890 = vadd.f32 %v1346, %v1879
        %v1891 = vadd.f32 %v1347, %v1881
        %v1892 = vadd.f32 %v1348, %v1883
        %v1893 = vadd.f32 %v1349, %v1885
        %v1894 = vld [vmem:[%s192 + $0x3] sm:$0x1]
        %v1895 = vld [vmem:[%s192 + $0xb] sm:$0x1]
        %v1896 = vld [vmem:[%s192 + $0x13] sm:$0x1]
        %v1897 = vld [vmem:[%s192 + $0x1b] sm:$0x1]
        %v1898 = vld [vmem:[%s192 + $0x23] sm:$0x1]
        %v1899 = vld [vmem:[%s192 + $0x2b] sm:$0x1]
        %v1900 = vld [vmem:[%s192 + $0x33] sm:$0x1]
        %v1901 = vld [vmem:[%s192 + $0x3b] sm:$0x1]
        %v1902 = vld [vmem:[%s192 + $0x43] sm:$0x1]
        %v1903 = vld [vmem:[%s192 + $0x4b] sm:$0x1]
        %v1904 = vld [vmem:[%s192 + $0x53] sm:$0x1]
        %v1905 = vld [vmem:[%s192 + $0x5b] sm:$0x1]
        %v1906 = vld [vmem:[%s192 + $0x63] sm:$0x1]
        %v1907 = vld [vmem:[%s192 + $0x6b] sm:$0x1]
        %v1908 = vld [vmem:[%s192 + $0x73] sm:$0x1]
        %v1909 = vld [vmem:[%s192 + $0x7b] sm:$0x1]
        %v1910 = vld [vmem:[%s192 + $0x83] sm:$0x1]
        %v1911 = vld [vmem:[%s192 + $0x8b] sm:$0x1]
        %v1912 = vld [vmem:[%s192 + $0x93] sm:$0x1]
        %v1913 = vld [vmem:[%s192 + $0x9b] sm:$0x1]
        %v1914 = vld [vmem:[%s192 + $0xa3] sm:$0x1]
        %v1915 = vld [vmem:[%s192 + $0xab] sm:$0x1]
        %v1916 = vld [vmem:[%s192 + $0xb3] sm:$0x1]
        %v1917 = vld [vmem:[%s192 + $0xbb] sm:$0x1]
        %v1918 = vld [vmem:[%s192 + $0xc3] sm:$0x1]
        %v1919 = vld [vmem:[%s192 + $0xcb] sm:$0x1]
        %v1920 = vld [vmem:[%s192 + $0xd3] sm:$0x1]
        %v1921 = vld [vmem:[%s192 + $0xdb] sm:$0x1]
        %v1922 = vld [vmem:[%s192 + $0xe3] sm:$0x1]
        %v1923 = vld [vmem:[%s192 + $0xeb] sm:$0x1]
        %v1924 = vld [vmem:[%s192 + $0xf3] sm:$0x1]
        %v1925 = vld [vmem:[%s192 + $0xfb] sm:$0x1]
        %v1926 = vld [vmem:[%s192 + $0x103] sm:$0x1]
        %v1927 = vld [vmem:[%s192 + $0x10b] sm:$0x1]
        %v1928 = vld [vmem:[%s192 + $0x113] sm:$0x1]
        %v1929 = vld [vmem:[%s192 + $0x11b] sm:$0x1]
        %v1930 = vld [vmem:[%s192 + $0x123] sm:$0x1]
        %v1931 = vld [vmem:[%s192 + $0x12b] sm:$0x1]
        %v1932 = vld [vmem:[%s192 + $0x133] sm:$0x1]
        %v1933 = vld [vmem:[%s192 + $0x13b] sm:$0x1]
        %v1934 = vld [vmem:[%s192 + $0x143] sm:$0x1]
        %v1935 = vld [vmem:[%s192 + $0x14b] sm:$0x1]
        %v1936 = vld [vmem:[%s192 + $0x153] sm:$0x1]
        %v1937 = vld [vmem:[%s192 + $0x15b] sm:$0x1]
        %v1938 = vld [vmem:[%s192 + $0x163] sm:$0x1]
        %v1939 = vld [vmem:[%s192 + $0x16b] sm:$0x1]
        %v1940 = vld [vmem:[%s192 + $0x173] sm:$0x1]
        %v1941 = vld [vmem:[%s192 + $0x17b] sm:$0x1]
        %v1942 = vld [vmem:[%s192 + $0x183] sm:$0x1]
        %v1943 = vld [vmem:[%s192 + $0x18b] sm:$0x1]
        %v1944 = vld [vmem:[%s192 + $0x193] sm:$0x1]
        %v1945 = vld [vmem:[%s192 + $0x19b] sm:$0x1]
        %v1946 = vld [vmem:[%s192 + $0x1a3] sm:$0x1]
        %v1947 = vld [vmem:[%s192 + $0x1ab] sm:$0x1]
        %v1948 = vld [vmem:[%s192 + $0x1b3] sm:$0x1]
        %v1949 = vld [vmem:[%s192 + $0x1bb] sm:$0x1]
        %v1950 = vld [vmem:[%s192 + $0x1c3] sm:$0x1]
        %v1951 = vld [vmem:[%s192 + $0x1cb] sm:$0x1]
        %v1952 = vld [vmem:[%s192 + $0x1d3] sm:$0x1]
        %v1953 = vld [vmem:[%s192 + $0x1db] sm:$0x1]
        %v1954 = vld [vmem:[%s192 + $0x1e3] sm:$0x1]
        %v1955 = vld [vmem:[%s192 + $0x1eb] sm:$0x1]
        %v1956 = vld [vmem:[%s192 + $0x1f3] sm:$0x1]
        %v1957 = vld [vmem:[%s192 + $0x1fb] sm:$0x1]
        %v2022 = vrot.slane %v1895, 7
        %v2023 = vsel %vm384, %v2022, %v1894
        %v2024 = vrot.slane %v1896, 6
        %v2025 = vsel %vm387, %v2024, %v2023
        %v2026 = vrot.slane %v1897, 5
        %v2027 = vsel %vm390, %v2026, %v2025
        %v2028 = vrot.slane %v1898, 4
        %v2029 = vsel %vm393, %v2028, %v2027
        %v2030 = vrot.slane %v1899, 3
        %v2031 = vsel %vm396, %v2030, %v2029
        %v2032 = vrot.slane %v1900, 2
        %v2033 = vsel %vm399, %v2032, %v2031
        %v2034 = vrot.slane %v1901, 1
        %v2035 = vsel %vm402, %v2034, %v2033
        %v2036 = vrot.slane %v1903, 7
        %v2037 = vsel %vm384, %v2036, %v1902
        %v2038 = vrot.slane %v1904, 6
        %v2039 = vsel %vm387, %v2038, %v2037
        %v2040 = vrot.slane %v1905, 5
        %v2041 = vsel %vm390, %v2040, %v2039
        %v2042 = vrot.slane %v1906, 4
        %v2043 = vsel %vm393, %v2042, %v2041
        %v2044 = vrot.slane %v1907, 3
        %v2045 = vsel %vm396, %v2044, %v2043
        %v2046 = vrot.slane %v1908, 2
        %v2047 = vsel %vm399, %v2046, %v2045
        %v2048 = vrot.slane %v1909, 1
        %v2049 = vsel %vm402, %v2048, %v2047
        %v2050 = vrot.slane %v1911, 7
        %v2051 = vsel %vm384, %v2050, %v1910
        %v2052 = vrot.slane %v1912, 6
        %v2053 = vsel %vm387, %v2052, %v2051
        %v2054 = vrot.slane %v1913, 5
        %v2055 = vsel %vm390, %v2054, %v2053
        %v2056 = vrot.slane %v1914, 4
        %v2057 = vsel %vm393, %v2056, %v2055
        %v2058 = vrot.slane %v1915, 3
        %v2059 = vsel %vm396, %v2058, %v2057
        %v2060 = vrot.slane %v1916, 2
        %v2061 = vsel %vm399, %v2060, %v2059
        %v2062 = vrot.slane %v1917, 1
        %v2063 = vsel %vm402, %v2062, %v2061
        %v2064 = vrot.slane %v1919, 7
        %v2065 = vsel %vm384, %v2064, %v1918
        %v2066 = vrot.slane %v1920, 6
        %v2067 = vsel %vm387, %v2066, %v2065
        %v2068 = vrot.slane %v1921, 5
        %v2069 = vsel %vm390, %v2068, %v2067
        %v2070 = vrot.slane %v1922, 4
        %v2071 = vsel %vm393, %v2070, %v2069
        %v2072 = vrot.slane %v1923, 3
        %v2073 = vsel %vm396, %v2072, %v2071
        %v2074 = vrot.slane %v1924, 2
        %v2075 = vsel %vm399, %v2074, %v2073
        %v2076 = vrot.slane %v1925, 1
        %v2077 = vsel %vm402, %v2076, %v2075
        %v2078 = vrot.slane %v1927, 7
        %v2079 = vsel %vm384, %v2078, %v1926
        %v2080 = vrot.slane %v1928, 6
        %v2081 = vsel %vm387, %v2080, %v2079
        %v2082 = vrot.slane %v1929, 5
        %v2083 = vsel %vm390, %v2082, %v2081
        %v2084 = vrot.slane %v1930, 4
        %v2085 = vsel %vm393, %v2084, %v2083
        %v2086 = vrot.slane %v1931, 3
        %v2087 = vsel %vm396, %v2086, %v2085
        %v2088 = vrot.slane %v1932, 2
        %v2089 = vsel %vm399, %v2088, %v2087
        %v2090 = vrot.slane %v1933, 1
        %v2091 = vsel %vm402, %v2090, %v2089
        %v2092 = vrot.slane %v1935, 7
        %v2093 = vsel %vm384, %v2092, %v1934
        %v2094 = vrot.slane %v1936, 6
        %v2095 = vsel %vm387, %v2094, %v2093
        %v2096 = vrot.slane %v1937, 5
        %v2097 = vsel %vm390, %v2096, %v2095
        %v2098 = vrot.slane %v1938, 4
        %v2099 = vsel %vm393, %v2098, %v2097
        %v2100 = vrot.slane %v1939, 3
        %v2101 = vsel %vm396, %v2100, %v2099
        %v2102 = vrot.slane %v1940, 2
        %v2103 = vsel %vm399, %v2102, %v2101
        %v2104 = vrot.slane %v1941, 1
        %v2105 = vsel %vm402, %v2104, %v2103
        %v2106 = vrot.slane %v1943, 7
        %v2107 = vsel %vm384, %v2106, %v1942
        %v2108 = vrot.slane %v1944, 6
        %v2109 = vsel %vm387, %v2108, %v2107
        %v2110 = vrot.slane %v1945, 5
        %v2111 = vsel %vm390, %v2110, %v2109
        %v2112 = vrot.slane %v1946, 4
        %v2113 = vsel %vm393, %v2112, %v2111
        %v2114 = vrot.slane %v1947, 3
        %v2115 = vsel %vm396, %v2114, %v2113
        %v2116 = vrot.slane %v1948, 2
        %v2117 = vsel %vm399, %v2116, %v2115
        %v2118 = vrot.slane %v1949, 1
        %v2119 = vsel %vm402, %v2118, %v2117
        %v2120 = vrot.slane %v1951, 7
        %v2121 = vsel %vm384, %v2120, %v1950
        %v2122 = vrot.slane %v1952, 6
        %v2123 = vsel %vm387, %v2122, %v2121
        %v2124 = vrot.slane %v1953, 5
        %v2125 = vsel %vm390, %v2124, %v2123
        %v2126 = vrot.slane %v1954, 4
        %v2127 = vsel %vm393, %v2126, %v2125
        %v2128 = vrot.slane %v1955, 3
        %v2129 = vsel %vm396, %v2128, %v2127
        %v2130 = vrot.slane %v1956, 2
        %v2131 = vsel %vm399, %v2130, %v2129
        %v2132 = vrot.slane %v1957, 1
        %v2133 = vsel %vm402, %v2132, %v2131
        %2142 = vadd.xlane.f32.xlu0 %v2035
        %v2143 = vpop.xlane.xlu0 %2142
        %2144 = vadd.xlane.f32.xlu0 %v2049
        %v2145 = vpop.xlane.xlu0 %2144
        %2146 = vadd.xlane.f32.xlu0 %v2063
        %v2147 = vpop.xlane.xlu0 %2146
        %2148 = vadd.xlane.f32.xlu0 %v2077
        %v2149 = vpop.xlane.xlu0 %2148
        %2150 = vadd.xlane.f32.xlu0 %v2091
        %v2151 = vpop.xlane.xlu0 %2150
        %2152 = vadd.xlane.f32.xlu0 %v2105
        %v2153 = vpop.xlane.xlu0 %2152
        %2154 = vadd.xlane.f32.xlu0 %v2119
        %v2155 = vpop.xlane.xlu0 %2154
        %2156 = vadd.xlane.f32.xlu0 %v2133
        %v2157 = vpop.xlane.xlu0 %2156
        %v2158 = vadd.f32 %v1614, %v2143
        %v2159 = vadd.f32 %v1615, %v2145
        %v2160 = vadd.f32 %v1616, %v2147
        %v2161 = vadd.f32 %v1617, %v2149
        %v2162 = vadd.f32 %v1618, %v2151
        %v2163 = vadd.f32 %v1619, %v2153
        %v2164 = vadd.f32 %v1620, %v2155
        %v2165 = vadd.f32 %v1621, %v2157
        %v2166 = vmul.f32 %v1894, %v1894
        %v2167 = vmul.f32 %v1895, %v1895
        %v2168 = vmul.f32 %v1896, %v1896
        %v2169 = vmul.f32 %v1897, %v1897
        %v2170 = vmul.f32 %v1898, %v1898
        %v2171 = vmul.f32 %v1899, %v1899
        %v2172 = vmul.f32 %v1900, %v1900
        %v2173 = vmul.f32 %v1901, %v1901
        %v2174 = vmul.f32 %v1902, %v1902
        %v2175 = vmul.f32 %v1903, %v1903
        %v2176 = vmul.f32 %v1904, %v1904
        %v2177 = vmul.f32 %v1905, %v1905
        %v2178 = vmul.f32 %v1906, %v1906
        %v2179 = vmul.f32 %v1907, %v1907
        %v2180 = vmul.f32 %v1908, %v1908
        %v2181 = vmul.f32 %v1909, %v1909
        %v2182 = vmul.f32 %v1910, %v1910
        %v2183 = vmul.f32 %v1911, %v1911
        %v2184 = vmul.f32 %v1912, %v1912
        %v2185 = vmul.f32 %v1913, %v1913
        %v2186 = vmul.f32 %v1914, %v1914
        %v2187 = vmul.f32 %v1915, %v1915
        %v2188 = vmul.f32 %v1916, %v1916
        %v2189 = vmul.f32 %v1917, %v1917
        %v2190 = vmul.f32 %v1918, %v1918
        %v2191 = vmul.f32 %v1919, %v1919
        %v2192 = vmul.f32 %v1920, %v1920
        %v2193 = vmul.f32 %v1921, %v1921
        %v2194 = vmul.f32 %v1922, %v1922
        %v2195 = vmul.f32 %v1923, %v1923
        %v2196 = vmul.f32 %v1924, %v1924
        %v2197 = vmul.f32 %v1925, %v1925
        %v2198 = vmul.f32 %v1926, %v1926
        %v2199 = vmul.f32 %v1927, %v1927
        %v2200 = vmul.f32 %v1928, %v1928
        %v2201 = vmul.f32 %v1929, %v1929
        %v2202 = vmul.f32 %v1930, %v1930
        %v2203 = vmul.f32 %v1931, %v1931
        %v2204 = vmul.f32 %v1932, %v1932
        %v2205 = vmul.f32 %v1933, %v1933
        %v2206 = vmul.f32 %v1934, %v1934
        %v2207 = vmul.f32 %v1935, %v1935
        %v2208 = vmul.f32 %v1936, %v1936
        %v2209 = vmul.f32 %v1937, %v1937
        %v2210 = vmul.f32 %v1938, %v1938
        %v2211 = vmul.f32 %v1939, %v1939
        %v2212 = vmul.f32 %v1940, %v1940
        %v2213 = vmul.f32 %v1941, %v1941
        %v2214 = vmul.f32 %v1942, %v1942
        %v2215 = vmul.f32 %v1943, %v1943
        %v2216 = vmul.f32 %v1944, %v1944
        %v2217 = vmul.f32 %v1945, %v1945
        %v2218 = vmul.f32 %v1946, %v1946
        %v2219 = vmul.f32 %v1947, %v1947
        %v2220 = vmul.f32 %v1948, %v1948
        %v2221 = vmul.f32 %v1949, %v1949
        %v2222 = vmul.f32 %v1950, %v1950
        %v2223 = vmul.f32 %v1951, %v1951
        %v2224 = vmul.f32 %v1952, %v1952
        %v2225 = vmul.f32 %v1953, %v1953
        %v2226 = vmul.f32 %v1954, %v1954
        %v2227 = vmul.f32 %v1955, %v1955
        %v2228 = vmul.f32 %v1956, %v1956
        %v2229 = vmul.f32 %v1957, %v1957
        %v2294 = vrot.slane %v2167, 7
        %v2295 = vsel %vm384, %v2294, %v2166
        %v2296 = vrot.slane %v2168, 6
        %v2297 = vsel %vm387, %v2296, %v2295
        %v2298 = vrot.slane %v2169, 5
        %v2299 = vsel %vm390, %v2298, %v2297
        %v2300 = vrot.slane %v2170, 4
        %v2301 = vsel %vm393, %v2300, %v2299
        %v2302 = vrot.slane %v2171, 3
        %v2303 = vsel %vm396, %v2302, %v2301
        %v2304 = vrot.slane %v2172, 2
        %v2305 = vsel %vm399, %v2304, %v2303
        %v2306 = vrot.slane %v2173, 1
        %v2307 = vsel %vm402, %v2306, %v2305
        %v2308 = vrot.slane %v2175, 7
        %v2309 = vsel %vm384, %v2308, %v2174
        %v2310 = vrot.slane %v2176, 6
        %v2311 = vsel %vm387, %v2310, %v2309
        %v2312 = vrot.slane %v2177, 5
        %v2313 = vsel %vm390, %v2312, %v2311
        %v2314 = vrot.slane %v2178, 4
        %v2315 = vsel %vm393, %v2314, %v2313
        %v2316 = vrot.slane %v2179, 3
        %v2317 = vsel %vm396, %v2316, %v2315
        %v2318 = vrot.slane %v2180, 2
        %v2319 = vsel %vm399, %v2318, %v2317
        %v2320 = vrot.slane %v2181, 1
        %v2321 = vsel %vm402, %v2320, %v2319
        %v2322 = vrot.slane %v2183, 7
        %v2323 = vsel %vm384, %v2322, %v2182
        %v2324 = vrot.slane %v2184, 6
        %v2325 = vsel %vm387, %v2324, %v2323
        %v2326 = vrot.slane %v2185, 5
        %v2327 = vsel %vm390, %v2326, %v2325
        %v2328 = vrot.slane %v2186, 4
        %v2329 = vsel %vm393, %v2328, %v2327
        %v2330 = vrot.slane %v2187, 3
        %v2331 = vsel %vm396, %v2330, %v2329
        %v2332 = vrot.slane %v2188, 2
        %v2333 = vsel %vm399, %v2332, %v2331
        %v2334 = vrot.slane %v2189, 1
        %v2335 = vsel %vm402, %v2334, %v2333
        %v2336 = vrot.slane %v2191, 7
        %v2337 = vsel %vm384, %v2336, %v2190
        %v2338 = vrot.slane %v2192, 6
        %v2339 = vsel %vm387, %v2338, %v2337
        %v2340 = vrot.slane %v2193, 5
        %v2341 = vsel %vm390, %v2340, %v2339
        %v2342 = vrot.slane %v2194, 4
        %v2343 = vsel %vm393, %v2342, %v2341
        %v2344 = vrot.slane %v2195, 3
        %v2345 = vsel %vm396, %v2344, %v2343
        %v2346 = vrot.slane %v2196, 2
        %v2347 = vsel %vm399, %v2346, %v2345
        %v2348 = vrot.slane %v2197, 1
        %v2349 = vsel %vm402, %v2348, %v2347
        %v2350 = vrot.slane %v2199, 7
        %v2351 = vsel %vm384, %v2350, %v2198
        %v2352 = vrot.slane %v2200, 6
        %v2353 = vsel %vm387, %v2352, %v2351
        %v2354 = vrot.slane %v2201, 5
        %v2355 = vsel %vm390, %v2354, %v2353
        %v2356 = vrot.slane %v2202, 4
        %v2357 = vsel %vm393, %v2356, %v2355
        %v2358 = vrot.slane %v2203, 3
        %v2359 = vsel %vm396, %v2358, %v2357
        %v2360 = vrot.slane %v2204, 2
        %v2361 = vsel %vm399, %v2360, %v2359
        %v2362 = vrot.slane %v2205, 1
        %v2363 = vsel %vm402, %v2362, %v2361
        %v2364 = vrot.slane %v2207, 7
        %v2365 = vsel %vm384, %v2364, %v2206
        %v2366 = vrot.slane %v2208, 6
        %v2367 = vsel %vm387, %v2366, %v2365
        %v2368 = vrot.slane %v2209, 5
        %v2369 = vsel %vm390, %v2368, %v2367
        %v2370 = vrot.slane %v2210, 4
        %v2371 = vsel %vm393, %v2370, %v2369
        %v2372 = vrot.slane %v2211, 3
        %v2373 = vsel %vm396, %v2372, %v2371
        %v2374 = vrot.slane %v2212, 2
        %v2375 = vsel %vm399, %v2374, %v2373
        %v2376 = vrot.slane %v2213, 1
        %v2377 = vsel %vm402, %v2376, %v2375
        %v2378 = vrot.slane %v2215, 7
        %v2379 = vsel %vm384, %v2378, %v2214
        %v2380 = vrot.slane %v2216, 6
        %v2381 = vsel %vm387, %v2380, %v2379
        %v2382 = vrot.slane %v2217, 5
        %v2383 = vsel %vm390, %v2382, %v2381
        %v2384 = vrot.slane %v2218, 4
        %v2385 = vsel %vm393, %v2384, %v2383
        %v2386 = vrot.slane %v2219, 3
        %v2387 = vsel %vm396, %v2386, %v2385
        %v2388 = vrot.slane %v2220, 2
        %v2389 = vsel %vm399, %v2388, %v2387
        %v2390 = vrot.slane %v2221, 1
        %v2391 = vsel %vm402, %v2390, %v2389
        %v2392 = vrot.slane %v2223, 7
        %v2393 = vsel %vm384, %v2392, %v2222
        %v2394 = vrot.slane %v2224, 6
        %v2395 = vsel %vm387, %v2394, %v2393
        %v2396 = vrot.slane %v2225, 5
        %v2397 = vsel %vm390, %v2396, %v2395
        %v2398 = vrot.slane %v2226, 4
        %v2399 = vsel %vm393, %v2398, %v2397
        %v2400 = vrot.slane %v2227, 3
        %v2401 = vsel %vm396, %v2400, %v2399
        %v2402 = vrot.slane %v2228, 2
        %v2403 = vsel %vm399, %v2402, %v2401
        %v2404 = vrot.slane %v2229, 1
        %v2405 = vsel %vm402, %v2404, %v2403
        %2414 = vadd.xlane.f32.xlu0 %v2307
        %v2415 = vpop.xlane.xlu0 %2414
        %2416 = vadd.xlane.f32.xlu0 %v2321
        %v2417 = vpop.xlane.xlu0 %2416
        %2418 = vadd.xlane.f32.xlu0 %v2335
        %v2419 = vpop.xlane.xlu0 %2418
        %2420 = vadd.xlane.f32.xlu0 %v2349
        %v2421 = vpop.xlane.xlu0 %2420
        %2422 = vadd.xlane.f32.xlu0 %v2363
        %v2423 = vpop.xlane.xlu0 %2422
        %2424 = vadd.xlane.f32.xlu0 %v2377
        %v2425 = vpop.xlane.xlu0 %2424
        %2426 = vadd.xlane.f32.xlu0 %v2391
        %v2427 = vpop.xlane.xlu0 %2426
        %2428 = vadd.xlane.f32.xlu0 %v2405
        %v2429 = vpop.xlane.xlu0 %2428
        %v2430 = vadd.f32 %v1886, %v2415
        %v2431 = vadd.f32 %v1887, %v2417
        %v2432 = vadd.f32 %v1888, %v2419
        %v2433 = vadd.f32 %v1889, %v2421
        %v2434 = vadd.f32 %v1890, %v2423
        %v2435 = vadd.f32 %v1891, %v2425
        %v2436 = vadd.f32 %v1892, %v2427
        %v2437 = vadd.f32 %v1893, %v2429
        %v2438 = vld [vmem:[%s192 + $0x4] sm:$0x1]
        %v2439 = vld [vmem:[%s192 + $0xc] sm:$0x1]
        %v2440 = vld [vmem:[%s192 + $0x14] sm:$0x1]
        %v2441 = vld [vmem:[%s192 + $0x1c] sm:$0x1]
        %v2442 = vld [vmem:[%s192 + $0x24] sm:$0x1]
        %v2443 = vld [vmem:[%s192 + $0x2c] sm:$0x1]
        %v2444 = vld [vmem:[%s192 + $0x34] sm:$0x1]
        %v2445 = vld [vmem:[%s192 + $0x3c] sm:$0x1]
        %v2446 = vld [vmem:[%s192 + $0x44] sm:$0x1]
        %v2447 = vld [vmem:[%s192 + $0x4c] sm:$0x1]
        %v2448 = vld [vmem:[%s192 + $0x54] sm:$0x1]
        %v2449 = vld [vmem:[%s192 + $0x5c] sm:$0x1]
        %v2450 = vld [vmem:[%s192 + $0x64] sm:$0x1]
        %v2451 = vld [vmem:[%s192 + $0x6c] sm:$0x1]
        %v2452 = vld [vmem:[%s192 + $0x74] sm:$0x1]
        %v2453 = vld [vmem:[%s192 + $0x7c] sm:$0x1]
        %v2454 = vld [vmem:[%s192 + $0x84] sm:$0x1]
        %v2455 = vld [vmem:[%s192 + $0x8c] sm:$0x1]
        %v2456 = vld [vmem:[%s192 + $0x94] sm:$0x1]
        %v2457 = vld [vmem:[%s192 + $0x9c] sm:$0x1]
        %v2458 = vld [vmem:[%s192 + $0xa4] sm:$0x1]
        %v2459 = vld [vmem:[%s192 + $0xac] sm:$0x1]
        %v2460 = vld [vmem:[%s192 + $0xb4] sm:$0x1]
        %v2461 = vld [vmem:[%s192 + $0xbc] sm:$0x1]
        %v2462 = vld [vmem:[%s192 + $0xc4] sm:$0x1]
        %v2463 = vld [vmem:[%s192 + $0xcc] sm:$0x1]
        %v2464 = vld [vmem:[%s192 + $0xd4] sm:$0x1]
        %v2465 = vld [vmem:[%s192 + $0xdc] sm:$0x1]
        %v2466 = vld [vmem:[%s192 + $0xe4] sm:$0x1]
        %v2467 = vld [vmem:[%s192 + $0xec] sm:$0x1]
        %v2468 = vld [vmem:[%s192 + $0xf4] sm:$0x1]
        %v2469 = vld [vmem:[%s192 + $0xfc] sm:$0x1]
        %v2470 = vld [vmem:[%s192 + $0x104] sm:$0x1]
        %v2471 = vld [vmem:[%s192 + $0x10c] sm:$0x1]
        %v2472 = vld [vmem:[%s192 + $0x114] sm:$0x1]
        %v2473 = vld [vmem:[%s192 + $0x11c] sm:$0x1]
        %v2474 = vld [vmem:[%s192 + $0x124] sm:$0x1]
        %v2475 = vld [vmem:[%s192 + $0x12c] sm:$0x1]
        %v2476 = vld [vmem:[%s192 + $0x134] sm:$0x1]
        %v2477 = vld [vmem:[%s192 + $0x13c] sm:$0x1]
        %v2478 = vld [vmem:[%s192 + $0x144] sm:$0x1]
        %v2479 = vld [vmem:[%s192 + $0x14c] sm:$0x1]
        %v2480 = vld [vmem:[%s192 + $0x154] sm:$0x1]
        %v2481 = vld [vmem:[%s192 + $0x15c] sm:$0x1]
        %v2482 = vld [vmem:[%s192 + $0x164] sm:$0x1]
        %v2483 = vld [vmem:[%s192 + $0x16c] sm:$0x1]
        %v2484 = vld [vmem:[%s192 + $0x174] sm:$0x1]
        %v2485 = vld [vmem:[%s192 + $0x17c] sm:$0x1]
        %v2486 = vld [vmem:[%s192 + $0x184] sm:$0x1]
        %v2487 = vld [vmem:[%s192 + $0x18c] sm:$0x1]
        %v2488 = vld [vmem:[%s192 + $0x194] sm:$0x1]
        %v2489 = vld [vmem:[%s192 + $0x19c] sm:$0x1]
        %v2490 = vld [vmem:[%s192 + $0x1a4] sm:$0x1]
        %v2491 = vld [vmem:[%s192 + $0x1ac] sm:$0x1]
        %v2492 = vld [vmem:[%s192 + $0x1b4] sm:$0x1]
        %v2493 = vld [vmem:[%s192 + $0x1bc] sm:$0x1]
        %v2494 = vld [vmem:[%s192 + $0x1c4] sm:$0x1]
        %v2495 = vld [vmem:[%s192 + $0x1cc] sm:$0x1]
        %v2496 = vld [vmem:[%s192 + $0x1d4] sm:$0x1]
        %v2497 = vld [vmem:[%s192 + $0x1dc] sm:$0x1]
        %v2498 = vld [vmem:[%s192 + $0x1e4] sm:$0x1]
        %v2499 = vld [vmem:[%s192 + $0x1ec] sm:$0x1]
        %v2500 = vld [vmem:[%s192 + $0x1f4] sm:$0x1]
        %v2501 = vld [vmem:[%s192 + $0x1fc] sm:$0x1]
        %v2566 = vrot.slane %v2439, 7
        %v2567 = vsel %vm384, %v2566, %v2438
        %v2568 = vrot.slane %v2440, 6
        %v2569 = vsel %vm387, %v2568, %v2567
        %v2570 = vrot.slane %v2441, 5
        %v2571 = vsel %vm390, %v2570, %v2569
        %v2572 = vrot.slane %v2442, 4
        %v2573 = vsel %vm393, %v2572, %v2571
        %v2574 = vrot.slane %v2443, 3
        %v2575 = vsel %vm396, %v2574, %v2573
        %v2576 = vrot.slane %v2444, 2
        %v2577 = vsel %vm399, %v2576, %v2575
        %v2578 = vrot.slane %v2445, 1
        %v2579 = vsel %vm402, %v2578, %v2577
        %v2580 = vrot.slane %v2447, 7
        %v2581 = vsel %vm384, %v2580, %v2446
        %v2582 = vrot.slane %v2448, 6
        %v2583 = vsel %vm387, %v2582, %v2581
        %v2584 = vrot.slane %v2449, 5
        %v2585 = vsel %vm390, %v2584, %v2583
        %v2586 = vrot.slane %v2450, 4
        %v2587 = vsel %vm393, %v2586, %v2585
        %v2588 = vrot.slane %v2451, 3
        %v2589 = vsel %vm396, %v2588, %v2587
        %v2590 = vrot.slane %v2452, 2
        %v2591 = vsel %vm399, %v2590, %v2589
        %v2592 = vrot.slane %v2453, 1
        %v2593 = vsel %vm402, %v2592, %v2591
        %v2594 = vrot.slane %v2455, 7
        %v2595 = vsel %vm384, %v2594, %v2454
        %v2596 = vrot.slane %v2456, 6
        %v2597 = vsel %vm387, %v2596, %v2595
        %v2598 = vrot.slane %v2457, 5
        %v2599 = vsel %vm390, %v2598, %v2597
        %v2600 = vrot.slane %v2458, 4
        %v2601 = vsel %vm393, %v2600, %v2599
        %v2602 = vrot.slane %v2459, 3
        %v2603 = vsel %vm396, %v2602, %v2601
        %v2604 = vrot.slane %v2460, 2
        %v2605 = vsel %vm399, %v2604, %v2603
        %v2606 = vrot.slane %v2461, 1
        %v2607 = vsel %vm402, %v2606, %v2605
        %v2608 = vrot.slane %v2463, 7
        %v2609 = vsel %vm384, %v2608, %v2462
        %v2610 = vrot.slane %v2464, 6
        %v2611 = vsel %vm387, %v2610, %v2609
        %v2612 = vrot.slane %v2465, 5
        %v2613 = vsel %vm390, %v2612, %v2611
        %v2614 = vrot.slane %v2466, 4
        %v2615 = vsel %vm393, %v2614, %v2613
        %v2616 = vrot.slane %v2467, 3
        %v2617 = vsel %vm396, %v2616, %v2615
        %v2618 = vrot.slane %v2468, 2
        %v2619 = vsel %vm399, %v2618, %v2617
        %v2620 = vrot.slane %v2469, 1
        %v2621 = vsel %vm402, %v2620, %v2619
        %v2622 = vrot.slane %v2471, 7
        %v2623 = vsel %vm384, %v2622, %v2470
        %v2624 = vrot.slane %v2472, 6
        %v2625 = vsel %vm387, %v2624, %v2623
        %v2626 = vrot.slane %v2473, 5
        %v2627 = vsel %vm390, %v2626, %v2625
        %v2628 = vrot.slane %v2474, 4
        %v2629 = vsel %vm393, %v2628, %v2627
        %v2630 = vrot.slane %v2475, 3
        %v2631 = vsel %vm396, %v2630, %v2629
        %v2632 = vrot.slane %v2476, 2
        %v2633 = vsel %vm399, %v2632, %v2631
        %v2634 = vrot.slane %v2477, 1
        %v2635 = vsel %vm402, %v2634, %v2633
        %v2636 = vrot.slane %v2479, 7
        %v2637 = vsel %vm384, %v2636, %v2478
        %v2638 = vrot.slane %v2480, 6
        %v2639 = vsel %vm387, %v2638, %v2637
        %v2640 = vrot.slane %v2481, 5
        %v2641 = vsel %vm390, %v2640, %v2639
        %v2642 = vrot.slane %v2482, 4
        %v2643 = vsel %vm393, %v2642, %v2641
        %v2644 = vrot.slane %v2483, 3
        %v2645 = vsel %vm396, %v2644, %v2643
        %v2646 = vrot.slane %v2484, 2
        %v2647 = vsel %vm399, %v2646, %v2645
        %v2648 = vrot.slane %v2485, 1
        %v2649 = vsel %vm402, %v2648, %v2647
        %v2650 = vrot.slane %v2487, 7
        %v2651 = vsel %vm384, %v2650, %v2486
        %v2652 = vrot.slane %v2488, 6
        %v2653 = vsel %vm387, %v2652, %v2651
        %v2654 = vrot.slane %v2489, 5
        %v2655 = vsel %vm390, %v2654, %v2653
        %v2656 = vrot.slane %v2490, 4
        %v2657 = vsel %vm393, %v2656, %v2655
        %v2658 = vrot.slane %v2491, 3
        %v2659 = vsel %vm396, %v2658, %v2657
        %v2660 = vrot.slane %v2492, 2
        %v2661 = vsel %vm399, %v2660, %v2659
        %v2662 = vrot.slane %v2493, 1
        %v2663 = vsel %vm402, %v2662, %v2661
        %v2664 = vrot.slane %v2495, 7
        %v2665 = vsel %vm384, %v2664, %v2494
        %v2666 = vrot.slane %v2496, 6
        %v2667 = vsel %vm387, %v2666, %v2665
        %v2668 = vrot.slane %v2497, 5
        %v2669 = vsel %vm390, %v2668, %v2667
        %v2670 = vrot.slane %v2498, 4
        %v2671 = vsel %vm393, %v2670, %v2669
        %v2672 = vrot.slane %v2499, 3
        %v2673 = vsel %vm396, %v2672, %v2671
        %v2674 = vrot.slane %v2500, 2
        %v2675 = vsel %vm399, %v2674, %v2673
        %v2676 = vrot.slane %v2501, 1
        %v2677 = vsel %vm402, %v2676, %v2675
        %2686 = vadd.xlane.f32.xlu0 %v2579
        %v2687 = vpop.xlane.xlu0 %2686
        %2688 = vadd.xlane.f32.xlu0 %v2593
        %v2689 = vpop.xlane.xlu0 %2688
        %2690 = vadd.xlane.f32.xlu0 %v2607
        %v2691 = vpop.xlane.xlu0 %2690
        %2692 = vadd.xlane.f32.xlu0 %v2621
        %v2693 = vpop.xlane.xlu0 %2692
        %2694 = vadd.xlane.f32.xlu0 %v2635
        %v2695 = vpop.xlane.xlu0 %2694
        %2696 = vadd.xlane.f32.xlu0 %v2649
        %v2697 = vpop.xlane.xlu0 %2696
        %2698 = vadd.xlane.f32.xlu0 %v2663
        %v2699 = vpop.xlane.xlu0 %2698
        %2700 = vadd.xlane.f32.xlu0 %v2677
        %v2701 = vpop.xlane.xlu0 %2700
        %v2702 = vadd.f32 %v2158, %v2687
        %v2703 = vadd.f32 %v2159, %v2689
        %v2704 = vadd.f32 %v2160, %v2691
        %v2705 = vadd.f32 %v2161, %v2693
        %v2706 = vadd.f32 %v2162, %v2695
        %v2707 = vadd.f32 %v2163, %v2697
        %v2708 = vadd.f32 %v2164, %v2699
        %v2709 = vadd.f32 %v2165, %v2701
        %v2710 = vmul.f32 %v2438, %v2438
        %v2711 = vmul.f32 %v2439, %v2439
        %v2712 = vmul.f32 %v2440, %v2440
        %v2713 = vmul.f32 %v2441, %v2441
        %v2714 = vmul.f32 %v2442, %v2442
        %v2715 = vmul.f32 %v2443, %v2443
        %v2716 = vmul.f32 %v2444, %v2444
        %v2717 = vmul.f32 %v2445, %v2445
        %v2718 = vmul.f32 %v2446, %v2446
        %v2719 = vmul.f32 %v2447, %v2447
        %v2720 = vmul.f32 %v2448, %v2448
        %v2721 = vmul.f32 %v2449, %v2449
        %v2722 = vmul.f32 %v2450, %v2450
        %v2723 = vmul.f32 %v2451, %v2451
        %v2724 = vmul.f32 %v2452, %v2452
        %v2725 = vmul.f32 %v2453, %v2453
        %v2726 = vmul.f32 %v2454, %v2454
        %v2727 = vmul.f32 %v2455, %v2455
        %v2728 = vmul.f32 %v2456, %v2456
        %v2729 = vmul.f32 %v2457, %v2457
        %v2730 = vmul.f32 %v2458, %v2458
        %v2731 = vmul.f32 %v2459, %v2459
        %v2732 = vmul.f32 %v2460, %v2460
        %v2733 = vmul.f32 %v2461, %v2461
        %v2734 = vmul.f32 %v2462, %v2462
        %v2735 = vmul.f32 %v2463, %v2463
        %v2736 = vmul.f32 %v2464, %v2464
        %v2737 = vmul.f32 %v2465, %v2465
        %v2738 = vmul.f32 %v2466, %v2466
        %v2739 = vmul.f32 %v2467, %v2467
        %v2740 = vmul.f32 %v2468, %v2468
        %v2741 = vmul.f32 %v2469, %v2469
        %v2742 = vmul.f32 %v2470, %v2470
        %v2743 = vmul.f32 %v2471, %v2471
        %v2744 = vmul.f32 %v2472, %v2472
        %v2745 = vmul.f32 %v2473, %v2473
        %v2746 = vmul.f32 %v2474, %v2474
        %v2747 = vmul.f32 %v2475, %v2475
        %v2748 = vmul.f32 %v2476, %v2476
        %v2749 = vmul.f32 %v2477, %v2477
        %v2750 = vmul.f32 %v2478, %v2478
        %v2751 = vmul.f32 %v2479, %v2479
        %v2752 = vmul.f32 %v2480, %v2480
        %v2753 = vmul.f32 %v2481, %v2481
        %v2754 = vmul.f32 %v2482, %v2482
        %v2755 = vmul.f32 %v2483, %v2483
        %v2756 = vmul.f32 %v2484, %v2484
        %v2757 = vmul.f32 %v2485, %v2485
        %v2758 = vmul.f32 %v2486, %v2486
        %v2759 = vmul.f32 %v2487, %v2487
        %v2760 = vmul.f32 %v2488, %v2488
        %v2761 = vmul.f32 %v2489, %v2489
        %v2762 = vmul.f32 %v2490, %v2490
        %v2763 = vmul.f32 %v2491, %v2491
        %v2764 = vmul.f32 %v2492, %v2492
        %v2765 = vmul.f32 %v2493, %v2493
        %v2766 = vmul.f32 %v2494, %v2494
        %v2767 = vmul.f32 %v2495, %v2495
        %v2768 = vmul.f32 %v2496, %v2496
        %v2769 = vmul.f32 %v2497, %v2497
        %v2770 = vmul.f32 %v2498, %v2498
        %v2771 = vmul.f32 %v2499, %v2499
        %v2772 = vmul.f32 %v2500, %v2500
        %v2773 = vmul.f32 %v2501, %v2501
        %v2838 = vrot.slane %v2711, 7
        %v2839 = vsel %vm384, %v2838, %v2710
        %v2840 = vrot.slane %v2712, 6
        %v2841 = vsel %vm387, %v2840, %v2839
        %v2842 = vrot.slane %v2713, 5
        %v2843 = vsel %vm390, %v2842, %v2841
        %v2844 = vrot.slane %v2714, 4
        %v2845 = vsel %vm393, %v2844, %v2843
        %v2846 = vrot.slane %v2715, 3
        %v2847 = vsel %vm396, %v2846, %v2845
        %v2848 = vrot.slane %v2716, 2
        %v2849 = vsel %vm399, %v2848, %v2847
        %v2850 = vrot.slane %v2717, 1
        %v2851 = vsel %vm402, %v2850, %v2849
        %v2852 = vrot.slane %v2719, 7
        %v2853 = vsel %vm384, %v2852, %v2718
        %v2854 = vrot.slane %v2720, 6
        %v2855 = vsel %vm387, %v2854, %v2853
        %v2856 = vrot.slane %v2721, 5
        %v2857 = vsel %vm390, %v2856, %v2855
        %v2858 = vrot.slane %v2722, 4
        %v2859 = vsel %vm393, %v2858, %v2857
        %v2860 = vrot.slane %v2723, 3
        %v2861 = vsel %vm396, %v2860, %v2859
        %v2862 = vrot.slane %v2724, 2
        %v2863 = vsel %vm399, %v2862, %v2861
        %v2864 = vrot.slane %v2725, 1
        %v2865 = vsel %vm402, %v2864, %v2863
        %v2866 = vrot.slane %v2727, 7
        %v2867 = vsel %vm384, %v2866, %v2726
        %v2868 = vrot.slane %v2728, 6
        %v2869 = vsel %vm387, %v2868, %v2867
        %v2870 = vrot.slane %v2729, 5
        %v2871 = vsel %vm390, %v2870, %v2869
        %v2872 = vrot.slane %v2730, 4
        %v2873 = vsel %vm393, %v2872, %v2871
        %v2874 = vrot.slane %v2731, 3
        %v2875 = vsel %vm396, %v2874, %v2873
        %v2876 = vrot.slane %v2732, 2
        %v2877 = vsel %vm399, %v2876, %v2875
        %v2878 = vrot.slane %v2733, 1
        %v2879 = vsel %vm402, %v2878, %v2877
        %v2880 = vrot.slane %v2735, 7
        %v2881 = vsel %vm384, %v2880, %v2734
        %v2882 = vrot.slane %v2736, 6
        %v2883 = vsel %vm387, %v2882, %v2881
        %v2884 = vrot.slane %v2737, 5
        %v2885 = vsel %vm390, %v2884, %v2883
        %v2886 = vrot.slane %v2738, 4
        %v2887 = vsel %vm393, %v2886, %v2885
        %v2888 = vrot.slane %v2739, 3
        %v2889 = vsel %vm396, %v2888, %v2887
        %v2890 = vrot.slane %v2740, 2
        %v2891 = vsel %vm399, %v2890, %v2889
        %v2892 = vrot.slane %v2741, 1
        %v2893 = vsel %vm402, %v2892, %v2891
        %v2894 = vrot.slane %v2743, 7
        %v2895 = vsel %vm384, %v2894, %v2742
        %v2896 = vrot.slane %v2744, 6
        %v2897 = vsel %vm387, %v2896, %v2895
        %v2898 = vrot.slane %v2745, 5
        %v2899 = vsel %vm390, %v2898, %v2897
        %v2900 = vrot.slane %v2746, 4
        %v2901 = vsel %vm393, %v2900, %v2899
        %v2902 = vrot.slane %v2747, 3
        %v2903 = vsel %vm396, %v2902, %v2901
        %v2904 = vrot.slane %v2748, 2
        %v2905 = vsel %vm399, %v2904, %v2903
        %v2906 = vrot.slane %v2749, 1
        %v2907 = vsel %vm402, %v2906, %v2905
        %v2908 = vrot.slane %v2751, 7
        %v2909 = vsel %vm384, %v2908, %v2750
        %v2910 = vrot.slane %v2752, 6
        %v2911 = vsel %vm387, %v2910, %v2909
        %v2912 = vrot.slane %v2753, 5
        %v2913 = vsel %vm390, %v2912, %v2911
        %v2914 = vrot.slane %v2754, 4
        %v2915 = vsel %vm393, %v2914, %v2913
        %v2916 = vrot.slane %v2755, 3
        %v2917 = vsel %vm396, %v2916, %v2915
        %v2918 = vrot.slane %v2756, 2
        %v2919 = vsel %vm399, %v2918, %v2917
        %v2920 = vrot.slane %v2757, 1
        %v2921 = vsel %vm402, %v2920, %v2919
        %v2922 = vrot.slane %v2759, 7
        %v2923 = vsel %vm384, %v2922, %v2758
        %v2924 = vrot.slane %v2760, 6
        %v2925 = vsel %vm387, %v2924, %v2923
        %v2926 = vrot.slane %v2761, 5
        %v2927 = vsel %vm390, %v2926, %v2925
        %v2928 = vrot.slane %v2762, 4
        %v2929 = vsel %vm393, %v2928, %v2927
        %v2930 = vrot.slane %v2763, 3
        %v2931 = vsel %vm396, %v2930, %v2929
        %v2932 = vrot.slane %v2764, 2
        %v2933 = vsel %vm399, %v2932, %v2931
        %v2934 = vrot.slane %v2765, 1
        %v2935 = vsel %vm402, %v2934, %v2933
        %v2936 = vrot.slane %v2767, 7
        %v2937 = vsel %vm384, %v2936, %v2766
        %v2938 = vrot.slane %v2768, 6
        %v2939 = vsel %vm387, %v2938, %v2937
        %v2940 = vrot.slane %v2769, 5
        %v2941 = vsel %vm390, %v2940, %v2939
        %v2942 = vrot.slane %v2770, 4
        %v2943 = vsel %vm393, %v2942, %v2941
        %v2944 = vrot.slane %v2771, 3
        %v2945 = vsel %vm396, %v2944, %v2943
        %v2946 = vrot.slane %v2772, 2
        %v2947 = vsel %vm399, %v2946, %v2945
        %v2948 = vrot.slane %v2773, 1
        %v2949 = vsel %vm402, %v2948, %v2947
        %2958 = vadd.xlane.f32.xlu0 %v2851
        %v2959 = vpop.xlane.xlu0 %2958
        %2960 = vadd.xlane.f32.xlu0 %v2865
        %v2961 = vpop.xlane.xlu0 %2960
        %2962 = vadd.xlane.f32.xlu0 %v2879
        %v2963 = vpop.xlane.xlu0 %2962
        %2964 = vadd.xlane.f32.xlu0 %v2893
        %v2965 = vpop.xlane.xlu0 %2964
        %2966 = vadd.xlane.f32.xlu0 %v2907
        %v2967 = vpop.xlane.xlu0 %2966
        %2968 = vadd.xlane.f32.xlu0 %v2921
        %v2969 = vpop.xlane.xlu0 %2968
        %2970 = vadd.xlane.f32.xlu0 %v2935
        %v2971 = vpop.xlane.xlu0 %2970
        %2972 = vadd.xlane.f32.xlu0 %v2949
        %v2973 = vpop.xlane.xlu0 %2972
        %v2974 = vadd.f32 %v2430, %v2959
        %v2975 = vadd.f32 %v2431, %v2961
        %v2976 = vadd.f32 %v2432, %v2963
        %v2977 = vadd.f32 %v2433, %v2965
        %v2978 = vadd.f32 %v2434, %v2967
        %v2979 = vadd.f32 %v2435, %v2969
        %v2980 = vadd.f32 %v2436, %v2971
        %v2981 = vadd.f32 %v2437, %v2973
        %v2982 = vld [vmem:[%s192 + $0x5] sm:$0x1]
        %v2983 = vld [vmem:[%s192 + $0xd] sm:$0x1]
        %v2984 = vld [vmem:[%s192 + $0x15] sm:$0x1]
        %v2985 = vld [vmem:[%s192 + $0x1d] sm:$0x1]
        %v2986 = vld [vmem:[%s192 + $0x25] sm:$0x1]
        %v2987 = vld [vmem:[%s192 + $0x2d] sm:$0x1]
        %v2988 = vld [vmem:[%s192 + $0x35] sm:$0x1]
        %v2989 = vld [vmem:[%s192 + $0x3d] sm:$0x1]
        %v2990 = vld [vmem:[%s192 + $0x45] sm:$0x1]
        %v2991 = vld [vmem:[%s192 + $0x4d] sm:$0x1]
        %v2992 = vld [vmem:[%s192 + $0x55] sm:$0x1]
        %v2993 = vld [vmem:[%s192 + $0x5d] sm:$0x1]
        %v2994 = vld [vmem:[%s192 + $0x65] sm:$0x1]
        %v2995 = vld [vmem:[%s192 + $0x6d] sm:$0x1]
        %v2996 = vld [vmem:[%s192 + $0x75] sm:$0x1]
        %v2997 = vld [vmem:[%s192 + $0x7d] sm:$0x1]
        %v2998 = vld [vmem:[%s192 + $0x85] sm:$0x1]
        %v2999 = vld [vmem:[%s192 + $0x8d] sm:$0x1]
        %v3000 = vld [vmem:[%s192 + $0x95] sm:$0x1]
        %v3001 = vld [vmem:[%s192 + $0x9d] sm:$0x1]
        %v3002 = vld [vmem:[%s192 + $0xa5] sm:$0x1]
        %v3003 = vld [vmem:[%s192 + $0xad] sm:$0x1]
        %v3004 = vld [vmem:[%s192 + $0xb5] sm:$0x1]
        %v3005 = vld [vmem:[%s192 + $0xbd] sm:$0x1]
        %v3006 = vld [vmem:[%s192 + $0xc5] sm:$0x1]
        %v3007 = vld [vmem:[%s192 + $0xcd] sm:$0x1]
        %v3008 = vld [vmem:[%s192 + $0xd5] sm:$0x1]
        %v3009 = vld [vmem:[%s192 + $0xdd] sm:$0x1]
        %v3010 = vld [vmem:[%s192 + $0xe5] sm:$0x1]
        %v3011 = vld [vmem:[%s192 + $0xed] sm:$0x1]
        %v3012 = vld [vmem:[%s192 + $0xf5] sm:$0x1]
        %v3013 = vld [vmem:[%s192 + $0xfd] sm:$0x1]
        %v3014 = vld [vmem:[%s192 + $0x105] sm:$0x1]
        %v3015 = vld [vmem:[%s192 + $0x10d] sm:$0x1]
        %v3016 = vld [vmem:[%s192 + $0x115] sm:$0x1]
        %v3017 = vld [vmem:[%s192 + $0x11d] sm:$0x1]
        %v3018 = vld [vmem:[%s192 + $0x125] sm:$0x1]
        %v3019 = vld [vmem:[%s192 + $0x12d] sm:$0x1]
        %v3020 = vld [vmem:[%s192 + $0x135] sm:$0x1]
        %v3021 = vld [vmem:[%s192 + $0x13d] sm:$0x1]
        %v3022 = vld [vmem:[%s192 + $0x145] sm:$0x1]
        %v3023 = vld [vmem:[%s192 + $0x14d] sm:$0x1]
        %v3024 = vld [vmem:[%s192 + $0x155] sm:$0x1]
        %v3025 = vld [vmem:[%s192 + $0x15d] sm:$0x1]
        %v3026 = vld [vmem:[%s192 + $0x165] sm:$0x1]
        %v3027 = vld [vmem:[%s192 + $0x16d] sm:$0x1]
        %v3028 = vld [vmem:[%s192 + $0x175] sm:$0x1]
        %v3029 = vld [vmem:[%s192 + $0x17d] sm:$0x1]
        %v3030 = vld [vmem:[%s192 + $0x185] sm:$0x1]
        %v3031 = vld [vmem:[%s192 + $0x18d] sm:$0x1]
        %v3032 = vld [vmem:[%s192 + $0x195] sm:$0x1]
        %v3033 = vld [vmem:[%s192 + $0x19d] sm:$0x1]
        %v3034 = vld [vmem:[%s192 + $0x1a5] sm:$0x1]
        %v3035 = vld [vmem:[%s192 + $0x1ad] sm:$0x1]
        %v3036 = vld [vmem:[%s192 + $0x1b5] sm:$0x1]
        %v3037 = vld [vmem:[%s192 + $0x1bd] sm:$0x1]
        %v3038 = vld [vmem:[%s192 + $0x1c5] sm:$0x1]
        %v3039 = vld [vmem:[%s192 + $0x1cd] sm:$0x1]
        %v3040 = vld [vmem:[%s192 + $0x1d5] sm:$0x1]
        %v3041 = vld [vmem:[%s192 + $0x1dd] sm:$0x1]
        %v3042 = vld [vmem:[%s192 + $0x1e5] sm:$0x1]
        %v3043 = vld [vmem:[%s192 + $0x1ed] sm:$0x1]
        %v3044 = vld [vmem:[%s192 + $0x1f5] sm:$0x1]
        %v3045 = vld [vmem:[%s192 + $0x1fd] sm:$0x1]
        %v3110 = vrot.slane %v2983, 7
        %v3111 = vsel %vm384, %v3110, %v2982
        %v3112 = vrot.slane %v2984, 6
        %v3113 = vsel %vm387, %v3112, %v3111
        %v3114 = vrot.slane %v2985, 5
        %v3115 = vsel %vm390, %v3114, %v3113
        %v3116 = vrot.slane %v2986, 4
        %v3117 = vsel %vm393, %v3116, %v3115
        %v3118 = vrot.slane %v2987, 3
        %v3119 = vsel %vm396, %v3118, %v3117
        %v3120 = vrot.slane %v2988, 2
        %v3121 = vsel %vm399, %v3120, %v3119
        %v3122 = vrot.slane %v2989, 1
        %v3123 = vsel %vm402, %v3122, %v3121
        %v3124 = vrot.slane %v2991, 7
        %v3125 = vsel %vm384, %v3124, %v2990
        %v3126 = vrot.slane %v2992, 6
        %v3127 = vsel %vm387, %v3126, %v3125
        %v3128 = vrot.slane %v2993, 5
        %v3129 = vsel %vm390, %v3128, %v3127
        %v3130 = vrot.slane %v2994, 4
        %v3131 = vsel %vm393, %v3130, %v3129
        %v3132 = vrot.slane %v2995, 3
        %v3133 = vsel %vm396, %v3132, %v3131
        %v3134 = vrot.slane %v2996, 2
        %v3135 = vsel %vm399, %v3134, %v3133
        %v3136 = vrot.slane %v2997, 1
        %v3137 = vsel %vm402, %v3136, %v3135
        %v3138 = vrot.slane %v2999, 7
        %v3139 = vsel %vm384, %v3138, %v2998
        %v3140 = vrot.slane %v3000, 6
        %v3141 = vsel %vm387, %v3140, %v3139
        %v3142 = vrot.slane %v3001, 5
        %v3143 = vsel %vm390, %v3142, %v3141
        %v3144 = vrot.slane %v3002, 4
        %v3145 = vsel %vm393, %v3144, %v3143
        %v3146 = vrot.slane %v3003, 3
        %v3147 = vsel %vm396, %v3146, %v3145
        %v3148 = vrot.slane %v3004, 2
        %v3149 = vsel %vm399, %v3148, %v3147
        %v3150 = vrot.slane %v3005, 1
        %v3151 = vsel %vm402, %v3150, %v3149
        %v3152 = vrot.slane %v3007, 7
        %v3153 = vsel %vm384, %v3152, %v3006
        %v3154 = vrot.slane %v3008, 6
        %v3155 = vsel %vm387, %v3154, %v3153
        %v3156 = vrot.slane %v3009, 5
        %v3157 = vsel %vm390, %v3156, %v3155
        %v3158 = vrot.slane %v3010, 4
        %v3159 = vsel %vm393, %v3158, %v3157
        %v3160 = vrot.slane %v3011, 3
        %v3161 = vsel %vm396, %v3160, %v3159
        %v3162 = vrot.slane %v3012, 2
        %v3163 = vsel %vm399, %v3162, %v3161
        %v3164 = vrot.slane %v3013, 1
        %v3165 = vsel %vm402, %v3164, %v3163
        %v3166 = vrot.slane %v3015, 7
        %v3167 = vsel %vm384, %v3166, %v3014
        %v3168 = vrot.slane %v3016, 6
        %v3169 = vsel %vm387, %v3168, %v3167
        %v3170 = vrot.slane %v3017, 5
        %v3171 = vsel %vm390, %v3170, %v3169
        %v3172 = vrot.slane %v3018, 4
        %v3173 = vsel %vm393, %v3172, %v3171
        %v3174 = vrot.slane %v3019, 3
        %v3175 = vsel %vm396, %v3174, %v3173
        %v3176 = vrot.slane %v3020, 2
        %v3177 = vsel %vm399, %v3176, %v3175
        %v3178 = vrot.slane %v3021, 1
        %v3179 = vsel %vm402, %v3178, %v3177
        %v3180 = vrot.slane %v3023, 7
        %v3181 = vsel %vm384, %v3180, %v3022
        %v3182 = vrot.slane %v3024, 6
        %v3183 = vsel %vm387, %v3182, %v3181
        %v3184 = vrot.slane %v3025, 5
        %v3185 = vsel %vm390, %v3184, %v3183
        %v3186 = vrot.slane %v3026, 4
        %v3187 = vsel %vm393, %v3186, %v3185
        %v3188 = vrot.slane %v3027, 3
        %v3189 = vsel %vm396, %v3188, %v3187
        %v3190 = vrot.slane %v3028, 2
        %v3191 = vsel %vm399, %v3190, %v3189
        %v3192 = vrot.slane %v3029, 1
        %v3193 = vsel %vm402, %v3192, %v3191
        %v3194 = vrot.slane %v3031, 7
        %v3195 = vsel %vm384, %v3194, %v3030
        %v3196 = vrot.slane %v3032, 6
        %v3197 = vsel %vm387, %v3196, %v3195
        %v3198 = vrot.slane %v3033, 5
        %v3199 = vsel %vm390, %v3198, %v3197
        %v3200 = vrot.slane %v3034, 4
        %v3201 = vsel %vm393, %v3200, %v3199
        %v3202 = vrot.slane %v3035, 3
        %v3203 = vsel %vm396, %v3202, %v3201
        %v3204 = vrot.slane %v3036, 2
        %v3205 = vsel %vm399, %v3204, %v3203
        %v3206 = vrot.slane %v3037, 1
        %v3207 = vsel %vm402, %v3206, %v3205
        %v3208 = vrot.slane %v3039, 7
        %v3209 = vsel %vm384, %v3208, %v3038
        %v3210 = vrot.slane %v3040, 6
        %v3211 = vsel %vm387, %v3210, %v3209
        %v3212 = vrot.slane %v3041, 5
        %v3213 = vsel %vm390, %v3212, %v3211
        %v3214 = vrot.slane %v3042, 4
        %v3215 = vsel %vm393, %v3214, %v3213
        %v3216 = vrot.slane %v3043, 3
        %v3217 = vsel %vm396, %v3216, %v3215
        %v3218 = vrot.slane %v3044, 2
        %v3219 = vsel %vm399, %v3218, %v3217
        %v3220 = vrot.slane %v3045, 1
        %v3221 = vsel %vm402, %v3220, %v3219
        %3230 = vadd.xlane.f32.xlu0 %v3123
        %v3231 = vpop.xlane.xlu0 %3230
        %3232 = vadd.xlane.f32.xlu0 %v3137
        %v3233 = vpop.xlane.xlu0 %3232
        %3234 = vadd.xlane.f32.xlu0 %v3151
        %v3235 = vpop.xlane.xlu0 %3234
        %3236 = vadd.xlane.f32.xlu0 %v3165
        %v3237 = vpop.xlane.xlu0 %3236
        %3238 = vadd.xlane.f32.xlu0 %v3179
        %v3239 = vpop.xlane.xlu0 %3238
        %3240 = vadd.xlane.f32.xlu0 %v3193
        %v3241 = vpop.xlane.xlu0 %3240
        %3242 = vadd.xlane.f32.xlu0 %v3207
        %v3243 = vpop.xlane.xlu0 %3242
        %3244 = vadd.xlane.f32.xlu0 %v3221
        %v3245 = vpop.xlane.xlu0 %3244
        %v3246 = vadd.f32 %v2702, %v3231
        %v3247 = vadd.f32 %v2703, %v3233
        %v3248 = vadd.f32 %v2704, %v3235
        %v3249 = vadd.f32 %v2705, %v3237
        %v3250 = vadd.f32 %v2706, %v3239
        %v3251 = vadd.f32 %v2707, %v3241
        %v3252 = vadd.f32 %v2708, %v3243
        %v3253 = vadd.f32 %v2709, %v3245
        %v3254 = vmul.f32 %v2982, %v2982
        %v3255 = vmul.f32 %v2983, %v2983
        %v3256 = vmul.f32 %v2984, %v2984
        %v3257 = vmul.f32 %v2985, %v2985
        %v3258 = vmul.f32 %v2986, %v2986
        %v3259 = vmul.f32 %v2987, %v2987
        %v3260 = vmul.f32 %v2988, %v2988
        %v3261 = vmul.f32 %v2989, %v2989
        %v3262 = vmul.f32 %v2990, %v2990
        %v3263 = vmul.f32 %v2991, %v2991
        %v3264 = vmul.f32 %v2992, %v2992
        %v3265 = vmul.f32 %v2993, %v2993
        %v3266 = vmul.f32 %v2994, %v2994
        %v3267 = vmul.f32 %v2995, %v2995
        %v3268 = vmul.f32 %v2996, %v2996
        %v3269 = vmul.f32 %v2997, %v2997
        %v3270 = vmul.f32 %v2998, %v2998
        %v3271 = vmul.f32 %v2999, %v2999
        %v3272 = vmul.f32 %v3000, %v3000
        %v3273 = vmul.f32 %v3001, %v3001
        %v3274 = vmul.f32 %v3002, %v3002
        %v3275 = vmul.f32 %v3003, %v3003
        %v3276 = vmul.f32 %v3004, %v3004
        %v3277 = vmul.f32 %v3005, %v3005
        %v3278 = vmul.f32 %v3006, %v3006
        %v3279 = vmul.f32 %v3007, %v3007
        %v3280 = vmul.f32 %v3008, %v3008
        %v3281 = vmul.f32 %v3009, %v3009
        %v3282 = vmul.f32 %v3010, %v3010
        %v3283 = vmul.f32 %v3011, %v3011
        %v3284 = vmul.f32 %v3012, %v3012
        %v3285 = vmul.f32 %v3013, %v3013
        %v3286 = vmul.f32 %v3014, %v3014
        %v3287 = vmul.f32 %v3015, %v3015
        %v3288 = vmul.f32 %v3016, %v3016
        %v3289 = vmul.f32 %v3017, %v3017
        %v3290 = vmul.f32 %v3018, %v3018
        %v3291 = vmul.f32 %v3019, %v3019
        %v3292 = vmul.f32 %v3020, %v3020
        %v3293 = vmul.f32 %v3021, %v3021
        %v3294 = vmul.f32 %v3022, %v3022
        %v3295 = vmul.f32 %v3023, %v3023
        %v3296 = vmul.f32 %v3024, %v3024
        %v3297 = vmul.f32 %v3025, %v3025
        %v3298 = vmul.f32 %v3026, %v3026
        %v3299 = vmul.f32 %v3027, %v3027
        %v3300 = vmul.f32 %v3028, %v3028
        %v3301 = vmul.f32 %v3029, %v3029
        %v3302 = vmul.f32 %v3030, %v3030
        %v3303 = vmul.f32 %v3031, %v3031
        %v3304 = vmul.f32 %v3032, %v3032
        %v3305 = vmul.f32 %v3033, %v3033
        %v3306 = vmul.f32 %v3034, %v3034
        %v3307 = vmul.f32 %v3035, %v3035
        %v3308 = vmul.f32 %v3036, %v3036
        %v3309 = vmul.f32 %v3037, %v3037
        %v3310 = vmul.f32 %v3038, %v3038
        %v3311 = vmul.f32 %v3039, %v3039
        %v3312 = vmul.f32 %v3040, %v3040
        %v3313 = vmul.f32 %v3041, %v3041
        %v3314 = vmul.f32 %v3042, %v3042
        %v3315 = vmul.f32 %v3043, %v3043
        %v3316 = vmul.f32 %v3044, %v3044
        %v3317 = vmul.f32 %v3045, %v3045
        %v3382 = vrot.slane %v3255, 7
        %v3383 = vsel %vm384, %v3382, %v3254
        %v3384 = vrot.slane %v3256, 6
        %v3385 = vsel %vm387, %v3384, %v3383
        %v3386 = vrot.slane %v3257, 5
        %v3387 = vsel %vm390, %v3386, %v3385
        %v3388 = vrot.slane %v3258, 4
        %v3389 = vsel %vm393, %v3388, %v3387
        %v3390 = vrot.slane %v3259, 3
        %v3391 = vsel %vm396, %v3390, %v3389
        %v3392 = vrot.slane %v3260, 2
        %v3393 = vsel %vm399, %v3392, %v3391
        %v3394 = vrot.slane %v3261, 1
        %v3395 = vsel %vm402, %v3394, %v3393
        %v3396 = vrot.slane %v3263, 7
        %v3397 = vsel %vm384, %v3396, %v3262
        %v3398 = vrot.slane %v3264, 6
        %v3399 = vsel %vm387, %v3398, %v3397
        %v3400 = vrot.slane %v3265, 5
        %v3401 = vsel %vm390, %v3400, %v3399
        %v3402 = vrot.slane %v3266, 4
        %v3403 = vsel %vm393, %v3402, %v3401
        %v3404 = vrot.slane %v3267, 3
        %v3405 = vsel %vm396, %v3404, %v3403
        %v3406 = vrot.slane %v3268, 2
        %v3407 = vsel %vm399, %v3406, %v3405
        %v3408 = vrot.slane %v3269, 1
        %v3409 = vsel %vm402, %v3408, %v3407
        %v3410 = vrot.slane %v3271, 7
        %v3411 = vsel %vm384, %v3410, %v3270
        %v3412 = vrot.slane %v3272, 6
        %v3413 = vsel %vm387, %v3412, %v3411
        %v3414 = vrot.slane %v3273, 5
        %v3415 = vsel %vm390, %v3414, %v3413
        %v3416 = vrot.slane %v3274, 4
        %v3417 = vsel %vm393, %v3416, %v3415
        %v3418 = vrot.slane %v3275, 3
        %v3419 = vsel %vm396, %v3418, %v3417
        %v3420 = vrot.slane %v3276, 2
        %v3421 = vsel %vm399, %v3420, %v3419
        %v3422 = vrot.slane %v3277, 1
        %v3423 = vsel %vm402, %v3422, %v3421
        %v3424 = vrot.slane %v3279, 7
        %v3425 = vsel %vm384, %v3424, %v3278
        %v3426 = vrot.slane %v3280, 6
        %v3427 = vsel %vm387, %v3426, %v3425
        %v3428 = vrot.slane %v3281, 5
        %v3429 = vsel %vm390, %v3428, %v3427
        %v3430 = vrot.slane %v3282, 4
        %v3431 = vsel %vm393, %v3430, %v3429
        %v3432 = vrot.slane %v3283, 3
        %v3433 = vsel %vm396, %v3432, %v3431
        %v3434 = vrot.slane %v3284, 2
        %v3435 = vsel %vm399, %v3434, %v3433
        %v3436 = vrot.slane %v3285, 1
        %v3437 = vsel %vm402, %v3436, %v3435
        %v3438 = vrot.slane %v3287, 7
        %v3439 = vsel %vm384, %v3438, %v3286
        %v3440 = vrot.slane %v3288, 6
        %v3441 = vsel %vm387, %v3440, %v3439
        %v3442 = vrot.slane %v3289, 5
        %v3443 = vsel %vm390, %v3442, %v3441
        %v3444 = vrot.slane %v3290, 4
        %v3445 = vsel %vm393, %v3444, %v3443
        %v3446 = vrot.slane %v3291, 3
        %v3447 = vsel %vm396, %v3446, %v3445
        %v3448 = vrot.slane %v3292, 2
        %v3449 = vsel %vm399, %v3448, %v3447
        %v3450 = vrot.slane %v3293, 1
        %v3451 = vsel %vm402, %v3450, %v3449
        %v3452 = vrot.slane %v3295, 7
        %v3453 = vsel %vm384, %v3452, %v3294
        %v3454 = vrot.slane %v3296, 6
        %v3455 = vsel %vm387, %v3454, %v3453
        %v3456 = vrot.slane %v3297, 5
        %v3457 = vsel %vm390, %v3456, %v3455
        %v3458 = vrot.slane %v3298, 4
        %v3459 = vsel %vm393, %v3458, %v3457
        %v3460 = vrot.slane %v3299, 3
        %v3461 = vsel %vm396, %v3460, %v3459
        %v3462 = vrot.slane %v3300, 2
        %v3463 = vsel %vm399, %v3462, %v3461
        %v3464 = vrot.slane %v3301, 1
        %v3465 = vsel %vm402, %v3464, %v3463
        %v3466 = vrot.slane %v3303, 7
        %v3467 = vsel %vm384, %v3466, %v3302
        %v3468 = vrot.slane %v3304, 6
        %v3469 = vsel %vm387, %v3468, %v3467
        %v3470 = vrot.slane %v3305, 5
        %v3471 = vsel %vm390, %v3470, %v3469
        %v3472 = vrot.slane %v3306, 4
        %v3473 = vsel %vm393, %v3472, %v3471
        %v3474 = vrot.slane %v3307, 3
        %v3475 = vsel %vm396, %v3474, %v3473
        %v3476 = vrot.slane %v3308, 2
        %v3477 = vsel %vm399, %v3476, %v3475
        %v3478 = vrot.slane %v3309, 1
        %v3479 = vsel %vm402, %v3478, %v3477
        %v3480 = vrot.slane %v3311, 7
        %v3481 = vsel %vm384, %v3480, %v3310
        %v3482 = vrot.slane %v3312, 6
        %v3483 = vsel %vm387, %v3482, %v3481
        %v3484 = vrot.slane %v3313, 5
        %v3485 = vsel %vm390, %v3484, %v3483
        %v3486 = vrot.slane %v3314, 4
        %v3487 = vsel %vm393, %v3486, %v3485
        %v3488 = vrot.slane %v3315, 3
        %v3489 = vsel %vm396, %v3488, %v3487
        %v3490 = vrot.slane %v3316, 2
        %v3491 = vsel %vm399, %v3490, %v3489
        %v3492 = vrot.slane %v3317, 1
        %v3493 = vsel %vm402, %v3492, %v3491
        %3502 = vadd.xlane.f32.xlu0 %v3395
        %v3503 = vpop.xlane.xlu0 %3502
        %3504 = vadd.xlane.f32.xlu0 %v3409
        %v3505 = vpop.xlane.xlu0 %3504
        %3506 = vadd.xlane.f32.xlu0 %v3423
        %v3507 = vpop.xlane.xlu0 %3506
        %3508 = vadd.xlane.f32.xlu0 %v3437
        %v3509 = vpop.xlane.xlu0 %3508
        %3510 = vadd.xlane.f32.xlu0 %v3451
        %v3511 = vpop.xlane.xlu0 %3510
        %3512 = vadd.xlane.f32.xlu0 %v3465
        %v3513 = vpop.xlane.xlu0 %3512
        %3514 = vadd.xlane.f32.xlu0 %v3479
        %v3515 = vpop.xlane.xlu0 %3514
        %3516 = vadd.xlane.f32.xlu0 %v3493
        %v3517 = vpop.xlane.xlu0 %3516
        %v3518 = vadd.f32 %v2974, %v3503
        %v3519 = vadd.f32 %v2975, %v3505
        %v3520 = vadd.f32 %v2976, %v3507
        %v3521 = vadd.f32 %v2977, %v3509
        %v3522 = vadd.f32 %v2978, %v3511
        %v3523 = vadd.f32 %v2979, %v3513
        %v3524 = vadd.f32 %v2980, %v3515
        %v3525 = vadd.f32 %v2981, %v3517
        %v3526 = vld [vmem:[%s192 + $0x6] sm:$0x1]
        %v3527 = vld [vmem:[%s192 + $0xe] sm:$0x1]
        %v3528 = vld [vmem:[%s192 + $0x16] sm:$0x1]
        %v3529 = vld [vmem:[%s192 + $0x1e] sm:$0x1]
        %v3530 = vld [vmem:[%s192 + $0x26] sm:$0x1]
        %v3531 = vld [vmem:[%s192 + $0x2e] sm:$0x1]
        %v3532 = vld [vmem:[%s192 + $0x36] sm:$0x1]
        %v3533 = vld [vmem:[%s192 + $0x3e] sm:$0x1]
        %v3534 = vld [vmem:[%s192 + $0x46] sm:$0x1]
        %v3535 = vld [vmem:[%s192 + $0x4e] sm:$0x1]
        %v3536 = vld [vmem:[%s192 + $0x56] sm:$0x1]
        %v3537 = vld [vmem:[%s192 + $0x5e] sm:$0x1]
        %v3538 = vld [vmem:[%s192 + $0x66] sm:$0x1]
        %v3539 = vld [vmem:[%s192 + $0x6e] sm:$0x1]
        %v3540 = vld [vmem:[%s192 + $0x76] sm:$0x1]
        %v3541 = vld [vmem:[%s192 + $0x7e] sm:$0x1]
        %v3542 = vld [vmem:[%s192 + $0x86] sm:$0x1]
        %v3543 = vld [vmem:[%s192 + $0x8e] sm:$0x1]
        %v3544 = vld [vmem:[%s192 + $0x96] sm:$0x1]
        %v3545 = vld [vmem:[%s192 + $0x9e] sm:$0x1]
        %v3546 = vld [vmem:[%s192 + $0xa6] sm:$0x1]
        %v3547 = vld [vmem:[%s192 + $0xae] sm:$0x1]
        %v3548 = vld [vmem:[%s192 + $0xb6] sm:$0x1]
        %v3549 = vld [vmem:[%s192 + $0xbe] sm:$0x1]
        %v3550 = vld [vmem:[%s192 + $0xc6] sm:$0x1]
        %v3551 = vld [vmem:[%s192 + $0xce] sm:$0x1]
        %v3552 = vld [vmem:[%s192 + $0xd6] sm:$0x1]
        %v3553 = vld [vmem:[%s192 + $0xde] sm:$0x1]
        %v3554 = vld [vmem:[%s192 + $0xe6] sm:$0x1]
        %v3555 = vld [vmem:[%s192 + $0xee] sm:$0x1]
        %v3556 = vld [vmem:[%s192 + $0xf6] sm:$0x1]
        %v3557 = vld [vmem:[%s192 + $0xfe] sm:$0x1]
        %v3558 = vld [vmem:[%s192 + $0x106] sm:$0x1]
        %v3559 = vld [vmem:[%s192 + $0x10e] sm:$0x1]
        %v3560 = vld [vmem:[%s192 + $0x116] sm:$0x1]
        %v3561 = vld [vmem:[%s192 + $0x11e] sm:$0x1]
        %v3562 = vld [vmem:[%s192 + $0x126] sm:$0x1]
        %v3563 = vld [vmem:[%s192 + $0x12e] sm:$0x1]
        %v3564 = vld [vmem:[%s192 + $0x136] sm:$0x1]
        %v3565 = vld [vmem:[%s192 + $0x13e] sm:$0x1]
        %v3566 = vld [vmem:[%s192 + $0x146] sm:$0x1]
        %v3567 = vld [vmem:[%s192 + $0x14e] sm:$0x1]
        %v3568 = vld [vmem:[%s192 + $0x156] sm:$0x1]
        %v3569 = vld [vmem:[%s192 + $0x15e] sm:$0x1]
        %v3570 = vld [vmem:[%s192 + $0x166] sm:$0x1]
        %v3571 = vld [vmem:[%s192 + $0x16e] sm:$0x1]
        %v3572 = vld [vmem:[%s192 + $0x176] sm:$0x1]
        %v3573 = vld [vmem:[%s192 + $0x17e] sm:$0x1]
        %v3574 = vld [vmem:[%s192 + $0x186] sm:$0x1]
        %v3575 = vld [vmem:[%s192 + $0x18e] sm:$0x1]
        %v3576 = vld [vmem:[%s192 + $0x196] sm:$0x1]
        %v3577 = vld [vmem:[%s192 + $0x19e] sm:$0x1]
        %v3578 = vld [vmem:[%s192 + $0x1a6] sm:$0x1]
        %v3579 = vld [vmem:[%s192 + $0x1ae] sm:$0x1]
        %v3580 = vld [vmem:[%s192 + $0x1b6] sm:$0x1]
        %v3581 = vld [vmem:[%s192 + $0x1be] sm:$0x1]
        %v3582 = vld [vmem:[%s192 + $0x1c6] sm:$0x1]
        %v3583 = vld [vmem:[%s192 + $0x1ce] sm:$0x1]
        %v3584 = vld [vmem:[%s192 + $0x1d6] sm:$0x1]
        %v3585 = vld [vmem:[%s192 + $0x1de] sm:$0x1]
        %v3586 = vld [vmem:[%s192 + $0x1e6] sm:$0x1]
        %v3587 = vld [vmem:[%s192 + $0x1ee] sm:$0x1]
        %v3588 = vld [vmem:[%s192 + $0x1f6] sm:$0x1]
        %v3589 = vld [vmem:[%s192 + $0x1fe] sm:$0x1]
        %v3654 = vrot.slane %v3527, 7
        %v3655 = vsel %vm384, %v3654, %v3526
        %v3656 = vrot.slane %v3528, 6
        %v3657 = vsel %vm387, %v3656, %v3655
        %v3658 = vrot.slane %v3529, 5
        %v3659 = vsel %vm390, %v3658, %v3657
        %v3660 = vrot.slane %v3530, 4
        %v3661 = vsel %vm393, %v3660, %v3659
        %v3662 = vrot.slane %v3531, 3
        %v3663 = vsel %vm396, %v3662, %v3661
        %v3664 = vrot.slane %v3532, 2
        %v3665 = vsel %vm399, %v3664, %v3663
        %v3666 = vrot.slane %v3533, 1
        %v3667 = vsel %vm402, %v3666, %v3665
        %v3668 = vrot.slane %v3535, 7
        %v3669 = vsel %vm384, %v3668, %v3534
        %v3670 = vrot.slane %v3536, 6
        %v3671 = vsel %vm387, %v3670, %v3669
        %v3672 = vrot.slane %v3537, 5
        %v3673 = vsel %vm390, %v3672, %v3671
        %v3674 = vrot.slane %v3538, 4
        %v3675 = vsel %vm393, %v3674, %v3673
        %v3676 = vrot.slane %v3539, 3
        %v3677 = vsel %vm396, %v3676, %v3675
        %v3678 = vrot.slane %v3540, 2
        %v3679 = vsel %vm399, %v3678, %v3677
        %v3680 = vrot.slane %v3541, 1
        %v3681 = vsel %vm402, %v3680, %v3679
        %v3682 = vrot.slane %v3543, 7
        %v3683 = vsel %vm384, %v3682, %v3542
        %v3684 = vrot.slane %v3544, 6
        %v3685 = vsel %vm387, %v3684, %v3683
        %v3686 = vrot.slane %v3545, 5
        %v3687 = vsel %vm390, %v3686, %v3685
        %v3688 = vrot.slane %v3546, 4
        %v3689 = vsel %vm393, %v3688, %v3687
        %v3690 = vrot.slane %v3547, 3
        %v3691 = vsel %vm396, %v3690, %v3689
        %v3692 = vrot.slane %v3548, 2
        %v3693 = vsel %vm399, %v3692, %v3691
        %v3694 = vrot.slane %v3549, 1
        %v3695 = vsel %vm402, %v3694, %v3693
        %v3696 = vrot.slane %v3551, 7
        %v3697 = vsel %vm384, %v3696, %v3550
        %v3698 = vrot.slane %v3552, 6
        %v3699 = vsel %vm387, %v3698, %v3697
        %v3700 = vrot.slane %v3553, 5
        %v3701 = vsel %vm390, %v3700, %v3699
        %v3702 = vrot.slane %v3554, 4
        %v3703 = vsel %vm393, %v3702, %v3701
        %v3704 = vrot.slane %v3555, 3
        %v3705 = vsel %vm396, %v3704, %v3703
        %v3706 = vrot.slane %v3556, 2
        %v3707 = vsel %vm399, %v3706, %v3705
        %v3708 = vrot.slane %v3557, 1
        %v3709 = vsel %vm402, %v3708, %v3707
        %v3710 = vrot.slane %v3559, 7
        %v3711 = vsel %vm384, %v3710, %v3558
        %v3712 = vrot.slane %v3560, 6
        %v3713 = vsel %vm387, %v3712, %v3711
        %v3714 = vrot.slane %v3561, 5
        %v3715 = vsel %vm390, %v3714, %v3713
        %v3716 = vrot.slane %v3562, 4
        %v3717 = vsel %vm393, %v3716, %v3715
        %v3718 = vrot.slane %v3563, 3
        %v3719 = vsel %vm396, %v3718, %v3717
        %v3720 = vrot.slane %v3564, 2
        %v3721 = vsel %vm399, %v3720, %v3719
        %v3722 = vrot.slane %v3565, 1
        %v3723 = vsel %vm402, %v3722, %v3721
        %v3724 = vrot.slane %v3567, 7
        %v3725 = vsel %vm384, %v3724, %v3566
        %v3726 = vrot.slane %v3568, 6
        %v3727 = vsel %vm387, %v3726, %v3725
        %v3728 = vrot.slane %v3569, 5
        %v3729 = vsel %vm390, %v3728, %v3727
        %v3730 = vrot.slane %v3570, 4
        %v3731 = vsel %vm393, %v3730, %v3729
        %v3732 = vrot.slane %v3571, 3
        %v3733 = vsel %vm396, %v3732, %v3731
        %v3734 = vrot.slane %v3572, 2
        %v3735 = vsel %vm399, %v3734, %v3733
        %v3736 = vrot.slane %v3573, 1
        %v3737 = vsel %vm402, %v3736, %v3735
        %v3738 = vrot.slane %v3575, 7
        %v3739 = vsel %vm384, %v3738, %v3574
        %v3740 = vrot.slane %v3576, 6
        %v3741 = vsel %vm387, %v3740, %v3739
        %v3742 = vrot.slane %v3577, 5
        %v3743 = vsel %vm390, %v3742, %v3741
        %v3744 = vrot.slane %v3578, 4
        %v3745 = vsel %vm393, %v3744, %v3743
        %v3746 = vrot.slane %v3579, 3
        %v3747 = vsel %vm396, %v3746, %v3745
        %v3748 = vrot.slane %v3580, 2
        %v3749 = vsel %vm399, %v3748, %v3747
        %v3750 = vrot.slane %v3581, 1
        %v3751 = vsel %vm402, %v3750, %v3749
        %v3752 = vrot.slane %v3583, 7
        %v3753 = vsel %vm384, %v3752, %v3582
        %v3754 = vrot.slane %v3584, 6
        %v3755 = vsel %vm387, %v3754, %v3753
        %v3756 = vrot.slane %v3585, 5
        %v3757 = vsel %vm390, %v3756, %v3755
        %v3758 = vrot.slane %v3586, 4
        %v3759 = vsel %vm393, %v3758, %v3757
        %v3760 = vrot.slane %v3587, 3
        %v3761 = vsel %vm396, %v3760, %v3759
        %v3762 = vrot.slane %v3588, 2
        %v3763 = vsel %vm399, %v3762, %v3761
        %v3764 = vrot.slane %v3589, 1
        %v3765 = vsel %vm402, %v3764, %v3763
        %3774 = vadd.xlane.f32.xlu0 %v3667
        %v3775 = vpop.xlane.xlu0 %3774
        %3776 = vadd.xlane.f32.xlu0 %v3681
        %v3777 = vpop.xlane.xlu0 %3776
        %3778 = vadd.xlane.f32.xlu0 %v3695
        %v3779 = vpop.xlane.xlu0 %3778
        %3780 = vadd.xlane.f32.xlu0 %v3709
        %v3781 = vpop.xlane.xlu0 %3780
        %3782 = vadd.xlane.f32.xlu0 %v3723
        %v3783 = vpop.xlane.xlu0 %3782
        %3784 = vadd.xlane.f32.xlu0 %v3737
        %v3785 = vpop.xlane.xlu0 %3784
        %3786 = vadd.xlane.f32.xlu0 %v3751
        %v3787 = vpop.xlane.xlu0 %3786
        %3788 = vadd.xlane.f32.xlu0 %v3765
        %v3789 = vpop.xlane.xlu0 %3788
        %v3790 = vadd.f32 %v3246, %v3775
        %v3791 = vadd.f32 %v3247, %v3777
        %v3792 = vadd.f32 %v3248, %v3779
        %v3793 = vadd.f32 %v3249, %v3781
        %v3794 = vadd.f32 %v3250, %v3783
        %v3795 = vadd.f32 %v3251, %v3785
        %v3796 = vadd.f32 %v3252, %v3787
        %v3797 = vadd.f32 %v3253, %v3789
        %v3798 = vmul.f32 %v3526, %v3526
        %v3799 = vmul.f32 %v3527, %v3527
        %v3800 = vmul.f32 %v3528, %v3528
        %v3801 = vmul.f32 %v3529, %v3529
        %v3802 = vmul.f32 %v3530, %v3530
        %v3803 = vmul.f32 %v3531, %v3531
        %v3804 = vmul.f32 %v3532, %v3532
        %v3805 = vmul.f32 %v3533, %v3533
        %v3806 = vmul.f32 %v3534, %v3534
        %v3807 = vmul.f32 %v3535, %v3535
        %v3808 = vmul.f32 %v3536, %v3536
        %v3809 = vmul.f32 %v3537, %v3537
        %v3810 = vmul.f32 %v3538, %v3538
        %v3811 = vmul.f32 %v3539, %v3539
        %v3812 = vmul.f32 %v3540, %v3540
        %v3813 = vmul.f32 %v3541, %v3541
        %v3814 = vmul.f32 %v3542, %v3542
        %v3815 = vmul.f32 %v3543, %v3543
        %v3816 = vmul.f32 %v3544, %v3544
        %v3817 = vmul.f32 %v3545, %v3545
        %v3818 = vmul.f32 %v3546, %v3546
        %v3819 = vmul.f32 %v3547, %v3547
        %v3820 = vmul.f32 %v3548, %v3548
        %v3821 = vmul.f32 %v3549, %v3549
        %v3822 = vmul.f32 %v3550, %v3550
        %v3823 = vmul.f32 %v3551, %v3551
        %v3824 = vmul.f32 %v3552, %v3552
        %v3825 = vmul.f32 %v3553, %v3553
        %v3826 = vmul.f32 %v3554, %v3554
        %v3827 = vmul.f32 %v3555, %v3555
        %v3828 = vmul.f32 %v3556, %v3556
        %v3829 = vmul.f32 %v3557, %v3557
        %v3830 = vmul.f32 %v3558, %v3558
        %v3831 = vmul.f32 %v3559, %v3559
        %v3832 = vmul.f32 %v3560, %v3560
        %v3833 = vmul.f32 %v3561, %v3561
        %v3834 = vmul.f32 %v3562, %v3562
        %v3835 = vmul.f32 %v3563, %v3563
        %v3836 = vmul.f32 %v3564, %v3564
        %v3837 = vmul.f32 %v3565, %v3565
        %v3838 = vmul.f32 %v3566, %v3566
        %v3839 = vmul.f32 %v3567, %v3567
        %v3840 = vmul.f32 %v3568, %v3568
        %v3841 = vmul.f32 %v3569, %v3569
        %v3842 = vmul.f32 %v3570, %v3570
        %v3843 = vmul.f32 %v3571, %v3571
        %v3844 = vmul.f32 %v3572, %v3572
        %v3845 = vmul.f32 %v3573, %v3573
        %v3846 = vmul.f32 %v3574, %v3574
        %v3847 = vmul.f32 %v3575, %v3575
        %v3848 = vmul.f32 %v3576, %v3576
        %v3849 = vmul.f32 %v3577, %v3577
        %v3850 = vmul.f32 %v3578, %v3578
        %v3851 = vmul.f32 %v3579, %v3579
        %v3852 = vmul.f32 %v3580, %v3580
        %v3853 = vmul.f32 %v3581, %v3581
        %v3854 = vmul.f32 %v3582, %v3582
        %v3855 = vmul.f32 %v3583, %v3583
        %v3856 = vmul.f32 %v3584, %v3584
        %v3857 = vmul.f32 %v3585, %v3585
        %v3858 = vmul.f32 %v3586, %v3586
        %v3859 = vmul.f32 %v3587, %v3587
        %v3860 = vmul.f32 %v3588, %v3588
        %v3861 = vmul.f32 %v3589, %v3589
        %v3926 = vrot.slane %v3799, 7
        %v3927 = vsel %vm384, %v3926, %v3798
        %v3928 = vrot.slane %v3800, 6
        %v3929 = vsel %vm387, %v3928, %v3927
        %v3930 = vrot.slane %v3801, 5
        %v3931 = vsel %vm390, %v3930, %v3929
        %v3932 = vrot.slane %v3802, 4
        %v3933 = vsel %vm393, %v3932, %v3931
        %v3934 = vrot.slane %v3803, 3
        %v3935 = vsel %vm396, %v3934, %v3933
        %v3936 = vrot.slane %v3804, 2
        %v3937 = vsel %vm399, %v3936, %v3935
        %v3938 = vrot.slane %v3805, 1
        %v3939 = vsel %vm402, %v3938, %v3937
        %v3940 = vrot.slane %v3807, 7
        %v3941 = vsel %vm384, %v3940, %v3806
        %v3942 = vrot.slane %v3808, 6
        %v3943 = vsel %vm387, %v3942, %v3941
        %v3944 = vrot.slane %v3809, 5
        %v3945 = vsel %vm390, %v3944, %v3943
        %v3946 = vrot.slane %v3810, 4
        %v3947 = vsel %vm393, %v3946, %v3945
        %v3948 = vrot.slane %v3811, 3
        %v3949 = vsel %vm396, %v3948, %v3947
        %v3950 = vrot.slane %v3812, 2
        %v3951 = vsel %vm399, %v3950, %v3949
        %v3952 = vrot.slane %v3813, 1
        %v3953 = vsel %vm402, %v3952, %v3951
        %v3954 = vrot.slane %v3815, 7
        %v3955 = vsel %vm384, %v3954, %v3814
        %v3956 = vrot.slane %v3816, 6
        %v3957 = vsel %vm387, %v3956, %v3955
        %v3958 = vrot.slane %v3817, 5
        %v3959 = vsel %vm390, %v3958, %v3957
        %v3960 = vrot.slane %v3818, 4
        %v3961 = vsel %vm393, %v3960, %v3959
        %v3962 = vrot.slane %v3819, 3
        %v3963 = vsel %vm396, %v3962, %v3961
        %v3964 = vrot.slane %v3820, 2
        %v3965 = vsel %vm399, %v3964, %v3963
        %v3966 = vrot.slane %v3821, 1
        %v3967 = vsel %vm402, %v3966, %v3965
        %v3968 = vrot.slane %v3823, 7
        %v3969 = vsel %vm384, %v3968, %v3822
        %v3970 = vrot.slane %v3824, 6
        %v3971 = vsel %vm387, %v3970, %v3969
        %v3972 = vrot.slane %v3825, 5
        %v3973 = vsel %vm390, %v3972, %v3971
        %v3974 = vrot.slane %v3826, 4
        %v3975 = vsel %vm393, %v3974, %v3973
        %v3976 = vrot.slane %v3827, 3
        %v3977 = vsel %vm396, %v3976, %v3975
        %v3978 = vrot.slane %v3828, 2
        %v3979 = vsel %vm399, %v3978, %v3977
        %v3980 = vrot.slane %v3829, 1
        %v3981 = vsel %vm402, %v3980, %v3979
        %v3982 = vrot.slane %v3831, 7
        %v3983 = vsel %vm384, %v3982, %v3830
        %v3984 = vrot.slane %v3832, 6
        %v3985 = vsel %vm387, %v3984, %v3983
        %v3986 = vrot.slane %v3833, 5
        %v3987 = vsel %vm390, %v3986, %v3985
        %v3988 = vrot.slane %v3834, 4
        %v3989 = vsel %vm393, %v3988, %v3987
        %v3990 = vrot.slane %v3835, 3
        %v3991 = vsel %vm396, %v3990, %v3989
        %v3992 = vrot.slane %v3836, 2
        %v3993 = vsel %vm399, %v3992, %v3991
        %v3994 = vrot.slane %v3837, 1
        %v3995 = vsel %vm402, %v3994, %v3993
        %v3996 = vrot.slane %v3839, 7
        %v3997 = vsel %vm384, %v3996, %v3838
        %v3998 = vrot.slane %v3840, 6
        %v3999 = vsel %vm387, %v3998, %v3997
        %v4000 = vrot.slane %v3841, 5
        %v4001 = vsel %vm390, %v4000, %v3999
        %v4002 = vrot.slane %v3842, 4
        %v4003 = vsel %vm393, %v4002, %v4001
        %v4004 = vrot.slane %v3843, 3
        %v4005 = vsel %vm396, %v4004, %v4003
        %v4006 = vrot.slane %v3844, 2
        %v4007 = vsel %vm399, %v4006, %v4005
        %v4008 = vrot.slane %v3845, 1
        %v4009 = vsel %vm402, %v4008, %v4007
        %v4010 = vrot.slane %v3847, 7
        %v4011 = vsel %vm384, %v4010, %v3846
        %v4012 = vrot.slane %v3848, 6
        %v4013 = vsel %vm387, %v4012, %v4011
        %v4014 = vrot.slane %v3849, 5
        %v4015 = vsel %vm390, %v4014, %v4013
        %v4016 = vrot.slane %v3850, 4
        %v4017 = vsel %vm393, %v4016, %v4015
        %v4018 = vrot.slane %v3851, 3
        %v4019 = vsel %vm396, %v4018, %v4017
        %v4020 = vrot.slane %v3852, 2
        %v4021 = vsel %vm399, %v4020, %v4019
        %v4022 = vrot.slane %v3853, 1
        %v4023 = vsel %vm402, %v4022, %v4021
        %v4024 = vrot.slane %v3855, 7
        %v4025 = vsel %vm384, %v4024, %v3854
        %v4026 = vrot.slane %v3856, 6
        %v4027 = vsel %vm387, %v4026, %v4025
        %v4028 = vrot.slane %v3857, 5
        %v4029 = vsel %vm390, %v4028, %v4027
        %v4030 = vrot.slane %v3858, 4
        %v4031 = vsel %vm393, %v4030, %v4029
        %v4032 = vrot.slane %v3859, 3
        %v4033 = vsel %vm396, %v4032, %v4031
        %v4034 = vrot.slane %v3860, 2
        %v4035 = vsel %vm399, %v4034, %v4033
        %v4036 = vrot.slane %v3861, 1
        %v4037 = vsel %vm402, %v4036, %v4035
        %4046 = vadd.xlane.f32.xlu0 %v3939
        %v4047 = vpop.xlane.xlu0 %4046
        %4048 = vadd.xlane.f32.xlu0 %v3953
        %v4049 = vpop.xlane.xlu0 %4048
        %4050 = vadd.xlane.f32.xlu0 %v3967
        %v4051 = vpop.xlane.xlu0 %4050
        %4052 = vadd.xlane.f32.xlu0 %v3981
        %v4053 = vpop.xlane.xlu0 %4052
        %4054 = vadd.xlane.f32.xlu0 %v3995
        %v4055 = vpop.xlane.xlu0 %4054
        %4056 = vadd.xlane.f32.xlu0 %v4009
        %v4057 = vpop.xlane.xlu0 %4056
        %4058 = vadd.xlane.f32.xlu0 %v4023
        %v4059 = vpop.xlane.xlu0 %4058
        %4060 = vadd.xlane.f32.xlu0 %v4037
        %v4061 = vpop.xlane.xlu0 %4060
        %v4062 = vadd.f32 %v3518, %v4047
        %v4063 = vadd.f32 %v3519, %v4049
        %v4064 = vadd.f32 %v3520, %v4051
        %v4065 = vadd.f32 %v3521, %v4053
        %v4066 = vadd.f32 %v3522, %v4055
        %v4067 = vadd.f32 %v3523, %v4057
        %v4068 = vadd.f32 %v3524, %v4059
        %v4069 = vadd.f32 %v3525, %v4061
        %v4070 = vld [vmem:[%s192 + $0x7] sm:$0x1]
        %v4071 = vld [vmem:[%s192 + $0xf] sm:$0x1]
        %v4072 = vld [vmem:[%s192 + $0x17] sm:$0x1]
        %v4073 = vld [vmem:[%s192 + $0x1f] sm:$0x1]
        %v4074 = vld [vmem:[%s192 + $0x27] sm:$0x1]
        %v4075 = vld [vmem:[%s192 + $0x2f] sm:$0x1]
        %v4076 = vld [vmem:[%s192 + $0x37] sm:$0x1]
        %v4077 = vld [vmem:[%s192 + $0x3f] sm:$0x1]
        %v4078 = vld [vmem:[%s192 + $0x47] sm:$0x1]
        %v4079 = vld [vmem:[%s192 + $0x4f] sm:$0x1]
        %v4080 = vld [vmem:[%s192 + $0x57] sm:$0x1]
        %v4081 = vld [vmem:[%s192 + $0x5f] sm:$0x1]
        %v4082 = vld [vmem:[%s192 + $0x67] sm:$0x1]
        %v4083 = vld [vmem:[%s192 + $0x6f] sm:$0x1]
        %v4084 = vld [vmem:[%s192 + $0x77] sm:$0x1]
        %v4085 = vld [vmem:[%s192 + $0x7f] sm:$0x1]
        %v4086 = vld [vmem:[%s192 + $0x87] sm:$0x1]
        %v4087 = vld [vmem:[%s192 + $0x8f] sm:$0x1]
        %v4088 = vld [vmem:[%s192 + $0x97] sm:$0x1]
        %v4089 = vld [vmem:[%s192 + $0x9f] sm:$0x1]
        %v4090 = vld [vmem:[%s192 + $0xa7] sm:$0x1]
        %v4091 = vld [vmem:[%s192 + $0xaf] sm:$0x1]
        %v4092 = vld [vmem:[%s192 + $0xb7] sm:$0x1]
        %v4093 = vld [vmem:[%s192 + $0xbf] sm:$0x1]
        %v4094 = vld [vmem:[%s192 + $0xc7] sm:$0x1]
        %v4095 = vld [vmem:[%s192 + $0xcf] sm:$0x1]
        %v4096 = vld [vmem:[%s192 + $0xd7] sm:$0x1]
        %v4097 = vld [vmem:[%s192 + $0xdf] sm:$0x1]
        %v4098 = vld [vmem:[%s192 + $0xe7] sm:$0x1]
        %v4099 = vld [vmem:[%s192 + $0xef] sm:$0x1]
        %v4100 = vld [vmem:[%s192 + $0xf7] sm:$0x1]
        %v4101 = vld [vmem:[%s192 + $0xff] sm:$0x1]
        %v4102 = vld [vmem:[%s192 + $0x107] sm:$0x1]
        %v4103 = vld [vmem:[%s192 + $0x10f] sm:$0x1]
        %v4104 = vld [vmem:[%s192 + $0x117] sm:$0x1]
        %v4105 = vld [vmem:[%s192 + $0x11f] sm:$0x1]
        %v4106 = vld [vmem:[%s192 + $0x127] sm:$0x1]
        %v4107 = vld [vmem:[%s192 + $0x12f] sm:$0x1]
        %v4108 = vld [vmem:[%s192 + $0x137] sm:$0x1]
        %v4109 = vld [vmem:[%s192 + $0x13f] sm:$0x1]
        %v4110 = vld [vmem:[%s192 + $0x147] sm:$0x1]
        %v4111 = vld [vmem:[%s192 + $0x14f] sm:$0x1]
        %v4112 = vld [vmem:[%s192 + $0x157] sm:$0x1]
        %v4113 = vld [vmem:[%s192 + $0x15f] sm:$0x1]
        %v4114 = vld [vmem:[%s192 + $0x167] sm:$0x1]
        %v4115 = vld [vmem:[%s192 + $0x16f] sm:$0x1]
        %v4116 = vld [vmem:[%s192 + $0x177] sm:$0x1]
        %v4117 = vld [vmem:[%s192 + $0x17f] sm:$0x1]
        %v4118 = vld [vmem:[%s192 + $0x187] sm:$0x1]
        %v4119 = vld [vmem:[%s192 + $0x18f] sm:$0x1]
        %v4120 = vld [vmem:[%s192 + $0x197] sm:$0x1]
        %v4121 = vld [vmem:[%s192 + $0x19f] sm:$0x1]
        %v4122 = vld [vmem:[%s192 + $0x1a7] sm:$0x1]
        %v4123 = vld [vmem:[%s192 + $0x1af] sm:$0x1]
        %v4124 = vld [vmem:[%s192 + $0x1b7] sm:$0x1]
        %v4125 = vld [vmem:[%s192 + $0x1bf] sm:$0x1]
        %v4126 = vld [vmem:[%s192 + $0x1c7] sm:$0x1]
        %v4127 = vld [vmem:[%s192 + $0x1cf] sm:$0x1]
        %v4128 = vld [vmem:[%s192 + $0x1d7] sm:$0x1]
        %v4129 = vld [vmem:[%s192 + $0x1df] sm:$0x1]
        %v4130 = vld [vmem:[%s192 + $0x1e7] sm:$0x1]
        %v4131 = vld [vmem:[%s192 + $0x1ef] sm:$0x1]
        %v4132 = vld [vmem:[%s192 + $0x1f7] sm:$0x1]
        %v4133 = vld [vmem:[%s192 + $0x1ff] sm:$0x1]
        %v4198 = vrot.slane %v4071, 7
        %v4199 = vsel %vm384, %v4198, %v4070
        %v4200 = vrot.slane %v4072, 6
        %v4201 = vsel %vm387, %v4200, %v4199
        %v4202 = vrot.slane %v4073, 5
        %v4203 = vsel %vm390, %v4202, %v4201
        %v4204 = vrot.slane %v4074, 4
        %v4205 = vsel %vm393, %v4204, %v4203
        %v4206 = vrot.slane %v4075, 3
        %v4207 = vsel %vm396, %v4206, %v4205
        %v4208 = vrot.slane %v4076, 2
        %v4209 = vsel %vm399, %v4208, %v4207
        %v4210 = vrot.slane %v4077, 1
        %v4211 = vsel %vm402, %v4210, %v4209
        %v4212 = vrot.slane %v4079, 7
        %v4213 = vsel %vm384, %v4212, %v4078
        %v4214 = vrot.slane %v4080, 6
        %v4215 = vsel %vm387, %v4214, %v4213
        %v4216 = vrot.slane %v4081, 5
        %v4217 = vsel %vm390, %v4216, %v4215
        %v4218 = vrot.slane %v4082, 4
        %v4219 = vsel %vm393, %v4218, %v4217
        %v4220 = vrot.slane %v4083, 3
        %v4221 = vsel %vm396, %v4220, %v4219
        %v4222 = vrot.slane %v4084, 2
        %v4223 = vsel %vm399, %v4222, %v4221
        %v4224 = vrot.slane %v4085, 1
        %v4225 = vsel %vm402, %v4224, %v4223
        %v4226 = vrot.slane %v4087, 7
        %v4227 = vsel %vm384, %v4226, %v4086
        %v4228 = vrot.slane %v4088, 6
        %v4229 = vsel %vm387, %v4228, %v4227
        %v4230 = vrot.slane %v4089, 5
        %v4231 = vsel %vm390, %v4230, %v4229
        %v4232 = vrot.slane %v4090, 4
        %v4233 = vsel %vm393, %v4232, %v4231
        %v4234 = vrot.slane %v4091, 3
        %v4235 = vsel %vm396, %v4234, %v4233
        %v4236 = vrot.slane %v4092, 2
        %v4237 = vsel %vm399, %v4236, %v4235
        %v4238 = vrot.slane %v4093, 1
        %v4239 = vsel %vm402, %v4238, %v4237
        %v4240 = vrot.slane %v4095, 7
        %v4241 = vsel %vm384, %v4240, %v4094
        %v4242 = vrot.slane %v4096, 6
        %v4243 = vsel %vm387, %v4242, %v4241
        %v4244 = vrot.slane %v4097, 5
        %v4245 = vsel %vm390, %v4244, %v4243
        %v4246 = vrot.slane %v4098, 4
        %v4247 = vsel %vm393, %v4246, %v4245
        %v4248 = vrot.slane %v4099, 3
        %v4249 = vsel %vm396, %v4248, %v4247
        %v4250 = vrot.slane %v4100, 2
        %v4251 = vsel %vm399, %v4250, %v4249
        %v4252 = vrot.slane %v4101, 1
        %v4253 = vsel %vm402, %v4252, %v4251
        %v4254 = vrot.slane %v4103, 7
        %v4255 = vsel %vm384, %v4254, %v4102
        %v4256 = vrot.slane %v4104, 6
        %v4257 = vsel %vm387, %v4256, %v4255
        %v4258 = vrot.slane %v4105, 5
        %v4259 = vsel %vm390, %v4258, %v4257
        %v4260 = vrot.slane %v4106, 4
        %v4261 = vsel %vm393, %v4260, %v4259
        %v4262 = vrot.slane %v4107, 3
        %v4263 = vsel %vm396, %v4262, %v4261
        %v4264 = vrot.slane %v4108, 2
        %v4265 = vsel %vm399, %v4264, %v4263
        %v4266 = vrot.slane %v4109, 1
        %v4267 = vsel %vm402, %v4266, %v4265
        %v4268 = vrot.slane %v4111, 7
        %v4269 = vsel %vm384, %v4268, %v4110
        %v4270 = vrot.slane %v4112, 6
        %v4271 = vsel %vm387, %v4270, %v4269
        %v4272 = vrot.slane %v4113, 5
        %v4273 = vsel %vm390, %v4272, %v4271
        %v4274 = vrot.slane %v4114, 4
        %v4275 = vsel %vm393, %v4274, %v4273
        %v4276 = vrot.slane %v4115, 3
        %v4277 = vsel %vm396, %v4276, %v4275
        %v4278 = vrot.slane %v4116, 2
        %v4279 = vsel %vm399, %v4278, %v4277
        %v4280 = vrot.slane %v4117, 1
        %v4281 = vsel %vm402, %v4280, %v4279
        %v4282 = vrot.slane %v4119, 7
        %v4283 = vsel %vm384, %v4282, %v4118
        %v4284 = vrot.slane %v4120, 6
        %v4285 = vsel %vm387, %v4284, %v4283
        %v4286 = vrot.slane %v4121, 5
        %v4287 = vsel %vm390, %v4286, %v4285
        %v4288 = vrot.slane %v4122, 4
        %v4289 = vsel %vm393, %v4288, %v4287
        %v4290 = vrot.slane %v4123, 3
        %v4291 = vsel %vm396, %v4290, %v4289
        %v4292 = vrot.slane %v4124, 2
        %v4293 = vsel %vm399, %v4292, %v4291
        %v4294 = vrot.slane %v4125, 1
        %v4295 = vsel %vm402, %v4294, %v4293
        %v4296 = vrot.slane %v4127, 7
        %v4297 = vsel %vm384, %v4296, %v4126
        %v4298 = vrot.slane %v4128, 6
        %v4299 = vsel %vm387, %v4298, %v4297
        %v4300 = vrot.slane %v4129, 5
        %v4301 = vsel %vm390, %v4300, %v4299
        %v4302 = vrot.slane %v4130, 4
        %v4303 = vsel %vm393, %v4302, %v4301
        %v4304 = vrot.slane %v4131, 3
        %v4305 = vsel %vm396, %v4304, %v4303
        %v4306 = vrot.slane %v4132, 2
        %v4307 = vsel %vm399, %v4306, %v4305
        %v4308 = vrot.slane %v4133, 1
        %v4309 = vsel %vm402, %v4308, %v4307
        %4318 = vadd.xlane.f32.xlu0 %v4211
        %v4319 = vpop.xlane.xlu0 %4318
        %4320 = vadd.xlane.f32.xlu0 %v4225
        %v4321 = vpop.xlane.xlu0 %4320
        %4322 = vadd.xlane.f32.xlu0 %v4239
        %v4323 = vpop.xlane.xlu0 %4322
        %4324 = vadd.xlane.f32.xlu0 %v4253
        %v4325 = vpop.xlane.xlu0 %4324
        %4326 = vadd.xlane.f32.xlu0 %v4267
        %v4327 = vpop.xlane.xlu0 %4326
        %4328 = vadd.xlane.f32.xlu0 %v4281
        %v4329 = vpop.xlane.xlu0 %4328
        %4330 = vadd.xlane.f32.xlu0 %v4295
        %v4331 = vpop.xlane.xlu0 %4330
        %4332 = vadd.xlane.f32.xlu0 %v4309
        %v4333 = vpop.xlane.xlu0 %4332
        %v4334 = vadd.f32 %v3790, %v4319
        %v4335 = vadd.f32 %v3791, %v4321
        %v4336 = vadd.f32 %v3792, %v4323
        %v4337 = vadd.f32 %v3793, %v4325
        %v4338 = vadd.f32 %v3794, %v4327
        %v4339 = vadd.f32 %v3795, %v4329
        %v4340 = vadd.f32 %v3796, %v4331
        %v4341 = vadd.f32 %v3797, %v4333
        %v4342 = vmul.f32 %v4070, %v4070
        %v4343 = vmul.f32 %v4071, %v4071
        %v4344 = vmul.f32 %v4072, %v4072
        %v4345 = vmul.f32 %v4073, %v4073
        %v4346 = vmul.f32 %v4074, %v4074
        %v4347 = vmul.f32 %v4075, %v4075
        %v4348 = vmul.f32 %v4076, %v4076
        %v4349 = vmul.f32 %v4077, %v4077
        %v4350 = vmul.f32 %v4078, %v4078
        %v4351 = vmul.f32 %v4079, %v4079
        %v4352 = vmul.f32 %v4080, %v4080
        %v4353 = vmul.f32 %v4081, %v4081
        %v4354 = vmul.f32 %v4082, %v4082
        %v4355 = vmul.f32 %v4083, %v4083
        %v4356 = vmul.f32 %v4084, %v4084
        %v4357 = vmul.f32 %v4085, %v4085
        %v4358 = vmul.f32 %v4086, %v4086
        %v4359 = vmul.f32 %v4087, %v4087
        %v4360 = vmul.f32 %v4088, %v4088
        %v4361 = vmul.f32 %v4089, %v4089
        %v4362 = vmul.f32 %v4090, %v4090
        %v4363 = vmul.f32 %v4091, %v4091
        %v4364 = vmul.f32 %v4092, %v4092
        %v4365 = vmul.f32 %v4093, %v4093
        %v4366 = vmul.f32 %v4094, %v4094
        %v4367 = vmul.f32 %v4095, %v4095
        %v4368 = vmul.f32 %v4096, %v4096
        %v4369 = vmul.f32 %v4097, %v4097
        %v4370 = vmul.f32 %v4098, %v4098
        %v4371 = vmul.f32 %v4099, %v4099
        %v4372 = vmul.f32 %v4100, %v4100
        %v4373 = vmul.f32 %v4101, %v4101
        %v4374 = vmul.f32 %v4102, %v4102
        %v4375 = vmul.f32 %v4103, %v4103
        %v4376 = vmul.f32 %v4104, %v4104
        %v4377 = vmul.f32 %v4105, %v4105
        %v4378 = vmul.f32 %v4106, %v4106
        %v4379 = vmul.f32 %v4107, %v4107
        %v4380 = vmul.f32 %v4108, %v4108
        %v4381 = vmul.f32 %v4109, %v4109
        %v4382 = vmul.f32 %v4110, %v4110
        %v4383 = vmul.f32 %v4111, %v4111
        %v4384 = vmul.f32 %v4112, %v4112
        %v4385 = vmul.f32 %v4113, %v4113
        %v4386 = vmul.f32 %v4114, %v4114
        %v4387 = vmul.f32 %v4115, %v4115
        %v4388 = vmul.f32 %v4116, %v4116
        %v4389 = vmul.f32 %v4117, %v4117
        %v4390 = vmul.f32 %v4118, %v4118
        %v4391 = vmul.f32 %v4119, %v4119
        %v4392 = vmul.f32 %v4120, %v4120
        %v4393 = vmul.f32 %v4121, %v4121
        %v4394 = vmul.f32 %v4122, %v4122
        %v4395 = vmul.f32 %v4123, %v4123
        %v4396 = vmul.f32 %v4124, %v4124
        %v4397 = vmul.f32 %v4125, %v4125
        %v4398 = vmul.f32 %v4126, %v4126
        %v4399 = vmul.f32 %v4127, %v4127
        %v4400 = vmul.f32 %v4128, %v4128
        %v4401 = vmul.f32 %v4129, %v4129
        %v4402 = vmul.f32 %v4130, %v4130
        %v4403 = vmul.f32 %v4131, %v4131
        %v4404 = vmul.f32 %v4132, %v4132
        %v4405 = vmul.f32 %v4133, %v4133
        %v4470 = vrot.slane %v4343, 7
        %v4471 = vsel %vm384, %v4470, %v4342
        %v4472 = vrot.slane %v4344, 6
        %v4473 = vsel %vm387, %v4472, %v4471
        %v4474 = vrot.slane %v4345, 5
        %v4475 = vsel %vm390, %v4474, %v4473
        %v4476 = vrot.slane %v4346, 4
        %v4477 = vsel %vm393, %v4476, %v4475
        %v4478 = vrot.slane %v4347, 3
        %v4479 = vsel %vm396, %v4478, %v4477
        %v4480 = vrot.slane %v4348, 2
        %v4481 = vsel %vm399, %v4480, %v4479
        %v4482 = vrot.slane %v4349, 1
        %v4483 = vsel %vm402, %v4482, %v4481
        %v4484 = vrot.slane %v4351, 7
        %v4485 = vsel %vm384, %v4484, %v4350
        %v4486 = vrot.slane %v4352, 6
        %v4487 = vsel %vm387, %v4486, %v4485
        %v4488 = vrot.slane %v4353, 5
        %v4489 = vsel %vm390, %v4488, %v4487
        %v4490 = vrot.slane %v4354, 4
        %v4491 = vsel %vm393, %v4490, %v4489
        %v4492 = vrot.slane %v4355, 3
        %v4493 = vsel %vm396, %v4492, %v4491
        %v4494 = vrot.slane %v4356, 2
        %v4495 = vsel %vm399, %v4494, %v4493
        %v4496 = vrot.slane %v4357, 1
        %v4497 = vsel %vm402, %v4496, %v4495
        %v4498 = vrot.slane %v4359, 7
        %v4499 = vsel %vm384, %v4498, %v4358
        %v4500 = vrot.slane %v4360, 6
        %v4501 = vsel %vm387, %v4500, %v4499
        %v4502 = vrot.slane %v4361, 5
        %v4503 = vsel %vm390, %v4502, %v4501
        %v4504 = vrot.slane %v4362, 4
        %v4505 = vsel %vm393, %v4504, %v4503
        %v4506 = vrot.slane %v4363, 3
        %v4507 = vsel %vm396, %v4506, %v4505
        %v4508 = vrot.slane %v4364, 2
        %v4509 = vsel %vm399, %v4508, %v4507
        %v4510 = vrot.slane %v4365, 1
        %v4511 = vsel %vm402, %v4510, %v4509
        %v4512 = vrot.slane %v4367, 7
        %v4513 = vsel %vm384, %v4512, %v4366
        %v4514 = vrot.slane %v4368, 6
        %v4515 = vsel %vm387, %v4514, %v4513
        %v4516 = vrot.slane %v4369, 5
        %v4517 = vsel %vm390, %v4516, %v4515
        %v4518 = vrot.slane %v4370, 4
        %v4519 = vsel %vm393, %v4518, %v4517
        %v4520 = vrot.slane %v4371, 3
        %v4521 = vsel %vm396, %v4520, %v4519
        %v4522 = vrot.slane %v4372, 2
        %v4523 = vsel %vm399, %v4522, %v4521
        %v4524 = vrot.slane %v4373, 1
        %v4525 = vsel %vm402, %v4524, %v4523
        %v4526 = vrot.slane %v4375, 7
        %v4527 = vsel %vm384, %v4526, %v4374
        %v4528 = vrot.slane %v4376, 6
        %v4529 = vsel %vm387, %v4528, %v4527
        %v4530 = vrot.slane %v4377, 5
        %v4531 = vsel %vm390, %v4530, %v4529
        %v4532 = vrot.slane %v4378, 4
        %v4533 = vsel %vm393, %v4532, %v4531
        %v4534 = vrot.slane %v4379, 3
        %v4535 = vsel %vm396, %v4534, %v4533
        %v4536 = vrot.slane %v4380, 2
        %v4537 = vsel %vm399, %v4536, %v4535
        %v4538 = vrot.slane %v4381, 1
        %v4539 = vsel %vm402, %v4538, %v4537
        %v4540 = vrot.slane %v4383, 7
        %v4541 = vsel %vm384, %v4540, %v4382
        %v4542 = vrot.slane %v4384, 6
        %v4543 = vsel %vm387, %v4542, %v4541
        %v4544 = vrot.slane %v4385, 5
        %v4545 = vsel %vm390, %v4544, %v4543
        %v4546 = vrot.slane %v4386, 4
        %v4547 = vsel %vm393, %v4546, %v4545
        %v4548 = vrot.slane %v4387, 3
        %v4549 = vsel %vm396, %v4548, %v4547
        %v4550 = vrot.slane %v4388, 2
        %v4551 = vsel %vm399, %v4550, %v4549
        %v4552 = vrot.slane %v4389, 1
        %v4553 = vsel %vm402, %v4552, %v4551
        %v4554 = vrot.slane %v4391, 7
        %v4555 = vsel %vm384, %v4554, %v4390
        %v4556 = vrot.slane %v4392, 6
        %v4557 = vsel %vm387, %v4556, %v4555
        %v4558 = vrot.slane %v4393, 5
        %v4559 = vsel %vm390, %v4558, %v4557
        %v4560 = vrot.slane %v4394, 4
        %v4561 = vsel %vm393, %v4560, %v4559
        %v4562 = vrot.slane %v4395, 3
        %v4563 = vsel %vm396, %v4562, %v4561
        %v4564 = vrot.slane %v4396, 2
        %v4565 = vsel %vm399, %v4564, %v4563
        %v4566 = vrot.slane %v4397, 1
        %v4567 = vsel %vm402, %v4566, %v4565
        %v4568 = vrot.slane %v4399, 7
        %v4569 = vsel %vm384, %v4568, %v4398
        %v4570 = vrot.slane %v4400, 6
        %v4571 = vsel %vm387, %v4570, %v4569
        %v4572 = vrot.slane %v4401, 5
        %v4573 = vsel %vm390, %v4572, %v4571
        %v4574 = vrot.slane %v4402, 4
        %v4575 = vsel %vm393, %v4574, %v4573
        %v4576 = vrot.slane %v4403, 3
        %v4577 = vsel %vm396, %v4576, %v4575
        %v4578 = vrot.slane %v4404, 2
        %v4579 = vsel %vm399, %v4578, %v4577
        %v4580 = vrot.slane %v4405, 1
        %v4581 = vsel %vm402, %v4580, %v4579
        %4590 = vadd.xlane.f32.xlu0 %v4483
        %v4591 = vpop.xlane.xlu0 %4590
        %4592 = vadd.xlane.f32.xlu0 %v4497
        %v4593 = vpop.xlane.xlu0 %4592
        %4594 = vadd.xlane.f32.xlu0 %v4511
        %v4595 = vpop.xlane.xlu0 %4594
        %4596 = vadd.xlane.f32.xlu0 %v4525
        %v4597 = vpop.xlane.xlu0 %4596
        %4598 = vadd.xlane.f32.xlu0 %v4539
        %v4599 = vpop.xlane.xlu0 %4598
        %4600 = vadd.xlane.f32.xlu0 %v4553
        %v4601 = vpop.xlane.xlu0 %4600
        %4602 = vadd.xlane.f32.xlu0 %v4567
        %v4603 = vpop.xlane.xlu0 %4602
        %4604 = vadd.xlane.f32.xlu0 %v4581
        %v4605 = vpop.xlane.xlu0 %4604
        %v4606 = vadd.f32 %v4062, %v4591
        %v4607 = vadd.f32 %v4063, %v4593
        %v4608 = vadd.f32 %v4064, %v4595
        %v4609 = vadd.f32 %v4065, %v4597
        %v4610 = vadd.f32 %v4066, %v4599
        %v4611 = vadd.f32 %v4067, %v4601
        %v4612 = vadd.f32 %v4068, %v4603
        %v4613 = vadd.f32 %v4069, %v4605
        %v4614 = vld [vmem:[#allocation2] sm:$0xff]
        %v4615 = vld [vmem:[#allocation2 + $0x8] sm:$0xff]
        %v4616 = vld [vmem:[#allocation2 + $0x10] sm:$0xff]
        %v4617 = vld [vmem:[#allocation2 + $0x18] sm:$0xff]
        %v4618 = vld [vmem:[#allocation2 + $0x20] sm:$0xff]
        %v4619 = vld [vmem:[#allocation2 + $0x28] sm:$0xff]
        %v4620 = vld [vmem:[#allocation2 + $0x30] sm:$0xff]
        %v4621 = vld [vmem:[#allocation2 + $0x38] sm:$0xff]
        %v4622 = vadd.f32 %v4614, %v4334
        %v4623 = vadd.f32 %v4615, %v4335
        %v4624 = vadd.f32 %v4616, %v4336
        %v4625 = vadd.f32 %v4617, %v4337
        %v4626 = vadd.f32 %v4618, %v4338
        %v4627 = vadd.f32 %v4619, %v4339
        %v4628 = vadd.f32 %v4620, %v4340
        %v4629 = vadd.f32 %v4621, %v4341
        %vm4630 = vcmask 7168
        %4631 = vst.msk [vmem:[#allocation2] sm:$0xff] %vm4630, %v4622
        %4632 = vst.msk [vmem:[#allocation2 + $0x8] sm:$0xff] %vm4630, %v4623
        %4633 = vst.msk [vmem:[#allocation2 + $0x10] sm:$0xff] %vm4630, %v4624
        %4634 = vst.msk [vmem:[#allocation2 + $0x18] sm:$0xff] %vm4630, %v4625
        %4635 = vst.msk [vmem:[#allocation2 + $0x20] sm:$0xff] %vm4630, %v4626
        %4636 = vst.msk [vmem:[#allocation2 + $0x28] sm:$0xff] %vm4630, %v4627
        %4637 = vst.msk [vmem:[#allocation2 + $0x30] sm:$0xff] %vm4630, %v4628
        %4638 = vst.msk [vmem:[#allocation2 + $0x38] sm:$0xff] %vm4630, %v4629
        %v4639 = vld [vmem:[#allocation3] sm:$0xff]
        %v4640 = vld [vmem:[#allocation3 + $0x8] sm:$0xff]
        %v4641 = vld [vmem:[#allocation3 + $0x10] sm:$0xff]
        %v4642 = vld [vmem:[#allocation3 + $0x18] sm:$0xff]
        %v4643 = vld [vmem:[#allocation3 + $0x20] sm:$0xff]
        %v4644 = vld [vmem:[#allocation3 + $0x28] sm:$0xff]
        %v4645 = vld [vmem:[#allocation3 + $0x30] sm:$0xff]
        %v4646 = vld [vmem:[#allocation3 + $0x38] sm:$0xff]
        %v4647 = vadd.f32 %v4639, %v4606
        %v4648 = vadd.f32 %v4640, %v4607
        %v4649 = vadd.f32 %v4641, %v4608
        %v4650 = vadd.f32 %v4642, %v4609
        %v4651 = vadd.f32 %v4643, %v4610
        %v4652 = vadd.f32 %v4644, %v4611
        %v4653 = vadd.f32 %v4645, %v4612
        %v4654 = vadd.f32 %v4646, %v4613
        %4655 = vst.msk [vmem:[#allocation3] sm:$0xff] %vm4630, %v4647
        %4656 = vst.msk [vmem:[#allocation3 + $0x8] sm:$0xff] %vm4630, %v4648
        %4657 = vst.msk [vmem:[#allocation3 + $0x10] sm:$0xff] %vm4630, %v4649
        %4658 = vst.msk [vmem:[#allocation3 + $0x18] sm:$0xff] %vm4630, %v4650
        %4659 = vst.msk [vmem:[#allocation3 + $0x20] sm:$0xff] %vm4630, %v4651
        %4660 = vst.msk [vmem:[#allocation3 + $0x28] sm:$0xff] %vm4630, %v4652
        %4661 = vst.msk [vmem:[#allocation3 + $0x30] sm:$0xff] %vm4630, %v4653
        %4662 = vst.msk [vmem:[#allocation3 + $0x38] sm:$0xff] %vm4630, %v4654
        %p4663 = scmp.eq.s32.totalorder %s24, 1
        // Predicated region
        $region41: #{tpu_custom_call.1} parent=27 // pred_check
          %p4664 = pneg %p4663
        $region42: #{tpu_custom_call.1} parent=27 // pred_check_branch
          %4666 = sbr.rel (%p4664) target = $region44
        $region43: #{tpu_custom_call.1} parent=27 // pred_region
          %v4667 = vld [vmem:[#allocation6] sm:$0xff]
          %v4668 = vld [vmem:[#allocation6 + $0x8] sm:$0xff]
          %v4669 = vld [vmem:[#allocation6 + $0x10] sm:$0xff]
          %v4670 = vld [vmem:[#allocation6 + $0x18] sm:$0xff]
          %v4671 = vld [vmem:[#allocation6 + $0x20] sm:$0xff]
          %v4672 = vld [vmem:[#allocation6 + $0x28] sm:$0xff]
          %v4673 = vld [vmem:[#allocation6 + $0x30] sm:$0xff]
          %v4674 = vld [vmem:[#allocation6 + $0x38] sm:$0xff]
          %v4675 = vld [vmem:[#allocation2] sm:$0xff]
          %v4676 = vld [vmem:[#allocation2 + $0x8] sm:$0xff]
          %v4677 = vld [vmem:[#allocation2 + $0x10] sm:$0xff]
          %v4678 = vld [vmem:[#allocation2 + $0x18] sm:$0xff]
          %v4679 = vld [vmem:[#allocation2 + $0x20] sm:$0xff]
          %v4680 = vld [vmem:[#allocation2 + $0x28] sm:$0xff]
          %v4681 = vld [vmem:[#allocation2 + $0x30] sm:$0xff]
          %v4682 = vld [vmem:[#allocation2 + $0x38] sm:$0xff]
          %vm4683 = vcmask 523264
          %v4685 = vsel %vm4683, %v4667, 0
          %v4688 = vsel %vm4683, %v4668, 0
          %v4691 = vsel %vm4683, %v4669, 0
          %v4694 = vsel %vm4683, %v4670, 0
          %v4697 = vsel %vm4683, %v4671, 0
          %v4700 = vsel %vm4683, %v4672, 0
          %v4703 = vsel %vm4683, %v4673, 0
          %v4706 = vsel %vm4683, %v4674, 0
          %4708 = vmatprep.subr.mxu0 0.0
          %4709 = vmatpush1.msra.mxu0 %v4675
          %4710 = vmatprep.subr.mxu0 0.0
          %4711 = vmatpush1.msra.mxu0 %v4676
          %4712 = vmatprep.subr.mxu0 0.0
          %4713 = vmatpush1.msra.mxu0 %v4677
          %4714 = vmatprep.subr.mxu0 0.0
          %4715 = vmatpush1.msra.mxu0 %v4678
          %4716 = vmatprep.subr.mxu0 0.0
          %4717 = vmatpush1.msra.mxu0 %v4679
          %4718 = vmatprep.subr.mxu0 0.0
          %4719 = vmatpush1.msra.mxu0 %v4680
          %4720 = vmatprep.subr.mxu0 0.0
          %4721 = vmatpush1.msra.mxu0 %v4681
          %4722 = vmatprep.subr.mxu0 0.0
          %4723 = vmatpush1.msra.mxu0 %v4682
          %4724 = vmatprep.subr.mxu0 0.0
          %4725 = vmatpush1.msra.mxu0 0.0
          %4726 = vmatprep.subr.mxu0 0.0
          %4727 = vmatpush1.msra.mxu0 0.0
          %4728 = vmatprep.subr.mxu0 0.0
          %4729 = vmatpush1.msra.mxu0 0.0
          %4730 = vmatprep.subr.mxu0 0.0
          %4731 = vmatpush1.msra.mxu0 0.0
          %4732 = vmatprep.subr.mxu0 0.0
          %4733 = vmatpush1.msra.mxu0 0.0
          %4734 = vmatprep.subr.mxu0 0.0
          %4735 = vmatpush1.msra.mxu0 0.0
          %4736 = vmatprep.subr.mxu0 0.0
          %4737 = vmatpush1.msra.mxu0 0.0
          %4738 = vmatprep.subr.mxu0 0.0
          %4739 = vmatpush1.msra.mxu0 0.0
          %4740 = vmatprep.subr.mxu0 0.0
          %4741 = vmatpush1.msra.mxu0 0.0
          %4742 = vmatprep.subr.mxu0 0.0
          %4743 = vmatpush1.msra.mxu0 0.0
          %4744 = vmatprep.subr.mxu0 0.0
          %4745 = vmatpush1.msra.mxu0 0.0
          %4746 = vmatprep.subr.mxu0 0.0
          %4747 = vmatpush1.msra.mxu0 0.0
          %4748 = vmatprep.subr.mxu0 0.0
          %4749 = vmatpush1.msra.mxu0 0.0
          %4750 = vmatprep.subr.mxu0 0.0
          %4751 = vmatpush1.msra.mxu0 0.0
          %4752 = vmatprep.subr.mxu0 0.0
          %4753 = vmatpush1.msra.mxu0 0.0
          %4754 = vmatprep.subr.mxu0 0.0
          %4755 = vmatpush1.msra.mxu0 0.0
          %4756 = vmatprep.subr.mxu0 0.0
          %4757 = vmatpush1.msra.mxu0 0.0
          %4758 = vmatprep.subr.mxu0 0.0
          %4759 = vmatpush1.msra.mxu0 0.0
          %4760 = vmatprep.subr.mxu0 0.0
          %4761 = vmatpush1.msra.mxu0 0.0
          %4762 = vmatprep.subr.mxu0 0.0
          %4763 = vmatpush1.msra.mxu0 0.0
          %4764 = vmatprep.subr.mxu0 0.0
          %4765 = vmatpush1.msra.mxu0 0.0
          %4766 = vmatprep.subr.mxu0 0.0
          %4767 = vmatpush1.msra.mxu0 0.0
          %4768 = vmatprep.subr.mxu0 0.0
          %4769 = vmatpush1.msra.mxu0 0.0
          %4770 = vmatprep.subr.mxu0 0.0
          %4771 = vmatpush1.msra.mxu0 0.0
          %4772 = vmatprep.mubr.f32.mxu0 0.0
          %4773 = vmatmul.mubr.f32.gmra.mrb[0].mxu0 %v4685
          %v4774 = vpop.f32.mrb[0].mxu0
          %v4775 = vadd.f32 0.0, %v4774
          %v4776 = vpop.f32.mrb[0].mxu0
          %4777 = vmatprep.mubr.f32.mxu0 0.0
          %4778 = vmatmul.mubr.f32.gmra.mrb[0].mxu0 %v4688
          %v4779 = vpop.f32.mrb[0].mxu0
          %v4780 = vadd.f32 0.0, %v4779
          %v4781 = vpop.f32.mrb[0].mxu0
          %4782 = vmatprep.mubr.f32.mxu0 0.0
          %4783 = vmatmul.mubr.f32.gmra.mrb[0].mxu0 %v4691
          %v4784 = vpop.f32.mrb[0].mxu0
          %v4785 = vadd.f32 0.0, %v4784
          %v4786 = vpop.f32.mrb[0].mxu0
          %4787 = vmatprep.mubr.f32.mxu0 0.0
          %4788 = vmatmul.mubr.f32.gmra.mrb[0].mxu0 %v4694
          %v4789 = vpop.f32.mrb[0].mxu0
          %v4790 = vadd.f32 0.0, %v4789
          %v4791 = vpop.f32.mrb[0].mxu0
          %4792 = vmatprep.mubr.f32.mxu0 0.0
          %4793 = vmatmul.mubr.f32.gmra.mrb[0].mxu0 %v4697
          %v4794 = vpop.f32.mrb[0].mxu0
          %v4795 = vadd.f32 0.0, %v4794
          %v4796 = vpop.f32.mrb[0].mxu0
          %4797 = vmatprep.mubr.f32.mxu0 0.0
          %4798 = vmatmul.mubr.f32.gmra.mrb[0].mxu0 %v4700
          %v4799 = vpop.f32.mrb[0].mxu0
          %v4800 = vadd.f32 0.0, %v4799
          %v4801 = vpop.f32.mrb[0].mxu0
          %4802 = vmatprep.mubr.f32.mxu0 0.0
          %4803 = vmatmul.mubr.f32.gmra.mrb[0].mxu0 %v4703
          %v4804 = vpop.f32.mrb[0].mxu0
          %v4805 = vadd.f32 0.0, %v4804
          %v4806 = vpop.f32.mrb[0].mxu0
          %4807 = vmatprep.mubr.f32.mxu0 0.0
          %4808 = vmatmul.mubr.f32.gmra.mrb[0].mxu0 %v4706
          %v4809 = vpop.f32.mrb[0].mxu0
          %v4810 = vadd.f32 0.0, %v4809
          %v4811 = vpop.f32.mrb[0].mxu0
          %4812 = vdwg.mxu0
          %v4813 = vld [vmem:[#allocation3] sm:$0xff]
          %v4814 = vld [vmem:[#allocation3 + $0x8] sm:$0xff]
          %v4815 = vld [vmem:[#allocation3 + $0x10] sm:$0xff]
          %v4816 = vld [vmem:[#allocation3 + $0x18] sm:$0xff]
          %v4817 = vld [vmem:[#allocation3 + $0x20] sm:$0xff]
          %v4818 = vld [vmem:[#allocation3 + $0x28] sm:$0xff]
          %v4819 = vld [vmem:[#allocation3 + $0x30] sm:$0xff]
          %v4820 = vld [vmem:[#allocation3 + $0x38] sm:$0xff]
          %4821 = vmatprep.subr.mxu0 0.0
          %4822 = vmatpush1.msra.mxu0 %v4813
          %4823 = vmatprep.subr.mxu0 0.0
          %4824 = vmatpush1.msra.mxu0 %v4814
          %4825 = vmatprep.subr.mxu0 0.0
          %4826 = vmatpush1.msra.mxu0 %v4815
          %4827 = vmatprep.subr.mxu0 0.0
          %4828 = vmatpush1.msra.mxu0 %v4816
          %4829 = vmatprep.subr.mxu0 0.0
          %4830 = vmatpush1.msra.mxu0 %v4817
          %4831 = vmatprep.subr.mxu0 0.0
          %4832 = vmatpush1.msra.mxu0 %v4818
          %4833 = vmatprep.subr.mxu0 0.0
          %4834 = vmatpush1.msra.mxu0 %v4819
          %4835 = vmatprep.subr.mxu0 0.0
          %4836 = vmatpush1.msra.mxu0 %v4820
          %4837 = vmatprep.subr.mxu0 0.0
          %4838 = vmatpush1.msra.mxu0 0.0
          %4839 = vmatprep.subr.mxu0 0.0
          %4840 = vmatpush1.msra.mxu0 0.0
          %4841 = vmatprep.subr.mxu0 0.0
          %4842 = vmatpush1.msra.mxu0 0.0
          %4843 = vmatprep.subr.mxu0 0.0
          %4844 = vmatpush1.msra.mxu0 0.0
          %4845 = vmatprep.subr.mxu0 0.0
          %4846 = vmatpush1.msra.mxu0 0.0
          %4847 = vmatprep.subr.mxu0 0.0
          %4848 = vmatpush1.msra.mxu0 0.0
          %4849 = vmatprep.subr.mxu0 0.0
          %4850 = vmatpush1.msra.mxu0 0.0
          %4851 = vmatprep.subr.mxu0 0.0
          %4852 = vmatpush1.msra.mxu0 0.0
          %4853 = vmatprep.subr.mxu0 0.0
          %4854 = vmatpush1.msra.mxu0 0.0
          %4855 = vmatprep.subr.mxu0 0.0
          %4856 = vmatpush1.msra.mxu0 0.0
          %4857 = vmatprep.subr.mxu0 0.0
          %4858 = vmatpush1.msra.mxu0 0.0
          %4859 = vmatprep.subr.mxu0 0.0
          %4860 = vmatpush1.msra.mxu0 0.0
          %4861 = vmatprep.subr.mxu0 0.0
          %4862 = vmatpush1.msra.mxu0 0.0
          %4863 = vmatprep.subr.mxu0 0.0
          %4864 = vmatpush1.msra.mxu0 0.0
          %4865 = vmatprep.subr.mxu0 0.0
          %4866 = vmatpush1.msra.mxu0 0.0
          %4867 = vmatprep.subr.mxu0 0.0
          %4868 = vmatpush1.msra.mxu0 0.0
          %4869 = vmatprep.subr.mxu0 0.0
          %4870 = vmatpush1.msra.mxu0 0.0
          %4871 = vmatprep.subr.mxu0 0.0
          %4872 = vmatpush1.msra.mxu0 0.0
          %4873 = vmatprep.subr.mxu0 0.0
          %4874 = vmatpush1.msra.mxu0 0.0
          %4875 = vmatprep.subr.mxu0 0.0
          %4876 = vmatpush1.msra.mxu0 0.0
          %4877 = vmatprep.subr.mxu0 0.0
          %4878 = vmatpush1.msra.mxu0 0.0
          %4879 = vmatprep.subr.mxu0 0.0
          %4880 = vmatpush1.msra.mxu0 0.0
          %4881 = vmatprep.subr.mxu0 0.0
          %4882 = vmatpush1.msra.mxu0 0.0
          %4883 = vmatprep.subr.mxu0 0.0
          %4884 = vmatpush1.msra.mxu0 0.0
          %4885 = vmatprep.mubr.f32.mxu0 0.0
          %4886 = vmatmul.mubr.f32.gmra.mrb[0].mxu0 %v4685
          %v4887 = vpop.f32.mrb[0].mxu0
          %v4888 = vadd.f32 0.0, %v4887
          %v4889 = vpop.f32.mrb[0].mxu0
          %4890 = vmatprep.mubr.f32.mxu0 0.0
          %4891 = vmatmul.mubr.f32.gmra.mrb[0].mxu0 %v4688
          %v4892 = vpop.f32.mrb[0].mxu0
          %v4893 = vadd.f32 0.0, %v4892
          %v4894 = vpop.f32.mrb[0].mxu0
          %4895 = vmatprep.mubr.f32.mxu0 0.0
          %4896 = vmatmul.mubr.f32.gmra.mrb[0].mxu0 %v4691
          %v4897 = vpop.f32.mrb[0].mxu0
          %v4898 = vadd.f32 0.0, %v4897
          %v4899 = vpop.f32.mrb[0].mxu0
          %4900 = vmatprep.mubr.f32.mxu0 0.0
          %4901 = vmatmul.mubr.f32.gmra.mrb[0].mxu0 %v4694
          %v4902 = vpop.f32.mrb[0].mxu0
          %v4903 = vadd.f32 0.0, %v4902
          %v4904 = vpop.f32.mrb[0].mxu0
          %4905 = vmatprep.mubr.f32.mxu0 0.0
          %4906 = vmatmul.mubr.f32.gmra.mrb[0].mxu0 %v4697
          %v4907 = vpop.f32.mrb[0].mxu0
          %v4908 = vadd.f32 0.0, %v4907
          %v4909 = vpop.f32.mrb[0].mxu0
          %4910 = vmatprep.mubr.f32.mxu0 0.0
          %4911 = vmatmul.mubr.f32.gmra.mrb[0].mxu0 %v4700
          %v4912 = vpop.f32.mrb[0].mxu0
          %v4913 = vadd.f32 0.0, %v4912
          %v4914 = vpop.f32.mrb[0].mxu0
          %4915 = vmatprep.mubr.f32.mxu0 0.0
          %4916 = vmatmul.mubr.f32.gmra.mrb[0].mxu0 %v4703
          %v4917 = vpop.f32.mrb[0].mxu0
          %v4918 = vadd.f32 0.0, %v4917
          %v4919 = vpop.f32.mrb[0].mxu0
          %4920 = vmatprep.mubr.f32.mxu0 0.0
          %4921 = vmatmul.mubr.f32.gmra.mrb[0].mxu0 %v4706
          %v4922 = vpop.f32.mrb[0].mxu0
          %v4923 = vadd.f32 0.0, %v4922
          %v4924 = vpop.f32.mrb[0].mxu0
          %4925 = vdwg.mxu0
          %v4926 = vmul.f32 %v4775, %v4775
          %v4927 = vmul.f32 %v4780, %v4780
          %v4928 = vmul.f32 %v4785, %v4785
          %v4929 = vmul.f32 %v4790, %v4790
          %v4930 = vmul.f32 %v4795, %v4795
          %v4931 = vmul.f32 %v4800, %v4800
          %v4932 = vmul.f32 %v4805, %v4805
          %v4933 = vmul.f32 %v4810, %v4810
          %v4934 = vsub.f32 %v4888, %v4926
          %v4935 = vsub.f32 %v4893, %v4927
          %v4936 = vsub.f32 %v4898, %v4928
          %v4937 = vsub.f32 %v4903, %v4929
          %v4938 = vsub.f32 %v4908, %v4930
          %v4939 = vsub.f32 %v4913, %v4931
          %v4940 = vsub.f32 %v4918, %v4932
          %v4941 = vsub.f32 %v4923, %v4933
          %v4942 = vmax.f32 %v4934, 0.0
          %v4943 = vmax.f32 %v4935, 0.0
          %v4944 = vmax.f32 %v4936, 0.0
          %v4945 = vmax.f32 %v4937, 0.0
          %v4946 = vmax.f32 %v4938, 0.0
          %v4947 = vmax.f32 %v4939, 0.0
          %v4948 = vmax.f32 %v4940, 0.0
          %v4949 = vmax.f32 %v4941, 0.0
          %4950 = vst.msk [vmem:[%s228] sm:$0xff] %vm4630, %v4775
          %4951 = vst.msk [vmem:[%s228 + $0x8] sm:$0xff] %vm4630, %v4780
          %4952 = vst.msk [vmem:[%s228 + $0x10] sm:$0xff] %vm4630, %v4785
          %4953 = vst.msk [vmem:[%s228 + $0x18] sm:$0xff] %vm4630, %v4790
          %4954 = vst.msk [vmem:[%s228 + $0x20] sm:$0xff] %vm4630, %v4795
          %4955 = vst.msk [vmem:[%s228 + $0x28] sm:$0xff] %vm4630, %v4800
          %4956 = vst.msk [vmem:[%s228 + $0x30] sm:$0xff] %vm4630, %v4805
          %4957 = vst.msk [vmem:[%s228 + $0x38] sm:$0xff] %vm4630, %v4810
          %v4958 = vadd.f32 %v4942, 1e-06
          %v4959 = vadd.f32 %v4943, 1e-06
          %v4960 = vadd.f32 %v4944, 1e-06
          %v4961 = vadd.f32 %v4945, 1e-06
          %v4962 = vadd.f32 %v4946, 1e-06
          %v4963 = vadd.f32 %v4947, 1e-06
          %v4964 = vadd.f32 %v4948, 1e-06
          %v4965 = vadd.f32 %v4949, 1e-06
          %v4966 = vrsqrt.pop %v4958
          %v4967 = vrsqrt.pop %v4959
          %v4968 = vrsqrt.pop %v4960
          %v4969 = vrsqrt.pop %v4961
          %v4970 = vrsqrt.pop %v4962
          %v4971 = vrsqrt.pop %v4963
          %v4972 = vrsqrt.pop %v4964
          %v4973 = vrsqrt.pop %v4965
          %4974 = vst.msk [vmem:[%s233] sm:$0xff] %vm4630, %v4966
          %4975 = vst.msk [vmem:[%s233 + $0x8] sm:$0xff] %vm4630, %v4967
          %4976 = vst.msk [vmem:[%s233 + $0x10] sm:$0xff] %vm4630, %v4968
          %4977 = vst.msk [vmem:[%s233 + $0x18] sm:$0xff] %vm4630, %v4969
          %4978 = vst.msk [vmem:[%s233 + $0x20] sm:$0xff] %vm4630, %v4970
          %4979 = vst.msk [vmem:[%s233 + $0x28] sm:$0xff] %vm4630, %v4971
          %4980 = vst.msk [vmem:[%s233 + $0x30] sm:$0xff] %vm4630, %v4972
          %4981 = vst.msk [vmem:[%s233 + $0x38] sm:$0xff] %vm4630, %v4973
        $region44: #{tpu_custom_call.1} parent=27 // pred_fallthru
          _
        %p4982 = scmp.lt.s32.totalorder %s23, 1
        %s4983 = scalar_select %p4982, %s23, 1
        %s4984 = smul.addr %s4983, 8
        %s4985 = smul.addr %s4984, 8
        %s4986 = scalar_lea.vmem %s2, %s4985
        %p4987 = scmp.lt.s32.totalorder %s23, 1
        %s4988 = scalar_select %p4987, %s23, 1
        %s4989 = smul.addr %s4988, 8
        %s4990 = smul.addr %s4989, 8
        %s4991 = scalar_lea.vmem %s3, %s4990
        // Predicated region
        $region45: #{tpu_custom_call.1} parent=27 // pred_check
          %p4992 = pneg %p98
        $region46: #{tpu_custom_call.1} parent=27 // pred_check_branch
          %4994 = sbr.rel (%p4992) target = $region48
        $region47: #{tpu_custom_call.1} parent=27 // pred_region
          _
        $region48: #{tpu_custom_call.1} parent=27 // pred_fallthru
          _
        // Predicated region
        $region49: #{tpu_custom_call.1} parent=27 // pred_check
          %p4995 = pneg %p124
        $region50: #{tpu_custom_call.1} parent=27 // pred_check_branch
          %4997 = sbr.rel (%p4995) target = $region52
        $region51: #{tpu_custom_call.1} parent=27 // pred_region
          _
        $region52: #{tpu_custom_call.1} parent=27 // pred_fallthru
          _
      $region28: #{tpu_custom_call.1} parent=5 // pred_fallthru
        _
      %p4998 = scmp.le.s32.totalorder 2, %s14
      // Predicated region
      $region53: #{tpu_custom_call.1} parent=5 // pred_check
        %p4999 = pneg %p4998
      $region54: #{tpu_custom_call.1} parent=5 // pred_check_branch
        %5001 = sbr.rel (%p4999) target = $region56
      $region55: #{tpu_custom_call.1} parent=5 // pred_region
        %s5002 = ssub.s32 %s14, 2
        // Predicated region
        $region57: #{tpu_custom_call.1} parent=55 // pred_check
          %p5003 = pneg %p104
        $region58: #{tpu_custom_call.1} parent=55 // pred_check_branch
          %5005 = sbr.rel (%p5003) target = $region60
        $region59: #{tpu_custom_call.1} parent=55 // pred_region
          %p5006 = scmp.lt.s32.totalorder %s25, 1
          %s5007 = scalar_select %p5006, %s25, 1
          %s5008 = smul.addr %s5007, 8
          %s5009 = smul.addr %s5008, 8
          %s5010 = scalar_lea.vmem %s2, %s5009
        $region60: #{tpu_custom_call.1} parent=55 // pred_fallthru
          _
        // Predicated region
        $region61: #{tpu_custom_call.1} parent=55 // pred_check
          %p5011 = pneg %p130
        $region62: #{tpu_custom_call.1} parent=55 // pred_check_branch
          %5013 = sbr.rel (%p5011) target = $region64
        $region63: #{tpu_custom_call.1} parent=55 // pred_region
          %p5014 = scmp.lt.s32.totalorder %s25, 1
          %s5015 = scalar_select %p5014, %s25, 1
          %s5016 = smul.addr %s5015, 8
          %s5017 = smul.addr %s5016, 8
          %s5018 = scalar_lea.vmem %s3, %s5017
        $region64: #{tpu_custom_call.1} parent=55 // pred_fallthru
          _
      $region56: #{tpu_custom_call.1} parent=5 // pred_fallthru
        _
    $region6: #{tpu_custom_call.1} parent=1 // loop_footer
      %s18 = sadd.s32 1, %s14
    $region7: #{tpu_custom_call.1} parent=1 // loop_footer_branch
      %13 = sbr.rel target = $region3
    $region8: #{tpu_custom_call.1} parent=1 // loop_exit
      _
    %5019 = vsyncpa [#allocation5], 1
    %s5020 = scalar_lea.sflag [#allocation5], 1
    %5021 = vsyncpa %s5020, 1
    %5022 = vsyncpa [#allocation7], 1

</llo_original>
